<compile_context>
chip_gen: v7x
topology: tpu7x:2x2x1
jax: 0.10.0
libtpu: 0.0.40
codegen_flags: <defaults>
</compile_context>

<pallas_src>
import jax
import jax.numpy as jnp
from jax.experimental import pallas as pl
from jax.experimental.pallas import tpu as pltpu

# ---- hyper-parameters consistent with the module's structure ----------------
BATCH = 2
IN_CH = 3
IMG = 16
PATCH = 8
GRID = IMG // PATCH             # 2
NUM_PATCH = GRID * GRID         # 4
SEQ = NUM_PATCH + 1             # 5 (CLS + patches)
WIDTH = 32                      # transformer width
HEADS = 2
HEAD_DIM = WIDTH // HEADS       # 16
LAYERS = 2                      # transformer.layers
MLP_DIM = 4 * WIDTH             # 128
PATCH_DIM = IN_CH * PATCH * PATCH   # 192
LN_EPS = 1e-5


def _norm(x):
    """LayerNorm without affine (gamma/beta folded into the next matmul
    where possible, applied explicitly otherwise)."""
    mu = jnp.mean(x, axis=-1, keepdims=True)
    var = jnp.mean((x - mu) ** 2, axis=-1, keepdims=True)
    return (x - mu) * jax.lax.rsqrt(var + LN_EPS)


# ------------------------------- fused kernel --------------------------------
def fused_kernel(patches_ref, patchw_ref, poscls_ref, lnglb_ref,
                 wqkv_ref, wo_ref, wfc_ref, wpr_ref, bias_ref,
                 out_ref):
    # ---- patch embedding (conv1 as matmul) + CLS + pos + ln_pre -------------
    emb = jnp.einsum('bpd,dw->bpw', patches_ref[...], patchw_ref[...],
                     preferred_element_type=jnp.float32)            # [B, P, W]
    pos = poscls_ref[...]                       # [SEQ, W]; row 0 = cls + pos[0]
    cls_row = jnp.broadcast_to(pos[0:1, :][None], (BATCH, 1, WIDTH))
    x = jnp.concatenate([cls_row, emb + pos[1:, :][None]], axis=1)  # [B, SEQ, W]

    lnpre_g, lnpre_b = lnglb_ref[0:1, :], lnglb_ref[1:2, :]
    lnpost_g, lnpost_b = lnglb_ref[2:3, :], lnglb_ref[3:4, :]
    x = _norm(x) * lnpre_g + lnpre_b                                # ln_pre

    scale = HEAD_DIM ** -0.5
    for l in range(LAYERS):                     # static unroll: no grid steps
        b = bias_ref[l]                         # [4, MLP_DIM]
        bqkv = b[0:1, 0:3 * WIDTH]              # ln1-beta folded in
        bo = b[1:2, 0:WIDTH]
        bfc = b[2:3, :]                         # ln2-beta folded in
        bpr = b[3:4, 0:WIDTH]

        # ---- multi-head self attention (fused QKV, batched heads) -----------
        h = _norm(x)                            # ln1 affine folded into wqkv
        qkv = jnp.einsum('blw,wk->blk', h, wqkv_ref[l],
                         preferred_element_type=jnp.float32) + bqkv  # [B,S,3W]
        q = qkv[..., 0 * WIDTH:1 * WIDTH]
        k = qkv[..., 1 * WIDTH:2 * WIDTH]
        v = qkv[..., 2 * WIDTH:3 * WIDTH]
        # fold the head axis into the leading (group) axis: g = HEADS * BATCH
        qg = jnp.concatenate([q[..., :HEAD_DIM], q[..., HEAD_DIM:]], axis=0)
        kg = jnp.concatenate([k[..., :HEAD_DIM], k[..., HEAD_DIM:]], axis=0)
        vg = jnp.concatenate([v[..., :HEAD_DIM], v[..., HEAD_DIM:]], axis=0)
        s = jnp.einsum('gld,gmd->glm', qg * scale, kg,
                       preferred_element_type=jnp.float32)           # [g,S,S]
        s = s - jnp.max(s, axis=-1, keepdims=True)
        p = jnp.exp(s)
        p = p / jnp.sum(p, axis=-1, keepdims=True)   # exact reciprocal (SEQ=5)
        ctx = jnp.einsum('glm,gmd->gld', p, vg,
                         preferred_element_type=jnp.float32)          # [g,S,D]
        # lane-concat the heads back and do one fused output projection
        ctx_full = jnp.concatenate([ctx[:BATCH], ctx[BATCH:]], axis=-1)
        attn = jnp.einsum('blw,wo->blo', ctx_full, wo_ref[l],
                          preferred_element_type=jnp.float32) + bo
        x = x + attn

        # ---- MLP: c_fc -> QuickGELU -> c_proj (ln2 affine folded) -----------
        h2 = _norm(x)
        h2 = jnp.einsum('blw,wm->blm', h2, wfc_ref[l],
                        preferred_element_type=jnp.float32) + bfc
        h2 = h2 * jax.nn.sigmoid(1.702 * h2)          # CLIP QuickGELU
        h2 = jnp.einsum('blm,mw->blw', h2, wpr_ref[l],
                        preferred_element_type=jnp.float32) + bpr
        x = x + h2

        # ---- this layer's CLS token -> ln_post -> its output row ------------
        out_ref[l] = _norm(x[:, 0, :]) * lnpost_g + lnpost_b


# ----------------------------- parameter init (torch layout) -----------------
def init_params(key):
    keys = jax.random.split(key, 3 + LAYERS)
    scale = WIDTH ** (-0.5)
    p = {
        'conv_w': jax.random.normal(keys[0], (WIDTH, IN_CH, PATCH, PATCH), jnp.float32) * scale,
        'class_emb': jax.random.normal(keys[1], (WIDTH,), jnp.float32) * scale,
        'pos_emb': jax.random.normal(keys[2], (SEQ, WIDTH), jnp.float32) * scale,
        'ln_pre_g': jnp.ones((WIDTH,), jnp.float32),
        'ln_pre_b': jnp.zeros((WIDTH,), jnp.float32),
        'ln_post_g': jnp.ones((WIDTH,), jnp.float32),
        'ln_post_b': jnp.zeros((WIDTH,), jnp.float32),
        'layers': [],
    }
    for i in range(LAYERS):
        lk = jax.random.split(keys[3 + i], 6)
        p['layers'].append(dict(
            ln1_g=jnp.ones((WIDTH,), jnp.float32),
            ln1_b=jnp.zeros((WIDTH,), jnp.float32),
            in_proj_w=jax.random.normal(lk[0], (3 * WIDTH, WIDTH), jnp.float32) * scale,
            in_proj_b=jax.random.normal(lk[1], (3 * WIDTH,), jnp.float32) * 0.01,
            out_proj_w=jax.random.normal(lk[2], (WIDTH, WIDTH), jnp.float32) * scale,
            out_proj_b=jax.random.normal(lk[3], (WIDTH,), jnp.float32) * 0.01,
            ln2_g=jnp.ones((WIDTH,), jnp.float32),
            ln2_b=jnp.zeros((WIDTH,), jnp.float32),
            fc_w=jax.random.normal(lk[4], (MLP_DIM, WIDTH), jnp.float32) * scale,
            fc_b=jnp.zeros((MLP_DIM,), jnp.float32),
            proj_w=jax.random.normal(lk[5], (WIDTH, MLP_DIM), jnp.float32) * scale,
            proj_b=jnp.zeros((WIDTH,), jnp.float32),
        ))
    return p


# ----- one-time repack: transpose, fuse QKV, fold LN affines, pack biases ----
def pack_params(p):
    def fold_qkv(layer):
        # LN1(x) @ in_proj_w.T  ==  norm(x) @ (diag(g) @ in_proj_w.T)  (+ folded bias)
        return layer['in_proj_w'].T * layer['ln1_g'][:, None]          # [W, 3W]

    def fold_fc(layer):
        return layer['fc_w'].T * layer['ln2_g'][:, None]                # [W, MLP]

    def pack_bias(layer):
        b = jnp.zeros((4, MLP_DIM), jnp.float32)
        bqkv = layer['ln1_b'] @ layer['in_proj_w'].T + layer['in_proj_b']
        bfc = layer['ln2_b'] @ layer['fc_w'].T + layer['fc_b']
        b = b.at[0, :3 * WIDTH].set(bqkv)
        b = b.at[1, :WIDTH].set(layer['out_proj_b'])
        b = b.at[2, :].set(bfc)
        b = b.at[3, :WIDTH].set(layer['proj_b'])
        return b

    stack = lambda fn: jnp.stack([fn(l) for l in p['layers']])
    return {
        'patch_w': p['conv_w'].reshape(WIDTH, PATCH_DIM).T,             # [Din, W]
        'pos_cls': p['pos_emb'].at[0].add(p['class_emb']),              # cls pre-added
        'ln_glb': jnp.stack([p['ln_pre_g'], p['ln_pre_b'],
                             p['ln_post_g'], p['ln_post_b']]),          # [4, W]
        'wqkv': stack(fold_qkv),                                        # [L, W, 3W]
        'wo': stack(lambda l: l['out_proj_w'].T),                       # [L, W, W]
        'wfc': stack(fold_fc),                                          # [L, W, MLP]
        'wpr': stack(lambda l: l['proj_w'].T),                          # [L, MLP, W]
        'bias': stack(pack_bias),                                       # [L, 4, MLP]
    }


# ------------------------------ forward wrapper -------------------------------
def image_encoder_forward(image, packed):
    """image: [B, 3, H, W] float32 -> [LAYERS, B, WIDTH]."""
    B = image.shape[0]
    # extract non-overlapping patches, flattened in (c, ky, kx) order so the
    # matmul equals conv1 with kernel_size=stride=PATCH, bias=False.
    patches = image.reshape(B, IN_CH, GRID, PATCH, GRID, PATCH)
    patches = patches.transpose(0, 2, 4, 1, 3, 5).reshape(B, NUM_PATCH, PATCH_DIM)

    # No grid: every operand is a whole-array VMEM resident (total < 200 KB),
    # the layer loop is unrolled inside the kernel, single kernel invocation.
    return pl.pallas_call(
        fused_kernel,
        out_shape=jax.ShapeDtypeStruct((LAYERS, B, WIDTH), jnp.float32),
    )(patches, packed['patch_w'], packed['pos_cls'], packed['ln_glb'],
      packed['wqkv'], packed['wo'], packed['wfc'], packed['wpr'],
      packed['bias'])


# ----------------------------- pure-JAX reference -----------------------------
def reference_forward(image, params):
    B = image.shape[0]

    def ln(x, g, b):
        mu = x.mean(-1, keepdims=True)
        var = ((x - mu) ** 2).mean(-1, keepdims=True)
        return (x - mu) / jnp.sqrt(var + LN_EPS) * g + b

    x = image.reshape(B, IN_CH, GRID, PATCH, GRID, PATCH)
    x = x.transpose(0, 2, 4, 1, 3, 5).reshape(B, NUM_PATCH, -1)
    x = x @ params['conv_w'].reshape(WIDTH, -1).T
    cls = jnp.broadcast_to(params['class_emb'][None, None, :], (B, 1, WIDTH))
    x = jnp.concatenate([cls, x], axis=1) + params['pos_emb'][None]
    x = ln(x, params['ln_pre_g'], params['ln_pre_b'])
    feats = []
    for layer in params['layers']:
        h = ln(x, layer['ln1_g'], layer['ln1_b'])
        qkv = h @ layer['in_proj_w'].T + layer['in_proj_b']
        q, k, v = jnp.split(qkv, 3, axis=-1)
        q = q.reshape(B, SEQ, HEADS, HEAD_DIM).transpose(0, 2, 1, 3)
        k = k.reshape(B, SEQ, HEADS, HEAD_DIM).transpose(0, 2, 1, 3)
        v = v.reshape(B, SEQ, HEADS, HEAD_DIM).transpose(0, 2, 1, 3)
        s = (q / (HEAD_DIM ** 0.5)) @ k.transpose(0, 1, 3, 2)
        p = jax.nn.softmax(s, axis=-1)
        o = (p @ v).transpose(0, 2, 1, 3).reshape(B, SEQ, WIDTH)
        o = o @ layer['out_proj_w'].T + layer['out_proj_b']
        x = x + o
        h2 = ln(x, layer['ln2_g'], layer['ln2_b'])
        h2 = h2 @ layer['fc_w'].T + layer['fc_b']
        h2 = h2 * jax.nn.sigmoid(1.702 * h2)
        h2 = h2 @ layer['proj_w'].T + layer['proj_b']
        x = x + h2
        feats.append(x[:, 0, :])
    feats = jnp.stack(feats)
    return ln(feats, params['ln_post_g'], params['ln_post_b'])


# ------------------------------------ main ------------------------------------
if __name__ == "__main__":
    key = jax.random.PRNGKey(0)
    k_img, k_par = jax.random.split(key)
    image = jax.random.normal(k_img, (BATCH, IN_CH, IMG, IMG), jnp.float32)
    params = init_params(k_par)
    packed = pack_params(params)        # one-time weight repack (outside jit)

    out = jax.jit(image_encoder_forward)(image, packed)
    out = jax.block_until_ready(out)

    ref = reference_forward(image, params)
    assert out.shape == (LAYERS, BATCH, WIDTH), out.shape
    max_diff = float(jnp.max(jnp.abs(out - ref)))
    # exact softmax reciprocal + f32 everywhere: only fold/accumulation-order
    # rounding remains, so a tight tolerance catches any wiring/transpose bug.
    assert max_diff < 1e-4, f"kernel/reference mismatch, max|diff|={max_diff}"

    print("KERNEL_OK")
</pallas_src>

<mosaic_0001>
module attributes {stable_mosaic.version = 11 : i64} {
  func.func @fused_kernel(%arg0: memref<2x4x192xf32, #tpu.memory_space<vmem>>, %arg1: memref<192x32xf32, #tpu.memory_space<vmem>>, %arg2: memref<5x32xf32, #tpu.memory_space<vmem>>, %arg3: memref<4x32xf32, #tpu.memory_space<vmem>>, %arg4: memref<2x32x96xf32, #tpu.memory_space<vmem>>, %arg5: memref<2x32x32xf32, #tpu.memory_space<vmem>>, %arg6: memref<2x32x128xf32, #tpu.memory_space<vmem>>, %arg7: memref<2x128x32xf32, #tpu.memory_space<vmem>>, %arg8: memref<2x4x128xf32, #tpu.memory_space<vmem>>, %arg9: memref<2x2x32xf32, #tpu.memory_space<vmem>>) attributes {dimension_semantics = [], scalar_prefetch = 0 : i64, scratch_operands = 0 : i64, tpu.core_type = #tpu.core_type<tc>} {
    %c0 = arith.constant 0 : index
    %c0_0 = arith.constant 0 : index
    %c0_1 = arith.constant 0 : index
    %0 = vector.load %arg0[%c0, %c0_0, %c0_1] : memref<2x4x192xf32, #tpu.memory_space<vmem>>, vector<2x4x192xf32>
    %c0_2 = arith.constant 0 : index
    %c0_3 = arith.constant 0 : index
    %1 = vector.load %arg1[%c0_2, %c0_3] : memref<192x32xf32, #tpu.memory_space<vmem>>, vector<192x32xf32>
    "tpu.trace_start"() <{level = 10 : i32, message = "bpd,dw->bpw"}> : () -> ()
    %cst = arith.constant dense<0.000000e+00> : vector<2x4x32xf32>
    %2 = tpu.matmul %0, %1, %cst {dimension_numbers = #tpu.dot_dimension_numbers<[2], [0], [0, 1], [1], [0, 0, 0, 1, 1, 1], [], []>} : vector<2x4x192xf32>, vector<192x32xf32>, vector<2x4x32xf32> -> vector<2x4x32xf32>
    "tpu.trace_stop"() : () -> ()
    %c0_4 = arith.constant 0 : index
    %c0_5 = arith.constant 0 : index
    %3 = vector.load %arg2[%c0_4, %c0_5] : memref<5x32xf32, #tpu.memory_space<vmem>>, vector<5x32xf32>
    %4 = vector.extract_strided_slice %3 {offsets = [0, 0], sizes = [1, 32], strides = [1, 1]} : vector<5x32xf32> to vector<1x32xf32>
    %5 = vector.shape_cast %4 : vector<1x32xf32> to vector<1x1x32xf32>
    %6 = vector.shape_cast %5 : vector<1x1x32xf32> to vector<1x1x32xf32>
    %7 = vector.broadcast %6 : vector<1x1x32xf32> to vector<2x1x32xf32>
    %8 = vector.extract_strided_slice %3 {offsets = [1, 0], sizes = [4, 32], strides = [1, 1]} : vector<5x32xf32> to vector<4x32xf32>
    %9 = vector.shape_cast %8 : vector<4x32xf32> to vector<1x4x32xf32>
    %10 = vector.broadcast %9 : vector<1x4x32xf32> to vector<2x4x32xf32>
    %11 = arith.addf %2, %10 : vector<2x4x32xf32>
    %12 = tpu.concatenate %7, %11 in 1 : vector<2x1x32xf32>, vector<2x4x32xf32> -> vector<2x5x32xf32>
    %c0_6 = arith.constant 0 : index
    %c0_7 = arith.constant 0 : index
    %13 = vector.load %arg3[%c0_6, %c0_7] : memref<4x32xf32, #tpu.memory_space<vmem>>, vector<1x32xf32>
    %c1 = arith.constant 1 : index
    %c0_8 = arith.constant 0 : index
    %14 = vector.load %arg3[%c1, %c0_8] : memref<4x32xf32, #tpu.memory_space<vmem>>, vector<1x32xf32>
    %c2 = arith.constant 2 : index
    %c0_9 = arith.constant 0 : index
    %15 = vector.load %arg3[%c2, %c0_9] : memref<4x32xf32, #tpu.memory_space<vmem>>, vector<1x32xf32>
    %c3 = arith.constant 3 : index
    %c0_10 = arith.constant 0 : index
    %16 = vector.load %arg3[%c3, %c0_10] : memref<4x32xf32, #tpu.memory_space<vmem>>, vector<1x32xf32>
    %cst_11 = arith.constant dense<0.000000e+00> : vector<2x5xf32>
    %17 = vector.multi_reduction <add>, %12, %cst_11 [2] : vector<2x5x32xf32> to vector<2x5xf32>
    %18 = vector.shape_cast %17 : vector<2x5xf32> to vector<2x5x1xf32>
    %cst_12 = arith.constant 3.200000e+01 : f32
    %19 = vector.broadcast %cst_12 : f32 to vector<2x5x1xf32>
    %20 = arith.divf %18, %19 : vector<2x5x1xf32>
    %21 = vector.broadcast %20 : vector<2x5x1xf32> to vector<2x5x32xf32>
    %22 = arith.subf %12, %21 : vector<2x5x32xf32>
    %23 = arith.mulf %22, %22 : vector<2x5x32xf32>
    %cst_13 = arith.constant dense<0.000000e+00> : vector<2x5xf32>
    %24 = vector.multi_reduction <add>, %23, %cst_13 [2] : vector<2x5x32xf32> to vector<2x5xf32>
    %25 = vector.shape_cast %24 : vector<2x5xf32> to vector<2x5x1xf32>
    %cst_14 = arith.constant 3.200000e+01 : f32
    %26 = vector.broadcast %cst_14 : f32 to vector<2x5x1xf32>
    %27 = arith.divf %25, %26 : vector<2x5x1xf32>
    %28 = vector.broadcast %20 : vector<2x5x1xf32> to vector<2x5x32xf32>
    %29 = arith.subf %12, %28 : vector<2x5x32xf32>
    %cst_15 = arith.constant 9.99999974E-6 : f32
    %30 = vector.broadcast %cst_15 : f32 to vector<2x5x1xf32>
    %31 = arith.addf %27, %30 : vector<2x5x1xf32>
    %32 = math.rsqrt %31 : vector<2x5x1xf32>
    %33 = vector.broadcast %32 : vector<2x5x1xf32> to vector<2x5x32xf32>
    %34 = arith.mulf %29, %33 : vector<2x5x32xf32>
    %35 = vector.shape_cast %13 : vector<1x32xf32> to vector<1x1x32xf32>
    %36 = vector.broadcast %35 : vector<1x1x32xf32> to vector<2x5x32xf32>
    %37 = arith.mulf %34, %36 : vector<2x5x32xf32>
    %38 = vector.shape_cast %14 : vector<1x32xf32> to vector<1x1x32xf32>
    %39 = vector.broadcast %38 : vector<1x1x32xf32> to vector<2x5x32xf32>
    %40 = arith.addf %37, %39 : vector<2x5x32xf32>
    %c0_16 = arith.constant 0 : index
    %c0_17 = arith.constant 0 : index
    %c0_18 = arith.constant 0 : index
    %41 = vector.load %arg8[%c0_16, %c0_17, %c0_18] : memref<2x4x128xf32, #tpu.memory_space<vmem>>, vector<1x4x128xf32>
    %42 = vector.shape_cast %41 : vector<1x4x128xf32> to vector<4x128xf32>
    %43 = vector.extract_strided_slice %42 {offsets = [0, 0], sizes = [1, 96], strides = [1, 1]} : vector<4x128xf32> to vector<1x96xf32>
    %44 = vector.extract_strided_slice %42 {offsets = [1, 0], sizes = [1, 32], strides = [1, 1]} : vector<4x128xf32> to vector<1x32xf32>
    %45 = vector.extract_strided_slice %42 {offsets = [2, 0], sizes = [1, 128], strides = [1, 1]} : vector<4x128xf32> to vector<1x128xf32>
    %46 = vector.extract_strided_slice %42 {offsets = [3, 0], sizes = [1, 32], strides = [1, 1]} : vector<4x128xf32> to vector<1x32xf32>
    %cst_19 = arith.constant dense<0.000000e+00> : vector<2x5xf32>
    %47 = vector.multi_reduction <add>, %40, %cst_19 [2] : vector<2x5x32xf32> to vector<2x5xf32>
    %48 = vector.shape_cast %47 : vector<2x5xf32> to vector<2x5x1xf32>
    %cst_20 = arith.constant 3.200000e+01 : f32
    %49 = vector.broadcast %cst_20 : f32 to vector<2x5x1xf32>
    %50 = arith.divf %48, %49 : vector<2x5x1xf32>
    %51 = vector.broadcast %50 : vector<2x5x1xf32> to vector<2x5x32xf32>
    %52 = arith.subf %40, %51 : vector<2x5x32xf32>
    %53 = arith.mulf %52, %52 : vector<2x5x32xf32>
    %cst_21 = arith.constant dense<0.000000e+00> : vector<2x5xf32>
    %54 = vector.multi_reduction <add>, %53, %cst_21 [2] : vector<2x5x32xf32> to vector<2x5xf32>
    %55 = vector.shape_cast %54 : vector<2x5xf32> to vector<2x5x1xf32>
    %cst_22 = arith.constant 3.200000e+01 : f32
    %56 = vector.broadcast %cst_22 : f32 to vector<2x5x1xf32>
    %57 = arith.divf %55, %56 : vector<2x5x1xf32>
    %58 = vector.broadcast %50 : vector<2x5x1xf32> to vector<2x5x32xf32>
    %59 = arith.subf %40, %58 : vector<2x5x32xf32>
    %cst_23 = arith.constant 9.99999974E-6 : f32
    %60 = vector.broadcast %cst_23 : f32 to vector<2x5x1xf32>
    %61 = arith.addf %57, %60 : vector<2x5x1xf32>
    %62 = math.rsqrt %61 : vector<2x5x1xf32>
    %63 = vector.broadcast %62 : vector<2x5x1xf32> to vector<2x5x32xf32>
    %64 = arith.mulf %59, %63 : vector<2x5x32xf32>
    %c0_24 = arith.constant 0 : index
    %c0_25 = arith.constant 0 : index
    %c0_26 = arith.constant 0 : index
    %65 = vector.load %arg4[%c0_24, %c0_25, %c0_26] : memref<2x32x96xf32, #tpu.memory_space<vmem>>, vector<1x32x96xf32>
    %66 = vector.shape_cast %65 : vector<1x32x96xf32> to vector<32x96xf32>
    "tpu.trace_start"() <{level = 10 : i32, message = "blw,wk->blk"}> : () -> ()
    %cst_27 = arith.constant dense<0.000000e+00> : vector<2x5x96xf32>
    %67 = tpu.matmul %64, %66, %cst_27 {dimension_numbers = #tpu.dot_dimension_numbers<[2], [0], [0, 1], [1], [0, 0, 0, 1, 1, 1], [], []>} : vector<2x5x32xf32>, vector<32x96xf32>, vector<2x5x96xf32> -> vector<2x5x96xf32>
    "tpu.trace_stop"() : () -> ()
    %68 = vector.shape_cast %43 : vector<1x96xf32> to vector<1x1x96xf32>
    %69 = vector.broadcast %68 : vector<1x1x96xf32> to vector<2x5x96xf32>
    %70 = arith.addf %67, %69 : vector<2x5x96xf32>
    %71 = vector.extract_strided_slice %70 {offsets = [0, 0, 0], sizes = [2, 5, 32], strides = [1, 1, 1]} : vector<2x5x96xf32> to vector<2x5x32xf32>
    %72 = vector.extract_strided_slice %70 {offsets = [0, 0, 32], sizes = [2, 5, 32], strides = [1, 1, 1]} : vector<2x5x96xf32> to vector<2x5x32xf32>
    %73 = vector.extract_strided_slice %70 {offsets = [0, 0, 64], sizes = [2, 5, 32], strides = [1, 1, 1]} : vector<2x5x96xf32> to vector<2x5x32xf32>
    %74 = vector.extract_strided_slice %71 {offsets = [0, 0, 0], sizes = [2, 5, 16], strides = [1, 1, 1]} : vector<2x5x32xf32> to vector<2x5x16xf32>
    %75 = vector.extract_strided_slice %71 {offsets = [0, 0, 16], sizes = [2, 5, 16], strides = [1, 1, 1]} : vector<2x5x32xf32> to vector<2x5x16xf32>
    %76 = tpu.concatenate %74, %75 in 0 : vector<2x5x16xf32>, vector<2x5x16xf32> -> vector<4x5x16xf32>
    %77 = vector.extract_strided_slice %72 {offsets = [0, 0, 0], sizes = [2, 5, 16], strides = [1, 1, 1]} : vector<2x5x32xf32> to vector<2x5x16xf32>
    %78 = vector.extract_strided_slice %72 {offsets = [0, 0, 16], sizes = [2, 5, 16], strides = [1, 1, 1]} : vector<2x5x32xf32> to vector<2x5x16xf32>
    %79 = tpu.concatenate %77, %78 in 0 : vector<2x5x16xf32>, vector<2x5x16xf32> -> vector<4x5x16xf32>
    %80 = vector.extract_strided_slice %73 {offsets = [0, 0, 0], sizes = [2, 5, 16], strides = [1, 1, 1]} : vector<2x5x32xf32> to vector<2x5x16xf32>
    %81 = vector.extract_strided_slice %73 {offsets = [0, 0, 16], sizes = [2, 5, 16], strides = [1, 1, 1]} : vector<2x5x32xf32> to vector<2x5x16xf32>
    %82 = tpu.concatenate %80, %81 in 0 : vector<2x5x16xf32>, vector<2x5x16xf32> -> vector<4x5x16xf32>
    %cst_28 = arith.constant 2.500000e-01 : f32
    %83 = vector.broadcast %cst_28 : f32 to vector<4x5x16xf32>
    %84 = arith.mulf %76, %83 : vector<4x5x16xf32>
    "tpu.trace_start"() <{level = 10 : i32, message = "gld,gmd->glm"}> : () -> ()
    %cst_29 = arith.constant dense<0.000000e+00> : vector<4x5x5xf32>
    %85 = tpu.matmul %84, %79, %cst_29 {dimension_numbers = #tpu.dot_dimension_numbers<[2], [2], [1], [1], [0, 0, 0, 1, 1, 1], [0], [0]>} : vector<4x5x16xf32>, vector<4x5x16xf32>, vector<4x5x5xf32> -> vector<4x5x5xf32>
    "tpu.trace_stop"() : () -> ()
    %cst_30 = arith.constant dense<0xFF800000> : vector<4x5xf32>
    %86 = vector.multi_reduction <maximumf>, %85, %cst_30 [2] : vector<4x5x5xf32> to vector<4x5xf32>
    %87 = vector.shape_cast %86 : vector<4x5xf32> to vector<4x5x1xf32>
    %88 = vector.broadcast %87 : vector<4x5x1xf32> to vector<4x5x5xf32>
    %89 = arith.subf %85, %88 : vector<4x5x5xf32>
    %90 = math.exp %89 : vector<4x5x5xf32>
    %cst_31 = arith.constant dense<0.000000e+00> : vector<4x5xf32>
    %91 = vector.multi_reduction <add>, %90, %cst_31 [2] : vector<4x5x5xf32> to vector<4x5xf32>
    %92 = vector.shape_cast %91 : vector<4x5xf32> to vector<4x5x1xf32>
    %93 = vector.broadcast %92 : vector<4x5x1xf32> to vector<4x5x5xf32>
    %94 = arith.divf %90, %93 : vector<4x5x5xf32>
    "tpu.trace_start"() <{level = 10 : i32, message = "glm,gmd->gld"}> : () -> ()
    %cst_32 = arith.constant dense<0.000000e+00> : vector<4x5x16xf32>
    %95 = tpu.matmul %94, %82, %cst_32 {dimension_numbers = #tpu.dot_dimension_numbers<[2], [1], [1], [2], [0, 0, 0, 1, 1, 2], [0], [0]>} : vector<4x5x5xf32>, vector<4x5x16xf32>, vector<4x5x16xf32> -> vector<4x5x16xf32>
    "tpu.trace_stop"() : () -> ()
    %96 = vector.extract_strided_slice %95 {offsets = [0, 0, 0], sizes = [2, 5, 16], strides = [1, 1, 1]} : vector<4x5x16xf32> to vector<2x5x16xf32>
    %97 = vector.extract_strided_slice %95 {offsets = [2, 0, 0], sizes = [2, 5, 16], strides = [1, 1, 1]} : vector<4x5x16xf32> to vector<2x5x16xf32>
    %98 = tpu.concatenate %96, %97 in 2 : vector<2x5x16xf32>, vector<2x5x16xf32> -> vector<2x5x32xf32>
    %c0_33 = arith.constant 0 : index
    %c0_34 = arith.constant 0 : index
    %c0_35 = arith.constant 0 : index
    %99 = vector.load %arg5[%c0_33, %c0_34, %c0_35] : memref<2x32x32xf32, #tpu.memory_space<vmem>>, vector<1x32x32xf32>
    %100 = vector.shape_cast %99 : vector<1x32x32xf32> to vector<32x32xf32>
    "tpu.trace_start"() <{level = 10 : i32, message = "blw,wo->blo"}> : () -> ()
    %cst_36 = arith.constant dense<0.000000e+00> : vector<2x5x32xf32>
    %101 = tpu.matmul %98, %100, %cst_36 {dimension_numbers = #tpu.dot_dimension_numbers<[2], [0], [0, 1], [1], [0, 0, 0, 1, 1, 1], [], []>} : vector<2x5x32xf32>, vector<32x32xf32>, vector<2x5x32xf32> -> vector<2x5x32xf32>
    "tpu.trace_stop"() : () -> ()
    %102 = vector.shape_cast %44 : vector<1x32xf32> to vector<1x1x32xf32>
    %103 = vector.broadcast %102 : vector<1x1x32xf32> to vector<2x5x32xf32>
    %104 = arith.addf %101, %103 : vector<2x5x32xf32>
    %105 = arith.addf %40, %104 : vector<2x5x32xf32>
    %cst_37 = arith.constant dense<0.000000e+00> : vector<2x5xf32>
    %106 = vector.multi_reduction <add>, %105, %cst_37 [2] : vector<2x5x32xf32> to vector<2x5xf32>
    %107 = vector.shape_cast %106 : vector<2x5xf32> to vector<2x5x1xf32>
    %cst_38 = arith.constant 3.200000e+01 : f32
    %108 = vector.broadcast %cst_38 : f32 to vector<2x5x1xf32>
    %109 = arith.divf %107, %108 : vector<2x5x1xf32>
    %110 = vector.broadcast %109 : vector<2x5x1xf32> to vector<2x5x32xf32>
    %111 = arith.subf %105, %110 : vector<2x5x32xf32>
    %112 = arith.mulf %111, %111 : vector<2x5x32xf32>
    %cst_39 = arith.constant dense<0.000000e+00> : vector<2x5xf32>
    %113 = vector.multi_reduction <add>, %112, %cst_39 [2] : vector<2x5x32xf32> to vector<2x5xf32>
    %114 = vector.shape_cast %113 : vector<2x5xf32> to vector<2x5x1xf32>
    %cst_40 = arith.constant 3.200000e+01 : f32
    %115 = vector.broadcast %cst_40 : f32 to vector<2x5x1xf32>
    %116 = arith.divf %114, %115 : vector<2x5x1xf32>
    %117 = vector.broadcast %109 : vector<2x5x1xf32> to vector<2x5x32xf32>
    %118 = arith.subf %105, %117 : vector<2x5x32xf32>
    %cst_41 = arith.constant 9.99999974E-6 : f32
    %119 = vector.broadcast %cst_41 : f32 to vector<2x5x1xf32>
    %120 = arith.addf %116, %119 : vector<2x5x1xf32>
    %121 = math.rsqrt %120 : vector<2x5x1xf32>
    %122 = vector.broadcast %121 : vector<2x5x1xf32> to vector<2x5x32xf32>
    %123 = arith.mulf %118, %122 : vector<2x5x32xf32>
    %c0_42 = arith.constant 0 : index
    %c0_43 = arith.constant 0 : index
    %c0_44 = arith.constant 0 : index
    %124 = vector.load %arg6[%c0_42, %c0_43, %c0_44] : memref<2x32x128xf32, #tpu.memory_space<vmem>>, vector<1x32x128xf32>
    %125 = vector.shape_cast %124 : vector<1x32x128xf32> to vector<32x128xf32>
    "tpu.trace_start"() <{level = 10 : i32, message = "blw,wm->blm"}> : () -> ()
    %cst_45 = arith.constant dense<0.000000e+00> : vector<2x5x128xf32>
    %126 = tpu.matmul %123, %125, %cst_45 {dimension_numbers = #tpu.dot_dimension_numbers<[2], [0], [0, 1], [1], [0, 0, 0, 1, 1, 1], [], []>} : vector<2x5x32xf32>, vector<32x128xf32>, vector<2x5x128xf32> -> vector<2x5x128xf32>
    "tpu.trace_stop"() : () -> ()
    %127 = vector.shape_cast %45 : vector<1x128xf32> to vector<1x1x128xf32>
    %128 = vector.broadcast %127 : vector<1x1x128xf32> to vector<2x5x128xf32>
    %129 = arith.addf %126, %128 : vector<2x5x128xf32>
    %cst_46 = arith.constant 1.702000e+00 : f32
    %130 = vector.broadcast %cst_46 : f32 to vector<2x5x128xf32>
    %131 = arith.mulf %130, %129 : vector<2x5x128xf32>
    %132 = arith.negf %131 : vector<2x5x128xf32>
    %133 = math.exp %132 : vector<2x5x128xf32>
    %cst_47 = arith.constant 1.000000e+00 : f32
    %134 = vector.broadcast %cst_47 : f32 to vector<2x5x128xf32>
    %135 = arith.addf %134, %133 : vector<2x5x128xf32>
    %136 = arith.divf %134, %135 : vector<2x5x128xf32>
    %137 = arith.mulf %129, %136 : vector<2x5x128xf32>
    %c0_48 = arith.constant 0 : index
    %c0_49 = arith.constant 0 : index
    %c0_50 = arith.constant 0 : index
    %138 = vector.load %arg7[%c0_48, %c0_49, %c0_50] : memref<2x128x32xf32, #tpu.memory_space<vmem>>, vector<1x128x32xf32>
    %139 = vector.shape_cast %138 : vector<1x128x32xf32> to vector<128x32xf32>
    "tpu.trace_start"() <{level = 10 : i32, message = "blm,mw->blw"}> : () -> ()
    %cst_51 = arith.constant dense<0.000000e+00> : vector<2x5x32xf32>
    %140 = tpu.matmul %137, %139, %cst_51 {dimension_numbers = #tpu.dot_dimension_numbers<[2], [0], [0, 1], [1], [0, 0, 0, 1, 1, 1], [], []>} : vector<2x5x128xf32>, vector<128x32xf32>, vector<2x5x32xf32> -> vector<2x5x32xf32>
    "tpu.trace_stop"() : () -> ()
    %141 = vector.shape_cast %46 : vector<1x32xf32> to vector<1x1x32xf32>
    %142 = vector.broadcast %141 : vector<1x1x32xf32> to vector<2x5x32xf32>
    %143 = arith.addf %140, %142 : vector<2x5x32xf32>
    %144 = arith.addf %105, %143 : vector<2x5x32xf32>
    %145 = vector.extract_strided_slice %144 {offsets = [0, 0, 0], sizes = [2, 1, 32], strides = [1, 1, 1]} : vector<2x5x32xf32> to vector<2x1x32xf32>
    %146 = vector.shape_cast %145 : vector<2x1x32xf32> to vector<2x32xf32>
    %cst_52 = arith.constant dense<0.000000e+00> : vector<2xf32>
    %147 = vector.multi_reduction <add>, %146, %cst_52 [1] : vector<2x32xf32> to vector<2xf32>
    %148 = vector.shape_cast %147 : vector<2xf32> to vector<2x1xf32>
    %cst_53 = arith.constant 3.200000e+01 : f32
    %149 = vector.broadcast %cst_53 : f32 to vector<2x1xf32>
    %150 = arith.divf %148, %149 : vector<2x1xf32>
    %151 = vector.broadcast %150 : vector<2x1xf32> to vector<2x32xf32>
    %152 = arith.subf %146, %151 : vector<2x32xf32>
    %153 = arith.mulf %152, %152 : vector<2x32xf32>
    %cst_54 = arith.constant dense<0.000000e+00> : vector<2xf32>
    %154 = vector.multi_reduction <add>, %153, %cst_54 [1] : vector<2x32xf32> to vector<2xf32>
    %155 = vector.shape_cast %154 : vector<2xf32> to vector<2x1xf32>
    %cst_55 = arith.constant 3.200000e+01 : f32
    %156 = vector.broadcast %cst_55 : f32 to vector<2x1xf32>
    %157 = arith.divf %155, %156 : vector<2x1xf32>
    %158 = vector.broadcast %150 : vector<2x1xf32> to vector<2x32xf32>
    %159 = arith.subf %146, %158 : vector<2x32xf32>
    %cst_56 = arith.constant 9.99999974E-6 : f32
    %160 = vector.broadcast %cst_56 : f32 to vector<2x1xf32>
    %161 = arith.addf %157, %160 : vector<2x1xf32>
    %162 = math.rsqrt %161 : vector<2x1xf32>
    %163 = vector.broadcast %162 : vector<2x1xf32> to vector<2x32xf32>
    %164 = arith.mulf %159, %163 : vector<2x32xf32>
    %165 = vector.broadcast %15 : vector<1x32xf32> to vector<2x32xf32>
    %166 = arith.mulf %164, %165 : vector<2x32xf32>
    %167 = vector.broadcast %16 : vector<1x32xf32> to vector<2x32xf32>
    %168 = arith.addf %166, %167 : vector<2x32xf32>
    %c0_57 = arith.constant 0 : index
    %c0_58 = arith.constant 0 : index
    %c0_59 = arith.constant 0 : index
    %169 = vector.load %arg9[%c0_57, %c0_58, %c0_59] : memref<2x2x32xf32, #tpu.memory_space<vmem>>, vector<1x2x32xf32>
    %170 = vector.shape_cast %169 : vector<1x2x32xf32> to vector<2x32xf32>
    %171 = vector.shape_cast %168 : vector<2x32xf32> to vector<1x2x32xf32>
    tpu.vector_store %arg9[%c0_57, %c0_58, %c0_59], %171 {strides = array<i32>} : memref<2x2x32xf32, #tpu.memory_space<vmem>>, vector<1x2x32xf32>,
    %c1_60 = arith.constant 1 : index
    %c0_61 = arith.constant 0 : index
    %c0_62 = arith.constant 0 : index
    %172 = vector.load %arg8[%c1_60, %c0_61, %c0_62] : memref<2x4x128xf32, #tpu.memory_space<vmem>>, vector<1x4x128xf32>
    %173 = vector.shape_cast %172 : vector<1x4x128xf32> to vector<4x128xf32>
    %174 = vector.extract_strided_slice %173 {offsets = [0, 0], sizes = [1, 96], strides = [1, 1]} : vector<4x128xf32> to vector<1x96xf32>
    %175 = vector.extract_strided_slice %173 {offsets = [1, 0], sizes = [1, 32], strides = [1, 1]} : vector<4x128xf32> to vector<1x32xf32>
    %176 = vector.extract_strided_slice %173 {offsets = [2, 0], sizes = [1, 128], strides = [1, 1]} : vector<4x128xf32> to vector<1x128xf32>
    %177 = vector.extract_strided_slice %173 {offsets = [3, 0], sizes = [1, 32], strides = [1, 1]} : vector<4x128xf32> to vector<1x32xf32>
    %cst_63 = arith.constant dense<0.000000e+00> : vector<2x5xf32>
    %178 = vector.multi_reduction <add>, %144, %cst_63 [2] : vector<2x5x32xf32> to vector<2x5xf32>
    %179 = vector.shape_cast %178 : vector<2x5xf32> to vector<2x5x1xf32>
    %cst_64 = arith.constant 3.200000e+01 : f32
    %180 = vector.broadcast %cst_64 : f32 to vector<2x5x1xf32>
    %181 = arith.divf %179, %180 : vector<2x5x1xf32>
    %182 = vector.broadcast %181 : vector<2x5x1xf32> to vector<2x5x32xf32>
    %183 = arith.subf %144, %182 : vector<2x5x32xf32>
    %184 = arith.mulf %183, %183 : vector<2x5x32xf32>
    %cst_65 = arith.constant dense<0.000000e+00> : vector<2x5xf32>
    %185 = vector.multi_reduction <add>, %184, %cst_65 [2] : vector<2x5x32xf32> to vector<2x5xf32>
    %186 = vector.shape_cast %185 : vector<2x5xf32> to vector<2x5x1xf32>
    %cst_66 = arith.constant 3.200000e+01 : f32
    %187 = vector.broadcast %cst_66 : f32 to vector<2x5x1xf32>
    %188 = arith.divf %186, %187 : vector<2x5x1xf32>
    %189 = vector.broadcast %181 : vector<2x5x1xf32> to vector<2x5x32xf32>
    %190 = arith.subf %144, %189 : vector<2x5x32xf32>
    %cst_67 = arith.constant 9.99999974E-6 : f32
    %191 = vector.broadcast %cst_67 : f32 to vector<2x5x1xf32>
    %192 = arith.addf %188, %191 : vector<2x5x1xf32>
    %193 = math.rsqrt %192 : vector<2x5x1xf32>
    %194 = vector.broadcast %193 : vector<2x5x1xf32> to vector<2x5x32xf32>
    %195 = arith.mulf %190, %194 : vector<2x5x32xf32>
    %c1_68 = arith.constant 1 : index
    %c0_69 = arith.constant 0 : index
    %c0_70 = arith.constant 0 : index
    %196 = vector.load %arg4[%c1_68, %c0_69, %c0_70] : memref<2x32x96xf32, #tpu.memory_space<vmem>>, vector<1x32x96xf32>
    %197 = vector.shape_cast %196 : vector<1x32x96xf32> to vector<32x96xf32>
    "tpu.trace_start"() <{level = 10 : i32, message = "blw,wk->blk"}> : () -> ()
    %cst_71 = arith.constant dense<0.000000e+00> : vector<2x5x96xf32>
    %198 = tpu.matmul %195, %197, %cst_71 {dimension_numbers = #tpu.dot_dimension_numbers<[2], [0], [0, 1], [1], [0, 0, 0, 1, 1, 1], [], []>} : vector<2x5x32xf32>, vector<32x96xf32>, vector<2x5x96xf32> -> vector<2x5x96xf32>
    "tpu.trace_stop"() : () -> ()
    %199 = vector.shape_cast %174 : vector<1x96xf32> to vector<1x1x96xf32>
    %200 = vector.broadcast %199 : vector<1x1x96xf32> to vector<2x5x96xf32>
    %201 = arith.addf %198, %200 : vector<2x5x96xf32>
    %202 = vector.extract_strided_slice %201 {offsets = [0, 0, 0], sizes = [2, 5, 32], strides = [1, 1, 1]} : vector<2x5x96xf32> to vector<2x5x32xf32>
    %203 = vector.extract_strided_slice %201 {offsets = [0, 0, 32], sizes = [2, 5, 32], strides = [1, 1, 1]} : vector<2x5x96xf32> to vector<2x5x32xf32>
    %204 = vector.extract_strided_slice %201 {offsets = [0, 0, 64], sizes = [2, 5, 32], strides = [1, 1, 1]} : vector<2x5x96xf32> to vector<2x5x32xf32>
    %205 = vector.extract_strided_slice %202 {offsets = [0, 0, 0], sizes = [2, 5, 16], strides = [1, 1, 1]} : vector<2x5x32xf32> to vector<2x5x16xf32>
    %206 = vector.extract_strided_slice %202 {offsets = [0, 0, 16], sizes = [2, 5, 16], strides = [1, 1, 1]} : vector<2x5x32xf32> to vector<2x5x16xf32>
    %207 = tpu.concatenate %205, %206 in 0 : vector<2x5x16xf32>, vector<2x5x16xf32> -> vector<4x5x16xf32>
    %208 = vector.extract_strided_slice %203 {offsets = [0, 0, 0], sizes = [2, 5, 16], strides = [1, 1, 1]} : vector<2x5x32xf32> to vector<2x5x16xf32>
    %209 = vector.extract_strided_slice %203 {offsets = [0, 0, 16], sizes = [2, 5, 16], strides = [1, 1, 1]} : vector<2x5x32xf32> to vector<2x5x16xf32>
    %210 = tpu.concatenate %208, %209 in 0 : vector<2x5x16xf32>, vector<2x5x16xf32> -> vector<4x5x16xf32>
    %211 = vector.extract_strided_slice %204 {offsets = [0, 0, 0], sizes = [2, 5, 16], strides = [1, 1, 1]} : vector<2x5x32xf32> to vector<2x5x16xf32>
    %212 = vector.extract_strided_slice %204 {offsets = [0, 0, 16], sizes = [2, 5, 16], strides = [1, 1, 1]} : vector<2x5x32xf32> to vector<2x5x16xf32>
    %213 = tpu.concatenate %211, %212 in 0 : vector<2x5x16xf32>, vector<2x5x16xf32> -> vector<4x5x16xf32>
    %cst_72 = arith.constant 2.500000e-01 : f32
    %214 = vector.broadcast %cst_72 : f32 to vector<4x5x16xf32>
    %215 = arith.mulf %207, %214 : vector<4x5x16xf32>
    "tpu.trace_start"() <{level = 10 : i32, message = "gld,gmd->glm"}> : () -> ()
    %cst_73 = arith.constant dense<0.000000e+00> : vector<4x5x5xf32>
    %216 = tpu.matmul %215, %210, %cst_73 {dimension_numbers = #tpu.dot_dimension_numbers<[2], [2], [1], [1], [0, 0, 0, 1, 1, 1], [0], [0]>} : vector<4x5x16xf32>, vector<4x5x16xf32>, vector<4x5x5xf32> -> vector<4x5x5xf32>
    "tpu.trace_stop"() : () -> ()
    %cst_74 = arith.constant dense<0xFF800000> : vector<4x5xf32>
    %217 = vector.multi_reduction <maximumf>, %216, %cst_74 [2] : vector<4x5x5xf32> to vector<4x5xf32>
    %218 = vector.shape_cast %217 : vector<4x5xf32> to vector<4x5x1xf32>
    %219 = vector.broadcast %218 : vector<4x5x1xf32> to vector<4x5x5xf32>
    %220 = arith.subf %216, %219 : vector<4x5x5xf32>
    %221 = math.exp %220 : vector<4x5x5xf32>
    %cst_75 = arith.constant dense<0.000000e+00> : vector<4x5xf32>
    %222 = vector.multi_reduction <add>, %221, %cst_75 [2] : vector<4x5x5xf32> to vector<4x5xf32>
    %223 = vector.shape_cast %222 : vector<4x5xf32> to vector<4x5x1xf32>
    %224 = vector.broadcast %223 : vector<4x5x1xf32> to vector<4x5x5xf32>
    %225 = arith.divf %221, %224 : vector<4x5x5xf32>
    "tpu.trace_start"() <{level = 10 : i32, message = "glm,gmd->gld"}> : () -> ()
    %cst_76 = arith.constant dense<0.000000e+00> : vector<4x5x16xf32>
    %226 = tpu.matmul %225, %213, %cst_76 {dimension_numbers = #tpu.dot_dimension_numbers<[2], [1], [1], [2], [0, 0, 0, 1, 1, 2], [0], [0]>} : vector<4x5x5xf32>, vector<4x5x16xf32>, vector<4x5x16xf32> -> vector<4x5x16xf32>
    "tpu.trace_stop"() : () -> ()
    %227 = vector.extract_strided_slice %226 {offsets = [0, 0, 0], sizes = [2, 5, 16], strides = [1, 1, 1]} : vector<4x5x16xf32> to vector<2x5x16xf32>
    %228 = vector.extract_strided_slice %226 {offsets = [2, 0, 0], sizes = [2, 5, 16], strides = [1, 1, 1]} : vector<4x5x16xf32> to vector<2x5x16xf32>
    %229 = tpu.concatenate %227, %228 in 2 : vector<2x5x16xf32>, vector<2x5x16xf32> -> vector<2x5x32xf32>
    %c1_77 = arith.constant 1 : index
    %c0_78 = arith.constant 0 : index
    %c0_79 = arith.constant 0 : index
    %230 = vector.load %arg5[%c1_77, %c0_78, %c0_79] : memref<2x32x32xf32, #tpu.memory_space<vmem>>, vector<1x32x32xf32>
    %231 = vector.shape_cast %230 : vector<1x32x32xf32> to vector<32x32xf32>
    "tpu.trace_start"() <{level = 10 : i32, message = "blw,wo->blo"}> : () -> ()
    %cst_80 = arith.constant dense<0.000000e+00> : vector<2x5x32xf32>
    %232 = tpu.matmul %229, %231, %cst_80 {dimension_numbers = #tpu.dot_dimension_numbers<[2], [0], [0, 1], [1], [0, 0, 0, 1, 1, 1], [], []>} : vector<2x5x32xf32>, vector<32x32xf32>, vector<2x5x32xf32> -> vector<2x5x32xf32>
    "tpu.trace_stop"() : () -> ()
    %233 = vector.shape_cast %175 : vector<1x32xf32> to vector<1x1x32xf32>
    %234 = vector.broadcast %233 : vector<1x1x32xf32> to vector<2x5x32xf32>
    %235 = arith.addf %232, %234 : vector<2x5x32xf32>
    %236 = arith.addf %144, %235 : vector<2x5x32xf32>
    %cst_81 = arith.constant dense<0.000000e+00> : vector<2x5xf32>
    %237 = vector.multi_reduction <add>, %236, %cst_81 [2] : vector<2x5x32xf32> to vector<2x5xf32>
    %238 = vector.shape_cast %237 : vector<2x5xf32> to vector<2x5x1xf32>
    %cst_82 = arith.constant 3.200000e+01 : f32
    %239 = vector.broadcast %cst_82 : f32 to vector<2x5x1xf32>
    %240 = arith.divf %238, %239 : vector<2x5x1xf32>
    %241 = vector.broadcast %240 : vector<2x5x1xf32> to vector<2x5x32xf32>
    %242 = arith.subf %236, %241 : vector<2x5x32xf32>
    %243 = arith.mulf %242, %242 : vector<2x5x32xf32>
    %cst_83 = arith.constant dense<0.000000e+00> : vector<2x5xf32>
    %244 = vector.multi_reduction <add>, %243, %cst_83 [2] : vector<2x5x32xf32> to vector<2x5xf32>
    %245 = vector.shape_cast %244 : vector<2x5xf32> to vector<2x5x1xf32>
    %cst_84 = arith.constant 3.200000e+01 : f32
    %246 = vector.broadcast %cst_84 : f32 to vector<2x5x1xf32>
    %247 = arith.divf %245, %246 : vector<2x5x1xf32>
    %248 = vector.broadcast %240 : vector<2x5x1xf32> to vector<2x5x32xf32>
    %249 = arith.subf %236, %248 : vector<2x5x32xf32>
    %cst_85 = arith.constant 9.99999974E-6 : f32
    %250 = vector.broadcast %cst_85 : f32 to vector<2x5x1xf32>
    %251 = arith.addf %247, %250 : vector<2x5x1xf32>
    %252 = math.rsqrt %251 : vector<2x5x1xf32>
    %253 = vector.broadcast %252 : vector<2x5x1xf32> to vector<2x5x32xf32>
    %254 = arith.mulf %249, %253 : vector<2x5x32xf32>
    %c1_86 = arith.constant 1 : index
    %c0_87 = arith.constant 0 : index
    %c0_88 = arith.constant 0 : index
    %255 = vector.load %arg6[%c1_86, %c0_87, %c0_88] : memref<2x32x128xf32, #tpu.memory_space<vmem>>, vector<1x32x128xf32>
    %256 = vector.shape_cast %255 : vector<1x32x128xf32> to vector<32x128xf32>
    "tpu.trace_start"() <{level = 10 : i32, message = "blw,wm->blm"}> : () -> ()
    %cst_89 = arith.constant dense<0.000000e+00> : vector<2x5x128xf32>
    %257 = tpu.matmul %254, %256, %cst_89 {dimension_numbers = #tpu.dot_dimension_numbers<[2], [0], [0, 1], [1], [0, 0, 0, 1, 1, 1], [], []>} : vector<2x5x32xf32>, vector<32x128xf32>, vector<2x5x128xf32> -> vector<2x5x128xf32>
    "tpu.trace_stop"() : () -> ()
    %258 = vector.shape_cast %176 : vector<1x128xf32> to vector<1x1x128xf32>
    %259 = vector.broadcast %258 : vector<1x1x128xf32> to vector<2x5x128xf32>
    %260 = arith.addf %257, %259 : vector<2x5x128xf32>
    %cst_90 = arith.constant 1.702000e+00 : f32
    %261 = vector.broadcast %cst_90 : f32 to vector<2x5x128xf32>
    %262 = arith.mulf %261, %260 : vector<2x5x128xf32>
    %263 = arith.negf %262 : vector<2x5x128xf32>
    %264 = math.exp %263 : vector<2x5x128xf32>
    %cst_91 = arith.constant 1.000000e+00 : f32
    %265 = vector.broadcast %cst_91 : f32 to vector<2x5x128xf32>
    %266 = arith.addf %265, %264 : vector<2x5x128xf32>
    %267 = arith.divf %265, %266 : vector<2x5x128xf32>
    %268 = arith.mulf %260, %267 : vector<2x5x128xf32>
    %c1_92 = arith.constant 1 : index
    %c0_93 = arith.constant 0 : index
    %c0_94 = arith.constant 0 : index
    %269 = vector.load %arg7[%c1_92, %c0_93, %c0_94] : memref<2x128x32xf32, #tpu.memory_space<vmem>>, vector<1x128x32xf32>
    %270 = vector.shape_cast %269 : vector<1x128x32xf32> to vector<128x32xf32>
    "tpu.trace_start"() <{level = 10 : i32, message = "blm,mw->blw"}> : () -> ()
    %cst_95 = arith.constant dense<0.000000e+00> : vector<2x5x32xf32>
    %271 = tpu.matmul %268, %270, %cst_95 {dimension_numbers = #tpu.dot_dimension_numbers<[2], [0], [0, 1], [1], [0, 0, 0, 1, 1, 1], [], []>} : vector<2x5x128xf32>, vector<128x32xf32>, vector<2x5x32xf32> -> vector<2x5x32xf32>
    "tpu.trace_stop"() : () -> ()
    %272 = vector.shape_cast %177 : vector<1x32xf32> to vector<1x1x32xf32>
    %273 = vector.broadcast %272 : vector<1x1x32xf32> to vector<2x5x32xf32>
    %274 = arith.addf %271, %273 : vector<2x5x32xf32>
    %275 = arith.addf %236, %274 : vector<2x5x32xf32>
    %276 = vector.extract_strided_slice %275 {offsets = [0, 0, 0], sizes = [2, 1, 32], strides = [1, 1, 1]} : vector<2x5x32xf32> to vector<2x1x32xf32>
    %277 = vector.shape_cast %276 : vector<2x1x32xf32> to vector<2x32xf32>
    %cst_96 = arith.constant dense<0.000000e+00> : vector<2xf32>
    %278 = vector.multi_reduction <add>, %277, %cst_96 [1] : vector<2x32xf32> to vector<2xf32>
    %279 = vector.shape_cast %278 : vector<2xf32> to vector<2x1xf32>
    %cst_97 = arith.constant 3.200000e+01 : f32
    %280 = vector.broadcast %cst_97 : f32 to vector<2x1xf32>
    %281 = arith.divf %279, %280 : vector<2x1xf32>
    %282 = vector.broadcast %281 : vector<2x1xf32> to vector<2x32xf32>
    %283 = arith.subf %277, %282 : vector<2x32xf32>
    %284 = arith.mulf %283, %283 : vector<2x32xf32>
    %cst_98 = arith.constant dense<0.000000e+00> : vector<2xf32>
    %285 = vector.multi_reduction <add>, %284, %cst_98 [1] : vector<2x32xf32> to vector<2xf32>
    %286 = vector.shape_cast %285 : vector<2xf32> to vector<2x1xf32>
    %cst_99 = arith.constant 3.200000e+01 : f32
    %287 = vector.broadcast %cst_99 : f32 to vector<2x1xf32>
    %288 = arith.divf %286, %287 : vector<2x1xf32>
    %289 = vector.broadcast %281 : vector<2x1xf32> to vector<2x32xf32>
    %290 = arith.subf %277, %289 : vector<2x32xf32>
    %cst_100 = arith.constant 9.99999974E-6 : f32
    %291 = vector.broadcast %cst_100 : f32 to vector<2x1xf32>
    %292 = arith.addf %288, %291 : vector<2x1xf32>
    %293 = math.rsqrt %292 : vector<2x1xf32>
    %294 = vector.broadcast %293 : vector<2x1xf32> to vector<2x32xf32>
    %295 = arith.mulf %290, %294 : vector<2x32xf32>
    %296 = vector.broadcast %15 : vector<1x32xf32> to vector<2x32xf32>
    %297 = arith.mulf %295, %296 : vector<2x32xf32>
    %298 = vector.broadcast %16 : vector<1x32xf32> to vector<2x32xf32>
    %299 = arith.addf %297, %298 : vector<2x32xf32>
    %c1_101 = arith.constant 1 : index
    %c0_102 = arith.constant 0 : index
    %c0_103 = arith.constant 0 : index
    %300 = vector.load %arg9[%c1_101, %c0_102, %c0_103] : memref<2x2x32xf32, #tpu.memory_space<vmem>>, vector<1x2x32xf32>
    %301 = vector.shape_cast %300 : vector<1x2x32xf32> to vector<2x32xf32>
    %302 = vector.shape_cast %299 : vector<2x32xf32> to vector<1x2x32xf32>
    tpu.vector_store %arg9[%c1_101, %c0_102, %c0_103], %302 {strides = array<i32>} : memref<2x2x32xf32, #tpu.memory_space<vmem>>, vector<1x2x32xf32>,
    return
  }
}

</mosaic_0001>

<llo_original>
// kernel: image_encoder_forward.1
$region0: #{image_encoder_forward.1}
  #allocation0 [shape = 'u32[]', space=smem, size = 0x4, offset = 0x4, fixed_abs, tag = 'smem constant byte address 0x4 - core index']
  #allocation1 [shape = 'u32[144,128]{1,0:T(1,128)}', space=vmem, size = 0x12000, scoped, tag = 'internal scratch']
  %s0 = inlined_call_operand.vmem [shape: f32[2,4,192], index: 0, kind: input, shape index: {}]
  %s1 = inlined_call_operand.vmem [shape: f32[192,32], index: 1, kind: input, shape index: {}]
  %s2 = inlined_call_operand.vmem [shape: f32[5,32], index: 2, kind: input, shape index: {}]
  %s3 = inlined_call_operand.vmem [shape: f32[4,32], index: 3, kind: input, shape index: {}]
  %s4 = inlined_call_operand.vmem [shape: f32[2,32,96], index: 4, kind: input, shape index: {}]
  %s5 = inlined_call_operand.vmem [shape: f32[2,32,32], index: 5, kind: input, shape index: {}]
  %s6 = inlined_call_operand.vmem [shape: f32[2,32,128], index: 6, kind: input, shape index: {}]
  %s7 = inlined_call_operand.vmem [shape: f32[2,128,32], index: 7, kind: input, shape index: {}]
  %s8 = inlined_call_operand.vmem [shape: f32[2,4,128], index: 8, kind: input, shape index: {}]
  %s9 = inlined_call_operand.hbm [shape: f32[2,2,32], index: 9, kind: output, shape index: {}]
  %s10 = sld [smem:[#allocation0]]
  $region46: #{image_encoder_forward.1} parent=0
    _
  %s12 = ssub.s32 1, %s10
  %s13 = scalar_select 0, %s12, %s10
  $region1: #{image_encoder_forward.1} parent=0
    #allocation2 [shape = 'u8[2048]{0}', space=vmem, size = 0x800, scoped, tag = 'output window, operand 0, single buffered']
    #allocation3 [shape = 's32[1]{0}', space=sflag, size = 0x4, scoped, tag = 'scoped memory for image_encoder_forward.1']
    %14 = vsyncpa [#allocation3], 0
    // Predicated region
    $region2: #{image_encoder_forward.1} parent=1 // pred_check
      _
    $region3: #{image_encoder_forward.1} parent=1 // pred_check_branch
      %16 = sbr.rel (0) target = $region5
    $region4: #{image_encoder_forward.1} parent=1 // pred_region
      _
    $region5: #{image_encoder_forward.1} parent=1 // pred_fallthru
      _
    // Predicated region
    $region6: #{image_encoder_forward.1} parent=1 // pred_check
      _
    $region7: #{image_encoder_forward.1} parent=1 // pred_check_branch
      %18 = sbr.rel (0) target = $region9
    $region8: #{image_encoder_forward.1} parent=1 // pred_region
      _
    $region9: #{image_encoder_forward.1} parent=1 // pred_fallthru
      _
    // Predicated region
    $region10: #{image_encoder_forward.1} parent=1 // pred_check
      _
    $region11: #{image_encoder_forward.1} parent=1 // pred_check_branch
      %20 = sbr.rel (0) target = $region13
    $region12: #{image_encoder_forward.1} parent=1 // pred_region
      _
    $region13: #{image_encoder_forward.1} parent=1 // pred_fallthru
      _
    // Predicated region
    $region14: #{image_encoder_forward.1} parent=1 // pred_check
      _
    $region15: #{image_encoder_forward.1} parent=1 // pred_check_branch
      %22 = sbr.rel (0) target = $region17
    $region16: #{image_encoder_forward.1} parent=1 // pred_region
      _
    $region17: #{image_encoder_forward.1} parent=1 // pred_fallthru
      _
    // Predicated region
    $region18: #{image_encoder_forward.1} parent=1 // pred_check
      _
    $region19: #{image_encoder_forward.1} parent=1 // pred_check_branch
      %24 = sbr.rel (0) target = $region21
    $region20: #{image_encoder_forward.1} parent=1 // pred_region
      _
    $region21: #{image_encoder_forward.1} parent=1 // pred_fallthru
      _
    // Predicated region
    $region22: #{image_encoder_forward.1} parent=1 // pred_check
      _
    $region23: #{image_encoder_forward.1} parent=1 // pred_check_branch
      %26 = sbr.rel (0) target = $region25
    $region24: #{image_encoder_forward.1} parent=1 // pred_region
      _
    $region25: #{image_encoder_forward.1} parent=1 // pred_fallthru
      _
    // Predicated region
    $region26: #{image_encoder_forward.1} parent=1 // pred_check
      _
    $region27: #{image_encoder_forward.1} parent=1 // pred_check_branch
      %28 = sbr.rel (0) target = $region29
    $region28: #{image_encoder_forward.1} parent=1 // pred_region
      _
    $region29: #{image_encoder_forward.1} parent=1 // pred_fallthru
      _
    // Predicated region
    $region30: #{image_encoder_forward.1} parent=1 // pred_check
      _
    $region31: #{image_encoder_forward.1} parent=1 // pred_check_branch
      %30 = sbr.rel (0) target = $region33
    $region32: #{image_encoder_forward.1} parent=1 // pred_region
      _
    $region33: #{image_encoder_forward.1} parent=1 // pred_fallthru
      _
    // Predicated region
    $region34: #{image_encoder_forward.1} parent=1 // pred_check
      _
    $region35: #{image_encoder_forward.1} parent=1 // pred_check_branch
      %32 = sbr.rel (0) target = $region37
    $region36: #{image_encoder_forward.1} parent=1 // pred_region
      _
    $region37: #{image_encoder_forward.1} parent=1 // pred_fallthru
      _
    %v33 = vld [vmem:[%s0] sm:$0xff]
    %v34 = vld [vmem:[%s0 + $0x8] sm:$0xff]
    %v35 = vld [vmem:[%s1] sm:$0xff]
    %v36 = vld [vmem:[%s1 + $0x8] sm:$0xff]
    %v37 = vld [vmem:[%s1 + $0x10] sm:$0xff]
    %v38 = vld [vmem:[%s1 + $0x18] sm:$0xff]
    %v39 = vld [vmem:[%s1 + $0x20] sm:$0xff]
    %v40 = vld [vmem:[%s1 + $0x28] sm:$0xff]
    %v41 = vld [vmem:[%s1 + $0x30] sm:$0xff]
    %v42 = vld [vmem:[%s1 + $0x38] sm:$0xff]
    %v43 = vld [vmem:[%s1 + $0x40] sm:$0xff]
    %v44 = vld [vmem:[%s1 + $0x48] sm:$0xff]
    %v45 = vld [vmem:[%s1 + $0x50] sm:$0xff]
    %v46 = vld [vmem:[%s1 + $0x58] sm:$0xff]
    %v47 = vld [vmem:[%s1 + $0x60] sm:$0xff]
    %v48 = vld [vmem:[%s1 + $0x68] sm:$0xff]
    %v49 = vld [vmem:[%s1 + $0x70] sm:$0xff]
    %v50 = vld [vmem:[%s1 + $0x78] sm:$0xff]
    %v51 = vld [vmem:[%s1 + $0x80] sm:$0xff]
    %v52 = vld [vmem:[%s1 + $0x88] sm:$0xff]
    %v53 = vld [vmem:[%s1 + $0x90] sm:$0xff]
    %v54 = vld [vmem:[%s1 + $0x98] sm:$0xff]
    %v55 = vld [vmem:[%s1 + $0xa0] sm:$0xff]
    %v56 = vld [vmem:[%s1 + $0xa8] sm:$0xff]
    %v57 = vld [vmem:[%s1 + $0xb0] sm:$0xff]
    %v58 = vld [vmem:[%s1 + $0xb8] sm:$0xff]
    %v59 = vld [vmem:[%s2] sm:$0x1f]
    %v61 = vcombine.high %v59, %v59
    %vm62 = vcmask 1042432
    %vm63 = vcmask 1046532
    %vm64 = vmor %vm62, %vm63
    %v65 = vrot.slane %v59, 5
    %v66 = vrot.slane %v65, 4
    %v67 = vrot.slane %v61, 5
    %v68 = vsel %vm64, %v66, %v67
    %v71 = vcombine.low %v33, %v34
    %v72 = vcombine.high %v33, %v34
    %v74 = vcombine.low %v68, %v68
    %vm76 = vcmask 523264
    %v77 = vsel %vm76, %v72, 0
    %79 = vmatprep.subr.mxu0 0.0
    %80 = vmatpush1.msra.mxu0 %v35
    %81 = vmatprep.subr.mxu0 0.0
    %82 = vmatpush1.msra.mxu0 %v36
    %83 = vmatprep.subr.mxu0 0.0
    %84 = vmatpush1.msra.mxu0 %v37
    %85 = vmatprep.subr.mxu0 0.0
    %86 = vmatpush1.msra.mxu0 %v38
    %87 = vmatprep.subr.mxu0 0.0
    %88 = vmatpush1.msra.mxu0 %v39
    %89 = vmatprep.subr.mxu0 0.0
    %90 = vmatpush1.msra.mxu0 %v40
    %91 = vmatprep.subr.mxu0 0.0
    %92 = vmatpush1.msra.mxu0 %v41
    %93 = vmatprep.subr.mxu0 0.0
    %94 = vmatpush1.msra.mxu0 %v42
    %95 = vmatprep.subr.mxu0 0.0
    %96 = vmatpush1.msra.mxu0 %v43
    %97 = vmatprep.subr.mxu0 0.0
    %98 = vmatpush1.msra.mxu0 %v44
    %99 = vmatprep.subr.mxu0 0.0
    %100 = vmatpush1.msra.mxu0 %v45
    %101 = vmatprep.subr.mxu0 0.0
    %102 = vmatpush1.msra.mxu0 %v46
    %103 = vmatprep.subr.mxu0 0.0
    %104 = vmatpush1.msra.mxu0 %v47
    %105 = vmatprep.subr.mxu0 0.0
    %106 = vmatpush1.msra.mxu0 %v48
    %107 = vmatprep.subr.mxu0 0.0
    %108 = vmatpush1.msra.mxu0 %v49
    %109 = vmatprep.subr.mxu0 0.0
    %110 = vmatpush1.msra.mxu0 %v50
    %111 = vmatprep.subr.mxu0 0.0
    %112 = vmatpush1.msra.mxu0 %v51
    %113 = vmatprep.subr.mxu0 0.0
    %114 = vmatpush1.msra.mxu0 %v52
    %115 = vmatprep.subr.mxu0 0.0
    %116 = vmatpush1.msra.mxu0 %v53
    %117 = vmatprep.subr.mxu0 0.0
    %118 = vmatpush1.msra.mxu0 %v54
    %119 = vmatprep.subr.mxu0 0.0
    %120 = vmatpush1.msra.mxu0 %v55
    %121 = vmatprep.subr.mxu0 0.0
    %122 = vmatpush1.msra.mxu0 %v56
    %123 = vmatprep.subr.mxu0 0.0
    %124 = vmatpush1.msra.mxu0 %v57
    %125 = vmatprep.subr.mxu0 0.0
    %126 = vmatpush1.msra.mxu0 %v58
    %127 = vmatprep.subr.mxu0 0.0
    %128 = vmatpush1.msra.mxu0 0.0
    %129 = vmatprep.subr.mxu0 0.0
    %130 = vmatpush1.msra.mxu0 0.0
    %131 = vmatprep.subr.mxu0 0.0
    %132 = vmatpush1.msra.mxu0 0.0
    %133 = vmatprep.subr.mxu0 0.0
    %134 = vmatpush1.msra.mxu0 0.0
    %135 = vmatprep.subr.mxu0 0.0
    %136 = vmatpush1.msra.mxu0 0.0
    %137 = vmatprep.subr.mxu0 0.0
    %138 = vmatpush1.msra.mxu0 0.0
    %139 = vmatprep.subr.mxu0 0.0
    %140 = vmatpush1.msra.mxu0 0.0
    %141 = vmatprep.subr.mxu0 0.0
    %142 = vmatpush1.msra.mxu0 0.0
    %143 = vmatprep.mubr.f32.mxu0 %v77
    %144 = vmatmul.mubr.f32.gmra.mrb[0].mxu0 %v71
    %v145 = vpop.f32.mrb[0].mxu0
    %v146 = vadd.f32 %v74, %v145
    %v147 = vpop.f32.mrb[0].mxu0
    %148 = vdwg.mxu0
    %v150 = vcombine.high %v146, %v146
    %v151 = vrot.slane %v146, 7
    %v152 = vrot.slane %v150, 7
    %vm155 = vcmask 1040384
    %v156 = vsel %vm155, %v59, %v151
    %v157 = vsel %vm155, %v59, %v152
    %v158 = vld [vmem:[%s3] sm:$0x1]
    %v159 = vld [vmem:[%s3 + $0x1] sm:$0x1]
    %v160 = vld [vmem:[%s3 + $0x2] sm:$0x1]
    %v161 = vld [vmem:[%s3 + $0x3] sm:$0x1]
    %vm162 = vcmask 258048
    %v163 = vsel %vm162, %v156, 0.0
    %164 = vadd.xlane.f32.xlu0 %v163
    %v165 = vpop.xlane.xlu0 %164
    %v166 = vsel %vm162, %v157, 0.0
    %167 = vadd.xlane.f32.xlu0 %v166
    %v168 = vpop.xlane.xlu0 %167
    %v169 = vrcp.pop 32.0
    %v170 = vmul.f32 %v165, %v169
    %v171 = vmul.f32 %v168, %v169
    %v172 = vsub.f32 %v156, %v170
    %v173 = vsub.f32 %v157, %v171
    %v174 = vmul.f32 %v172, %v172
    %v175 = vmul.f32 %v173, %v173
    %v176 = vsel %vm162, %v174, 0.0
    %177 = vadd.xlane.f32.xlu0 %v176
    %v178 = vpop.xlane.xlu0 %177
    %v179 = vsel %vm162, %v175, 0.0
    %180 = vadd.xlane.f32.xlu0 %v179
    %v181 = vpop.xlane.xlu0 %180
    %v182 = vmul.f32 %v178, %v169
    %v183 = vmul.f32 %v181, %v169
    %v184 = vadd.f32 %v182, 1e-05
    %v185 = vadd.f32 %v183, 1e-05
    %v186 = vrsqrt.pop %v184
    %v187 = vrsqrt.pop %v185
    %v188 = vmul.f32 %v172, %v186
    %v189 = vmul.f32 %v173, %v187
    %v190 = vlaneseq
    %v191 = vshrl.u32 %v190, 7
    %v192 = vsub.s32 0, %v191
    %v193 = vrot.slane %v158, %v192
    %v194 = vmul.f32 %v188, %v193
    %v195 = vmul.f32 %v189, %v193
    %v196 = vlaneseq
    %v197 = vshrl.u32 %v196, 7
    %v198 = vsub.s32 0, %v197
    %v199 = vrot.slane %v159, %v198
    %v200 = vadd.f32 %v194, %v199
    %v201 = vadd.f32 %v195, %v199
    %v202 = vld [vmem:[%s8] sm:$0xf]
    %v203 = vsel %vm162, %v200, 0.0
    %204 = vadd.xlane.f32.xlu0 %v203
    %v205 = vpop.xlane.xlu0 %204
    %v206 = vsel %vm162, %v201, 0.0
    %207 = vadd.xlane.f32.xlu0 %v206
    %v208 = vpop.xlane.xlu0 %207
    %v209 = vmul.f32 %v205, %v169
    %v210 = vmul.f32 %v208, %v169
    %v211 = vsub.f32 %v200, %v209
    %v212 = vsub.f32 %v201, %v210
    %v213 = vmul.f32 %v211, %v211
    %v214 = vmul.f32 %v212, %v212
    %v215 = vsel %vm162, %v213, 0.0
    %216 = vadd.xlane.f32.xlu0 %v215
    %v217 = vpop.xlane.xlu0 %216
    %v218 = vsel %vm162, %v214, 0.0
    %219 = vadd.xlane.f32.xlu0 %v218
    %v220 = vpop.xlane.xlu0 %219
    %v221 = vmul.f32 %v217, %v169
    %v222 = vmul.f32 %v220, %v169
    %v223 = vadd.f32 %v221, 1e-05
    %v224 = vadd.f32 %v222, 1e-05
    %v225 = vrsqrt.pop %v223
    %v226 = vrsqrt.pop %v224
    %v227 = vmul.f32 %v211, %v225
    %v228 = vmul.f32 %v212, %v226
    %v229 = vld [vmem:[%s4] sm:$0xff]
    %v230 = vld [vmem:[%s4 + $0x8] sm:$0xff]
    %v231 = vld [vmem:[%s4 + $0x10] sm:$0xff]
    %v232 = vld [vmem:[%s4 + $0x18] sm:$0xff]
    %v233 = vlaneseq
    %v234 = vshrl.u32 %v233, 7
    %v235 = vsub.s32 0, %v234
    %v236 = vrot.slane %v202, %v235
    %v239 = vcombine.high %v227, %v227
    %v241 = vunpack.c.l.s4 1966171168
    %v242 = vunpack.c.0.s8 %v241
    %v243 = vlaneseq
    %v244 = vshrl.u32 %v243, 7
    %v245 = vsub.s32 %v242, %v244
    %v246 = vrot.slane %v227, %v245
    %v248 = vunpack.c.l.s4 1966171168
    %v249 = vunpack.c.0.s8 %v248
    %v250 = vlaneseq
    %v251 = vshrl.u32 %v250, 7
    %v252 = vsub.s32 %v249, %v251
    %v253 = vrot.slane %v239, %v252
    %v254 = vcombine.high %v246, %v246
    %v256 = vunpack.c.l.s4 1966171168
    %v257 = vunpack.c.0.s8 %v256
    %v258 = vlaneseq
    %v259 = vshrl.u32 %v258, 7
    %v260 = vsub.s32 %v257, %v259
    %v261 = vrot.slane %v246, %v260
    %v263 = vunpack.c.l.s4 1966171168
    %v264 = vunpack.c.0.s8 %v263
    %v265 = vlaneseq
    %v266 = vshrl.u32 %v265, 7
    %v267 = vsub.s32 %v264, %v266
    %v268 = vrot.slane %v253, %v267
    %v270 = vunpack.c.l.s4 1966171168
    %v271 = vunpack.c.0.s8 %v270
    %v272 = vlaneseq
    %v273 = vshrl.u32 %v272, 7
    %v274 = vsub.s32 %v271, %v273
    %v275 = vrot.slane %v254, %v274
    %v276 = vcombine.high %v261, %v261
    %v277 = vcombine.high %v275, %v275
    %v278 = vcombine.high %v228, %v228
    %v280 = vunpack.c.l.s4 1966171168
    %v281 = vunpack.c.0.s8 %v280
    %v282 = vlaneseq
    %v283 = vshrl.u32 %v282, 7
    %v284 = vsub.s32 %v281, %v283
    %v285 = vrot.slane %v228, %v284
    %v287 = vunpack.c.l.s4 1966171168
    %v288 = vunpack.c.0.s8 %v287
    %v289 = vlaneseq
    %v290 = vshrl.u32 %v289, 7
    %v291 = vsub.s32 %v288, %v290
    %v292 = vrot.slane %v278, %v291
    %v293 = vcombine.high %v285, %v285
    %v295 = vunpack.c.l.s4 1966171168
    %v296 = vunpack.c.0.s8 %v295
    %v297 = vlaneseq
    %v298 = vshrl.u32 %v297, 7
    %v299 = vsub.s32 %v296, %v298
    %v300 = vrot.slane %v285, %v299
    %v302 = vunpack.c.l.s4 1966171168
    %v303 = vunpack.c.0.s8 %v302
    %v304 = vlaneseq
    %v305 = vshrl.u32 %v304, 7
    %v306 = vsub.s32 %v303, %v305
    %v307 = vrot.slane %v292, %v306
    %v309 = vunpack.c.l.s4 1966171168
    %v310 = vunpack.c.0.s8 %v309
    %v311 = vlaneseq
    %v312 = vshrl.u32 %v311, 7
    %v313 = vsub.s32 %v310, %v312
    %v314 = vrot.slane %v293, %v313
    %v315 = vcombine.high %v300, %v300
    %v316 = vcombine.high %v314, %v314
    %v318 = vcombine.high %v236, %v236
    %v320 = vunpack.c.l.s4 1966171168
    %v321 = vunpack.c.0.s8 %v320
    %v322 = vlaneseq
    %v323 = vshrl.u32 %v322, 7
    %v324 = vsub.s32 %v321, %v323
    %v325 = vrot.slane %v236, %v324
    %v327 = vunpack.c.l.s4 1966171168
    %v328 = vunpack.c.0.s8 %v327
    %v329 = vlaneseq
    %v330 = vshrl.u32 %v329, 7
    %v331 = vsub.s32 %v328, %v330
    %v332 = vrot.slane %v318, %v331
    %v333 = vcombine.high %v325, %v325
    %v335 = vunpack.c.l.s4 1966171168
    %v336 = vunpack.c.0.s8 %v335
    %v337 = vlaneseq
    %v338 = vshrl.u32 %v337, 7
    %v339 = vsub.s32 %v336, %v338
    %v340 = vrot.slane %v325, %v339
    %v342 = vunpack.c.l.s4 1966171168
    %v343 = vunpack.c.0.s8 %v342
    %v344 = vlaneseq
    %v345 = vshrl.u32 %v344, 7
    %v346 = vsub.s32 %v343, %v345
    %v347 = vrot.slane %v332, %v346
    %v349 = vunpack.c.l.s4 1966171168
    %v350 = vunpack.c.0.s8 %v349
    %v351 = vlaneseq
    %v352 = vshrl.u32 %v351, 7
    %v353 = vsub.s32 %v350, %v352
    %v354 = vrot.slane %v333, %v353
    %v355 = vcombine.high %v340, %v340
    %v356 = vcombine.high %v354, %v354
    %v357 = vcombine.low %v261, %v275
    %v358 = vcombine.low %v276, %v277
    %v359 = vcombine.low %v268, %v300
    %v360 = vcombine.low %v314, %v315
    %v362 = vunpack.c.l.s4 1966171168
    %v363 = vunpack.c.0.s8 %v362
    %v364 = vlaneseq
    %v365 = vshrl.u32 %v364, 7
    %v366 = vsub.s32 %v363, %v365
    %v367 = vrot.slane %v357, %v366
    %v369 = vunpack.c.l.s4 1966171168
    %v370 = vunpack.c.0.s8 %v369
    %v371 = vlaneseq
    %v372 = vshrl.u32 %v371, 7
    %v373 = vsub.s32 %v370, %v372
    %v374 = vrot.slane %v358, %v373
    %v376 = vunpack.c.l.s4 1966171168
    %v377 = vunpack.c.0.s8 %v376
    %v378 = vlaneseq
    %v379 = vshrl.u32 %v378, 7
    %v380 = vsub.s32 %v377, %v379
    %v381 = vrot.slane %v359, %v380
    %v383 = vunpack.c.l.s4 1966171168
    %v384 = vunpack.c.0.s8 %v383
    %v385 = vlaneseq
    %v386 = vshrl.u32 %v385, 7
    %v387 = vsub.s32 %v384, %v386
    %v388 = vrot.slane %v360, %v387
    %v389 = vcombine.low %v367, %v374
    %v390 = vcombine.low %v381, %v388
    %v392 = vunpack.c.l.s4 1966171168
    %v393 = vunpack.c.0.s8 %v392
    %v394 = vlaneseq
    %v395 = vshrl.u32 %v394, 7
    %v396 = vsub.s32 %v393, %v395
    %v397 = vrot.slane %v389, %v396
    %v399 = vunpack.c.l.s4 1966171168
    %v400 = vunpack.c.0.s8 %v399
    %v401 = vlaneseq
    %v402 = vshrl.u32 %v401, 7
    %v403 = vsub.s32 %v400, %v402
    %v404 = vrot.slane %v390, %v403
    %v405 = vcombine.low %v397, %v404
    %v406 = vcombine.low %v316, %v307
    %v408 = vunpack.c.l.s4 1966171168
    %v409 = vunpack.c.0.s8 %v408
    %v410 = vlaneseq
    %v411 = vshrl.u32 %v410, 7
    %v412 = vsub.s32 %v409, %v411
    %v413 = vrot.slane %v406, %v412
    %v415 = vunpack.c.l.s4 1966171168
    %v416 = vunpack.c.0.s8 %v415
    %v417 = vlaneseq
    %v418 = vshrl.u32 %v417, 7
    %v419 = vsub.s32 %v416, %v418
    %v420 = vrot.slane %v413, %v419
    %v421 = vcombine.low %v340, %v354
    %v422 = vcombine.low %v355, %v356
    %v423 = vcombine.low %v347, %v340
    %v424 = vcombine.low %v354, %v355
    %v426 = vunpack.c.l.s4 1966171168
    %v427 = vunpack.c.0.s8 %v426
    %v428 = vlaneseq
    %v429 = vshrl.u32 %v428, 7
    %v430 = vsub.s32 %v427, %v429
    %v431 = vrot.slane %v421, %v430
    %v433 = vunpack.c.l.s4 1966171168
    %v434 = vunpack.c.0.s8 %v433
    %v435 = vlaneseq
    %v436 = vshrl.u32 %v435, 7
    %v437 = vsub.s32 %v434, %v436
    %v438 = vrot.slane %v422, %v437
    %v440 = vunpack.c.l.s4 1966171168
    %v441 = vunpack.c.0.s8 %v440
    %v442 = vlaneseq
    %v443 = vshrl.u32 %v442, 7
    %v444 = vsub.s32 %v441, %v443
    %v445 = vrot.slane %v423, %v444
    %v447 = vunpack.c.l.s4 1966171168
    %v448 = vunpack.c.0.s8 %v447
    %v449 = vlaneseq
    %v450 = vshrl.u32 %v449, 7
    %v451 = vsub.s32 %v448, %v450
    %v452 = vrot.slane %v424, %v451
    %v453 = vcombine.low %v431, %v438
    %v454 = vcombine.low %v445, %v452
    %v456 = vunpack.c.l.s4 1966171168
    %v457 = vunpack.c.0.s8 %v456
    %v458 = vlaneseq
    %v459 = vshrl.u32 %v458, 7
    %v460 = vsub.s32 %v457, %v459
    %v461 = vrot.slane %v453, %v460
    %v463 = vunpack.c.l.s4 1966171168
    %v464 = vunpack.c.0.s8 %v463
    %v465 = vlaneseq
    %v466 = vshrl.u32 %v465, 7
    %v467 = vsub.s32 %v464, %v466
    %v468 = vrot.slane %v454, %v467
    %v469 = vcombine.low %v461, %v468
    %v470 = vcombine.low %v356, %v347
    %v472 = vunpack.c.l.s4 1966171168
    %v473 = vunpack.c.0.s8 %v472
    %v474 = vlaneseq
    %v475 = vshrl.u32 %v474, 7
    %v476 = vsub.s32 %v473, %v475
    %v477 = vrot.slane %v470, %v476
    %v479 = vunpack.c.l.s4 1966171168
    %v480 = vunpack.c.0.s8 %v479
    %v481 = vlaneseq
    %v482 = vshrl.u32 %v481, 7
    %v483 = vsub.s32 %v480, %v482
    %v484 = vrot.slane %v477, %v483
    %vm487 = vcmask 261120
    %v488 = vsel %vm487, %v405, 0
    %v490 = vsel %vm487, %v420, 0
    %492 = vmatprep.subr.mxu0 0.0
    %493 = vmatpush1.msra.mxu0 %v229
    %494 = vmatprep.subr.mxu0 0.0
    %495 = vmatpush1.msra.mxu0 %v230
    %496 = vmatprep.subr.mxu0 0.0
    %497 = vmatpush1.msra.mxu0 %v231
    %498 = vmatprep.subr.mxu0 0.0
    %499 = vmatpush1.msra.mxu0 %v232
    %500 = vmatprep.subr.mxu0 0.0
    %501 = vmatpush1.msra.mxu0 0.0
    %502 = vmatprep.subr.mxu0 0.0
    %503 = vmatpush1.msra.mxu0 0.0
    %504 = vmatprep.subr.mxu0 0.0
    %505 = vmatpush1.msra.mxu0 0.0
    %506 = vmatprep.subr.mxu0 0.0
    %507 = vmatpush1.msra.mxu0 0.0
    %508 = vmatprep.subr.mxu0 0.0
    %509 = vmatpush1.msra.mxu0 0.0
    %510 = vmatprep.subr.mxu0 0.0
    %511 = vmatpush1.msra.mxu0 0.0
    %512 = vmatprep.subr.mxu0 0.0
    %513 = vmatpush1.msra.mxu0 0.0
    %514 = vmatprep.subr.mxu0 0.0
    %515 = vmatpush1.msra.mxu0 0.0
    %516 = vmatprep.subr.mxu0 0.0
    %517 = vmatpush1.msra.mxu0 0.0
    %518 = vmatprep.subr.mxu0 0.0
    %519 = vmatpush1.msra.mxu0 0.0
    %520 = vmatprep.subr.mxu0 0.0
    %521 = vmatpush1.msra.mxu0 0.0
    %522 = vmatprep.subr.mxu0 0.0
    %523 = vmatpush1.msra.mxu0 0.0
    %524 = vmatprep.subr.mxu0 0.0
    %525 = vmatpush1.msra.mxu0 0.0
    %526 = vmatprep.subr.mxu0 0.0
    %527 = vmatpush1.msra.mxu0 0.0
    %528 = vmatprep.subr.mxu0 0.0
    %529 = vmatpush1.msra.mxu0 0.0
    %530 = vmatprep.subr.mxu0 0.0
    %531 = vmatpush1.msra.mxu0 0.0
    %532 = vmatprep.subr.mxu0 0.0
    %533 = vmatpush1.msra.mxu0 0.0
    %534 = vmatprep.subr.mxu0 0.0
    %535 = vmatpush1.msra.mxu0 0.0
    %536 = vmatprep.subr.mxu0 0.0
    %537 = vmatpush1.msra.mxu0 0.0
    %538 = vmatprep.subr.mxu0 0.0
    %539 = vmatpush1.msra.mxu0 0.0
    %540 = vmatprep.subr.mxu0 0.0
    %541 = vmatpush1.msra.mxu0 0.0
    %542 = vmatprep.subr.mxu0 0.0
    %543 = vmatpush1.msra.mxu0 0.0
    %544 = vmatprep.subr.mxu0 0.0
    %545 = vmatpush1.msra.mxu0 0.0
    %546 = vmatprep.subr.mxu0 0.0
    %547 = vmatpush1.msra.mxu0 0.0
    %548 = vmatprep.subr.mxu0 0.0
    %549 = vmatpush1.msra.mxu0 0.0
    %550 = vmatprep.subr.mxu0 0.0
    %551 = vmatpush1.msra.mxu0 0.0
    %552 = vmatprep.subr.mxu0 0.0
    %553 = vmatpush1.msra.mxu0 0.0
    %554 = vmatprep.subr.mxu0 0.0
    %555 = vmatpush1.msra.mxu0 0.0
    %556 = vmatprep.mubr.f32.mxu0 0.0
    %557 = vmatmul.mubr.f32.gmra.mrb[0].mxu0 %v488
    %v558 = vpop.f32.mrb[0].mxu0
    %v559 = vadd.f32 %v469, %v558
    %v560 = vpop.f32.mrb[0].mxu0
    %561 = vmatprep.mubr.f32.mxu0 0.0
    %562 = vmatmul.mubr.f32.gmra.mrb[0].mxu0 %v490
    %v563 = vpop.f32.mrb[0].mxu0
    %v564 = vadd.f32 %v484, %v563
    %v565 = vpop.f32.mrb[0].mxu0
    %566 = vdwg.mxu0
    %v569 = vcombine.high %v559, %v559
    %v571 = vunpack.c.l.s4 1966171168
    %v572 = vunpack.c.0.s8 %v571
    %v573 = vlaneseq
    %v574 = vshrl.u32 %v573, 7
    %v575 = vsub.s32 %v572, %v574
    %v576 = vrot.slane %v559, %v575
    %v578 = vunpack.c.l.s4 1966171168
    %v579 = vunpack.c.0.s8 %v578
    %v580 = vlaneseq
    %v581 = vshrl.u32 %v580, 7
    %v582 = vsub.s32 %v579, %v581
    %v583 = vrot.slane %v569, %v582
    %v584 = vcombine.high %v576, %v576
    %v585 = vcombine.high %v583, %v583
    %v587 = vunpack.c.l.s4 1966171168
    %v588 = vunpack.c.0.s8 %v587
    %v589 = vlaneseq
    %v590 = vshrl.u32 %v589, 7
    %v591 = vsub.s32 %v588, %v590
    %v592 = vrot.slane %v576, %v591
    %v594 = vunpack.c.l.s4 1966171168
    %v595 = vunpack.c.0.s8 %v594
    %v596 = vlaneseq
    %v597 = vshrl.u32 %v596, 7
    %v598 = vsub.s32 %v595, %v597
    %v599 = vrot.slane %v583, %v598
    %v601 = vunpack.c.l.s4 1966171168
    %v602 = vunpack.c.0.s8 %v601
    %v603 = vlaneseq
    %v604 = vshrl.u32 %v603, 7
    %v605 = vsub.s32 %v602, %v604
    %v606 = vrot.slane %v584, %v605
    %v608 = vunpack.c.l.s4 1966171168
    %v609 = vunpack.c.0.s8 %v608
    %v610 = vlaneseq
    %v611 = vshrl.u32 %v610, 7
    %v612 = vsub.s32 %v609, %v611
    %v613 = vrot.slane %v585, %v612
    %v614 = vcombine.high %v592, %v592
    %v615 = vcombine.high %v599, %v599
    %v616 = vcombine.high %v606, %v606
    %v617 = vcombine.high %v613, %v613
    %v619 = vunpack.c.l.s4 1966171168
    %v620 = vunpack.c.0.s8 %v619
    %v621 = vlaneseq
    %v622 = vshrl.u32 %v621, 7
    %v623 = vsub.s32 %v620, %v622
    %v624 = vrot.slane %v564, %v623
    %v625 = vcombine.high %v624, %v624
    %v627 = vunpack.c.l.s4 1966171168
    %v628 = vunpack.c.0.s8 %v627
    %v629 = vlaneseq
    %v630 = vshrl.u32 %v629, 7
    %v631 = vsub.s32 %v628, %v630
    %v632 = vrot.slane %v624, %v631
    %v634 = vunpack.c.l.s4 1966171168
    %v635 = vunpack.c.0.s8 %v634
    %v636 = vlaneseq
    %v637 = vshrl.u32 %v636, 7
    %v638 = vsub.s32 %v635, %v637
    %v639 = vrot.slane %v625, %v638
    %650 = vrot.lane.b32.xlu0 %v592, 112
    %v651 = vpop.permute.xlu0 %650
    %652 = vrot.lane.b32.xlu0 %v606, 112
    %v653 = vpop.permute.xlu0 %652
    %654 = vrot.lane.b32.xlu0 %v614, 112
    %v655 = vpop.permute.xlu0 %654
    %656 = vrot.lane.b32.xlu0 %v616, 112
    %v657 = vpop.permute.xlu0 %656
    %658 = vrot.lane.b32.xlu0 %v599, 112
    %v659 = vpop.permute.xlu0 %658
    %660 = vrot.lane.b32.xlu0 %v613, 112
    %v661 = vpop.permute.xlu0 %660
    %662 = vrot.lane.b32.xlu0 %v615, 112
    %v663 = vpop.permute.xlu0 %662
    %664 = vrot.lane.b32.xlu0 %v617, 112
    %v665 = vpop.permute.xlu0 %664
    %666 = vrot.lane.b32.xlu0 %v632, 112
    %v667 = vpop.permute.xlu0 %666
    %668 = vrot.lane.b32.xlu0 %v639, 112
    %v669 = vpop.permute.xlu0 %668
    %v680 = vmul.f32 %v592, 0.25
    %v681 = vmul.f32 %v606, 0.25
    %v682 = vmul.f32 %v614, 0.25
    %v683 = vmul.f32 %v616, 0.25
    %v684 = vmul.f32 %v599, 0.25
    %v685 = vmul.f32 %v613, 0.25
    %v686 = vmul.f32 %v615, 0.25
    %v687 = vmul.f32 %v617, 0.25
    %v688 = vmul.f32 %v632, 0.25
    %v689 = vmul.f32 %v639, 0.25
    %v690 = vmul.f32 %v651, 0.25
    %v691 = vmul.f32 %v653, 0.25
    %v692 = vmul.f32 %v655, 0.25
    %v693 = vmul.f32 %v657, 0.25
    %v694 = vmul.f32 %v659, 0.25
    %v695 = vmul.f32 %v661, 0.25
    %v696 = vmul.f32 %v663, 0.25
    %v697 = vmul.f32 %v665, 0.25
    %v698 = vmul.f32 %v667, 0.25
    %v699 = vmul.f32 %v669, 0.25
    %v705 = vcombine.low %v680, %v681
    %v706 = vcombine.low %v682, %v683
    %v708 = vunpack.c.l.s4 1966171168
    %v709 = vunpack.c.0.s8 %v708
    %v710 = vlaneseq
    %v711 = vshrl.u32 %v710, 7
    %v712 = vsub.s32 %v709, %v711
    %v713 = vrot.slane %v705, %v712
    %v715 = vunpack.c.l.s4 1966171168
    %v716 = vunpack.c.0.s8 %v715
    %v717 = vlaneseq
    %v718 = vshrl.u32 %v717, 7
    %v719 = vsub.s32 %v716, %v718
    %v720 = vrot.slane %v706, %v719
    %v722 = vunpack.c.l.s4 1966171168
    %v723 = vunpack.c.0.s8 %v722
    %v724 = vlaneseq
    %v725 = vshrl.u32 %v724, 7
    %v726 = vsub.s32 %v723, %v725
    %v727 = vrot.slane %v684, %v726
    %v728 = vcombine.low %v713, %v720
    %v730 = vunpack.c.l.s4 1966171168
    %v731 = vunpack.c.0.s8 %v730
    %v732 = vlaneseq
    %v733 = vshrl.u32 %v732, 7
    %v734 = vsub.s32 %v731, %v733
    %v735 = vrot.slane %v728, %v734
    %v737 = vunpack.c.l.s4 1966171168
    %v738 = vunpack.c.0.s8 %v737
    %v739 = vlaneseq
    %v740 = vshrl.u32 %v739, 7
    %v741 = vsub.s32 %v738, %v740
    %v742 = vrot.slane %v727, %v741
    %v743 = vcombine.low %v735, %v742
    %v744 = vcombine.low %v592, %v606
    %v745 = vcombine.low %v614, %v616
    %v747 = vunpack.c.l.s4 1966171168
    %v748 = vunpack.c.0.s8 %v747
    %v749 = vlaneseq
    %v750 = vshrl.u32 %v749, 7
    %v751 = vsub.s32 %v748, %v750
    %v752 = vrot.slane %v744, %v751
    %v754 = vunpack.c.l.s4 1966171168
    %v755 = vunpack.c.0.s8 %v754
    %v756 = vlaneseq
    %v757 = vshrl.u32 %v756, 7
    %v758 = vsub.s32 %v755, %v757
    %v759 = vrot.slane %v745, %v758
    %v761 = vunpack.c.l.s4 1966171168
    %v762 = vunpack.c.0.s8 %v761
    %v763 = vlaneseq
    %v764 = vshrl.u32 %v763, 7
    %v765 = vsub.s32 %v762, %v764
    %v766 = vrot.slane %v599, %v765
    %v767 = vcombine.low %v752, %v759
    %v769 = vunpack.c.l.s4 1966171168
    %v770 = vunpack.c.0.s8 %v769
    %v771 = vlaneseq
    %v772 = vshrl.u32 %v771, 7
    %v773 = vsub.s32 %v770, %v772
    %v774 = vrot.slane %v767, %v773
    %v776 = vunpack.c.l.s4 1966171168
    %v777 = vunpack.c.0.s8 %v776
    %v778 = vlaneseq
    %v779 = vshrl.u32 %v778, 7
    %v780 = vsub.s32 %v777, %v779
    %v781 = vrot.slane %v766, %v780
    %v782 = vcombine.low %v774, %v781
    %783 = vrot.lane.b32.xlu0 %v782, 96
    %v784 = vpop.permute.xlu0 %783
    %vm785 = vcmask 130048
    %v786 = vsel %vm785, %v743, 0
    %v788 = vsel %vm785, %v784, 0
    %790 = vmatprep.subr.mxu0 0.0
    %791 = vmatpush1.xpose.msra.mxu0 %v788
    %792 = vmatprep.subr.mxu0 0.0
    %793 = vmatpush1.xpose.msra.mxu0 0.0
    %794 = vmatprep.subr.mxu0 0.0
    %795 = vmatpush1.xpose.msra.mxu0 0.0
    %796 = vmatprep.subr.mxu0 0.0
    %797 = vmatpush1.xpose.msra.mxu0 0.0
    %798 = vmatprep.subr.mxu0 0.0
    %799 = vmatpush1.xpose.msra.mxu0 0.0
    %800 = vmatprep.subr.mxu0 0.0
    %801 = vmatpush1.xpose.msra.mxu0 0.0
    %802 = vmatprep.subr.mxu0 0.0
    %803 = vmatpush1.xpose.msra.mxu0 0.0
    %804 = vmatprep.subr.mxu0 0.0
    %805 = vmatpush1.xpose.msra.mxu0 0.0
    %806 = vmatprep.subr.mxu0 0.0
    %807 = vmatpush1.xpose.msra.mxu0 0.0
    %808 = vmatprep.subr.mxu0 0.0
    %809 = vmatpush1.xpose.msra.mxu0 0.0
    %810 = vmatprep.subr.mxu0 0.0
    %811 = vmatpush1.xpose.msra.mxu0 0.0
    %812 = vmatprep.subr.mxu0 0.0
    %813 = vmatpush1.xpose.msra.mxu0 0.0
    %814 = vmatprep.subr.mxu0 0.0
    %815 = vmatpush1.xpose.msra.mxu0 0.0
    %816 = vmatprep.subr.mxu0 0.0
    %817 = vmatpush1.xpose.msra.mxu0 0.0
    %818 = vmatprep.subr.mxu0 0.0
    %819 = vmatpush1.xpose.msra.mxu0 0.0
    %820 = vmatprep.subr.mxu0 0.0
    %821 = vmatpush1.xpose.msra.mxu0 0.0
    %822 = vmatprep.subr.mxu0 0.0
    %823 = vmatpush1.xpose.msra.mxu0 0.0
    %824 = vmatprep.subr.mxu0 0.0
    %825 = vmatpush1.xpose.msra.mxu0 0.0
    %826 = vmatprep.subr.mxu0 0.0
    %827 = vmatpush1.xpose.msra.mxu0 0.0
    %828 = vmatprep.subr.mxu0 0.0
    %829 = vmatpush1.xpose.msra.mxu0 0.0
    %830 = vmatprep.subr.mxu0 0.0
    %831 = vmatpush1.xpose.msra.mxu0 0.0
    %832 = vmatprep.subr.mxu0 0.0
    %833 = vmatpush1.xpose.msra.mxu0 0.0
    %834 = vmatprep.subr.mxu0 0.0
    %835 = vmatpush1.xpose.msra.mxu0 0.0
    %836 = vmatprep.subr.mxu0 0.0
    %837 = vmatpush1.xpose.msra.mxu0 0.0
    %838 = vmatprep.subr.mxu0 0.0
    %839 = vmatpush1.xpose.msra.mxu0 0.0
    %840 = vmatprep.subr.mxu0 0.0
    %841 = vmatpush1.xpose.msra.mxu0 0.0
    %842 = vmatprep.subr.mxu0 0.0
    %843 = vmatpush1.xpose.msra.mxu0 0.0
    %844 = vmatprep.subr.mxu0 0.0
    %845 = vmatpush1.xpose.msra.mxu0 0.0
    %846 = vmatprep.subr.mxu0 0.0
    %847 = vmatpush1.xpose.msra.mxu0 0.0
    %848 = vmatprep.subr.mxu0 0.0
    %849 = vmatpush1.xpose.msra.mxu0 0.0
    %850 = vmatprep.subr.mxu0 0.0
    %851 = vmatpush1.xpose.msra.mxu0 0.0
    %852 = vmatprep.subr.mxu0 0.0
    %853 = vmatpush1.xpose.msra.mxu0 0.0
    %854 = vmatprep.mubr.f32.mxu0 0.0
    %855 = vmatmul.mubr.f32.gmra.mrb[0].mxu0 %v786
    %v856 = vpop.f32.mrb[0].mxu0
    %v857 = vadd.f32 0.0, %v856
    %v858 = vpop.f32.mrb[0].mxu0
    %859 = vdwg.mxu0
    %v865 = vcombine.low %v685, %v686
    %v866 = vcombine.low %v687, %v688
    %v868 = vunpack.c.l.s4 1966171168
    %v869 = vunpack.c.0.s8 %v868
    %v870 = vlaneseq
    %v871 = vshrl.u32 %v870, 7
    %v872 = vsub.s32 %v869, %v871
    %v873 = vrot.slane %v865, %v872
    %v875 = vunpack.c.l.s4 1966171168
    %v876 = vunpack.c.0.s8 %v875
    %v877 = vlaneseq
    %v878 = vshrl.u32 %v877, 7
    %v879 = vsub.s32 %v876, %v878
    %v880 = vrot.slane %v866, %v879
    %v882 = vunpack.c.l.s4 1966171168
    %v883 = vunpack.c.0.s8 %v882
    %v884 = vlaneseq
    %v885 = vshrl.u32 %v884, 7
    %v886 = vsub.s32 %v883, %v885
    %v887 = vrot.slane %v689, %v886
    %v888 = vcombine.low %v873, %v880
    %v890 = vunpack.c.l.s4 1966171168
    %v891 = vunpack.c.0.s8 %v890
    %v892 = vlaneseq
    %v893 = vshrl.u32 %v892, 7
    %v894 = vsub.s32 %v891, %v893
    %v895 = vrot.slane %v888, %v894
    %v897 = vunpack.c.l.s4 1966171168
    %v898 = vunpack.c.0.s8 %v897
    %v899 = vlaneseq
    %v900 = vshrl.u32 %v899, 7
    %v901 = vsub.s32 %v898, %v900
    %v902 = vrot.slane %v887, %v901
    %v903 = vcombine.low %v895, %v902
    %v904 = vcombine.low %v613, %v615
    %v905 = vcombine.low %v617, %v632
    %v907 = vunpack.c.l.s4 1966171168
    %v908 = vunpack.c.0.s8 %v907
    %v909 = vlaneseq
    %v910 = vshrl.u32 %v909, 7
    %v911 = vsub.s32 %v908, %v910
    %v912 = vrot.slane %v904, %v911
    %v914 = vunpack.c.l.s4 1966171168
    %v915 = vunpack.c.0.s8 %v914
    %v916 = vlaneseq
    %v917 = vshrl.u32 %v916, 7
    %v918 = vsub.s32 %v915, %v917
    %v919 = vrot.slane %v905, %v918
    %v921 = vunpack.c.l.s4 1966171168
    %v922 = vunpack.c.0.s8 %v921
    %v923 = vlaneseq
    %v924 = vshrl.u32 %v923, 7
    %v925 = vsub.s32 %v922, %v924
    %v926 = vrot.slane %v639, %v925
    %v927 = vcombine.low %v912, %v919
    %v929 = vunpack.c.l.s4 1966171168
    %v930 = vunpack.c.0.s8 %v929
    %v931 = vlaneseq
    %v932 = vshrl.u32 %v931, 7
    %v933 = vsub.s32 %v930, %v932
    %v934 = vrot.slane %v927, %v933
    %v936 = vunpack.c.l.s4 1966171168
    %v937 = vunpack.c.0.s8 %v936
    %v938 = vlaneseq
    %v939 = vshrl.u32 %v938, 7
    %v940 = vsub.s32 %v937, %v939
    %v941 = vrot.slane %v926, %v940
    %v942 = vcombine.low %v934, %v941
    %943 = vrot.lane.b32.xlu0 %v942, 96
    %v944 = vpop.permute.xlu0 %943
    %v945 = vsel %vm785, %v903, 0
    %v947 = vsel %vm785, %v944, 0
    %949 = vmatprep.subr.mxu0 0.0
    %950 = vmatpush1.xpose.msra.mxu0 %v947
    %951 = vmatprep.subr.mxu0 0.0
    %952 = vmatpush1.xpose.msra.mxu0 0.0
    %953 = vmatprep.subr.mxu0 0.0
    %954 = vmatpush1.xpose.msra.mxu0 0.0
    %955 = vmatprep.subr.mxu0 0.0
    %956 = vmatpush1.xpose.msra.mxu0 0.0
    %957 = vmatprep.subr.mxu0 0.0
    %958 = vmatpush1.xpose.msra.mxu0 0.0
    %959 = vmatprep.subr.mxu0 0.0
    %960 = vmatpush1.xpose.msra.mxu0 0.0
    %961 = vmatprep.subr.mxu0 0.0
    %962 = vmatpush1.xpose.msra.mxu0 0.0
    %963 = vmatprep.subr.mxu0 0.0
    %964 = vmatpush1.xpose.msra.mxu0 0.0
    %965 = vmatprep.subr.mxu0 0.0
    %966 = vmatpush1.xpose.msra.mxu0 0.0
    %967 = vmatprep.subr.mxu0 0.0
    %968 = vmatpush1.xpose.msra.mxu0 0.0
    %969 = vmatprep.subr.mxu0 0.0
    %970 = vmatpush1.xpose.msra.mxu0 0.0
    %971 = vmatprep.subr.mxu0 0.0
    %972 = vmatpush1.xpose.msra.mxu0 0.0
    %973 = vmatprep.subr.mxu0 0.0
    %974 = vmatpush1.xpose.msra.mxu0 0.0
    %975 = vmatprep.subr.mxu0 0.0
    %976 = vmatpush1.xpose.msra.mxu0 0.0
    %977 = vmatprep.subr.mxu0 0.0
    %978 = vmatpush1.xpose.msra.mxu0 0.0
    %979 = vmatprep.subr.mxu0 0.0
    %980 = vmatpush1.xpose.msra.mxu0 0.0
    %981 = vmatprep.subr.mxu0 0.0
    %982 = vmatpush1.xpose.msra.mxu0 0.0
    %983 = vmatprep.subr.mxu0 0.0
    %984 = vmatpush1.xpose.msra.mxu0 0.0
    %985 = vmatprep.subr.mxu0 0.0
    %986 = vmatpush1.xpose.msra.mxu0 0.0
    %987 = vmatprep.subr.mxu0 0.0
    %988 = vmatpush1.xpose.msra.mxu0 0.0
    %989 = vmatprep.subr.mxu0 0.0
    %990 = vmatpush1.xpose.msra.mxu0 0.0
    %991 = vmatprep.subr.mxu0 0.0
    %992 = vmatpush1.xpose.msra.mxu0 0.0
    %993 = vmatprep.subr.mxu0 0.0
    %994 = vmatpush1.xpose.msra.mxu0 0.0
    %995 = vmatprep.subr.mxu0 0.0
    %996 = vmatpush1.xpose.msra.mxu0 0.0
    %997 = vmatprep.subr.mxu0 0.0
    %998 = vmatpush1.xpose.msra.mxu0 0.0
    %999 = vmatprep.subr.mxu0 0.0
    %1000 = vmatpush1.xpose.msra.mxu0 0.0
    %1001 = vmatprep.subr.mxu0 0.0
    %1002 = vmatpush1.xpose.msra.mxu0 0.0
    %1003 = vmatprep.subr.mxu0 0.0
    %1004 = vmatpush1.xpose.msra.mxu0 0.0
    %1005 = vmatprep.subr.mxu0 0.0
    %1006 = vmatpush1.xpose.msra.mxu0 0.0
    %1007 = vmatprep.subr.mxu0 0.0
    %1008 = vmatpush1.xpose.msra.mxu0 0.0
    %1009 = vmatprep.subr.mxu0 0.0
    %1010 = vmatpush1.xpose.msra.mxu0 0.0
    %1011 = vmatprep.subr.mxu0 0.0
    %1012 = vmatpush1.xpose.msra.mxu0 0.0
    %1013 = vmatprep.mubr.f32.mxu0 0.0
    %1014 = vmatmul.mubr.f32.gmra.mrb[0].mxu0 %v945
    %v1015 = vpop.f32.mrb[0].mxu0
    %v1016 = vadd.f32 0.0, %v1015
    %v1017 = vpop.f32.mrb[0].mxu0
    %1018 = vdwg.mxu0
    %v1024 = vcombine.low %v690, %v691
    %v1025 = vcombine.low %v692, %v693
    %v1027 = vunpack.c.l.s4 1966171168
    %v1028 = vunpack.c.0.s8 %v1027
    %v1029 = vlaneseq
    %v1030 = vshrl.u32 %v1029, 7
    %v1031 = vsub.s32 %v1028, %v1030
    %v1032 = vrot.slane %v1024, %v1031
    %v1034 = vunpack.c.l.s4 1966171168
    %v1035 = vunpack.c.0.s8 %v1034
    %v1036 = vlaneseq
    %v1037 = vshrl.u32 %v1036, 7
    %v1038 = vsub.s32 %v1035, %v1037
    %v1039 = vrot.slane %v1025, %v1038
    %v1041 = vunpack.c.l.s4 1966171168
    %v1042 = vunpack.c.0.s8 %v1041
    %v1043 = vlaneseq
    %v1044 = vshrl.u32 %v1043, 7
    %v1045 = vsub.s32 %v1042, %v1044
    %v1046 = vrot.slane %v694, %v1045
    %v1047 = vcombine.low %v1032, %v1039
    %v1049 = vunpack.c.l.s4 1966171168
    %v1050 = vunpack.c.0.s8 %v1049
    %v1051 = vlaneseq
    %v1052 = vshrl.u32 %v1051, 7
    %v1053 = vsub.s32 %v1050, %v1052
    %v1054 = vrot.slane %v1047, %v1053
    %v1056 = vunpack.c.l.s4 1966171168
    %v1057 = vunpack.c.0.s8 %v1056
    %v1058 = vlaneseq
    %v1059 = vshrl.u32 %v1058, 7
    %v1060 = vsub.s32 %v1057, %v1059
    %v1061 = vrot.slane %v1046, %v1060
    %v1062 = vcombine.low %v1054, %v1061
    %v1063 = vcombine.low %v651, %v653
    %v1064 = vcombine.low %v655, %v657
    %v1066 = vunpack.c.l.s4 1966171168
    %v1067 = vunpack.c.0.s8 %v1066
    %v1068 = vlaneseq
    %v1069 = vshrl.u32 %v1068, 7
    %v1070 = vsub.s32 %v1067, %v1069
    %v1071 = vrot.slane %v1063, %v1070
    %v1073 = vunpack.c.l.s4 1966171168
    %v1074 = vunpack.c.0.s8 %v1073
    %v1075 = vlaneseq
    %v1076 = vshrl.u32 %v1075, 7
    %v1077 = vsub.s32 %v1074, %v1076
    %v1078 = vrot.slane %v1064, %v1077
    %v1080 = vunpack.c.l.s4 1966171168
    %v1081 = vunpack.c.0.s8 %v1080
    %v1082 = vlaneseq
    %v1083 = vshrl.u32 %v1082, 7
    %v1084 = vsub.s32 %v1081, %v1083
    %v1085 = vrot.slane %v659, %v1084
    %v1086 = vcombine.low %v1071, %v1078
    %v1088 = vunpack.c.l.s4 1966171168
    %v1089 = vunpack.c.0.s8 %v1088
    %v1090 = vlaneseq
    %v1091 = vshrl.u32 %v1090, 7
    %v1092 = vsub.s32 %v1089, %v1091
    %v1093 = vrot.slane %v1086, %v1092
    %v1095 = vunpack.c.l.s4 1966171168
    %v1096 = vunpack.c.0.s8 %v1095
    %v1097 = vlaneseq
    %v1098 = vshrl.u32 %v1097, 7
    %v1099 = vsub.s32 %v1096, %v1098
    %v1100 = vrot.slane %v1085, %v1099
    %v1101 = vcombine.low %v1093, %v1100
    %1102 = vrot.lane.b32.xlu0 %v1101, 96
    %v1103 = vpop.permute.xlu0 %1102
    %v1104 = vsel %vm785, %v1062, 0
    %v1106 = vsel %vm785, %v1103, 0
    %1108 = vmatprep.subr.mxu0 0.0
    %1109 = vmatpush1.xpose.msra.mxu0 %v1106
    %1110 = vmatprep.subr.mxu0 0.0
    %1111 = vmatpush1.xpose.msra.mxu0 0.0
    %1112 = vmatprep.subr.mxu0 0.0
    %1113 = vmatpush1.xpose.msra.mxu0 0.0
    %1114 = vmatprep.subr.mxu0 0.0
    %1115 = vmatpush1.xpose.msra.mxu0 0.0
    %1116 = vmatprep.subr.mxu0 0.0
    %1117 = vmatpush1.xpose.msra.mxu0 0.0
    %1118 = vmatprep.subr.mxu0 0.0
    %1119 = vmatpush1.xpose.msra.mxu0 0.0
    %1120 = vmatprep.subr.mxu0 0.0
    %1121 = vmatpush1.xpose.msra.mxu0 0.0
    %1122 = vmatprep.subr.mxu0 0.0
    %1123 = vmatpush1.xpose.msra.mxu0 0.0
    %1124 = vmatprep.subr.mxu0 0.0
    %1125 = vmatpush1.xpose.msra.mxu0 0.0
    %1126 = vmatprep.subr.mxu0 0.0
    %1127 = vmatpush1.xpose.msra.mxu0 0.0
    %1128 = vmatprep.subr.mxu0 0.0
    %1129 = vmatpush1.xpose.msra.mxu0 0.0
    %1130 = vmatprep.subr.mxu0 0.0
    %1131 = vmatpush1.xpose.msra.mxu0 0.0
    %1132 = vmatprep.subr.mxu0 0.0
    %1133 = vmatpush1.xpose.msra.mxu0 0.0
    %1134 = vmatprep.subr.mxu0 0.0
    %1135 = vmatpush1.xpose.msra.mxu0 0.0
    %1136 = vmatprep.subr.mxu0 0.0
    %1137 = vmatpush1.xpose.msra.mxu0 0.0
    %1138 = vmatprep.subr.mxu0 0.0
    %1139 = vmatpush1.xpose.msra.mxu0 0.0
    %1140 = vmatprep.subr.mxu0 0.0
    %1141 = vmatpush1.xpose.msra.mxu0 0.0
    %1142 = vmatprep.subr.mxu0 0.0
    %1143 = vmatpush1.xpose.msra.mxu0 0.0
    %1144 = vmatprep.subr.mxu0 0.0
    %1145 = vmatpush1.xpose.msra.mxu0 0.0
    %1146 = vmatprep.subr.mxu0 0.0
    %1147 = vmatpush1.xpose.msra.mxu0 0.0
    %1148 = vmatprep.subr.mxu0 0.0
    %1149 = vmatpush1.xpose.msra.mxu0 0.0
    %1150 = vmatprep.subr.mxu0 0.0
    %1151 = vmatpush1.xpose.msra.mxu0 0.0
    %1152 = vmatprep.subr.mxu0 0.0
    %1153 = vmatpush1.xpose.msra.mxu0 0.0
    %1154 = vmatprep.subr.mxu0 0.0
    %1155 = vmatpush1.xpose.msra.mxu0 0.0
    %1156 = vmatprep.subr.mxu0 0.0
    %1157 = vmatpush1.xpose.msra.mxu0 0.0
    %1158 = vmatprep.subr.mxu0 0.0
    %1159 = vmatpush1.xpose.msra.mxu0 0.0
    %1160 = vmatprep.subr.mxu0 0.0
    %1161 = vmatpush1.xpose.msra.mxu0 0.0
    %1162 = vmatprep.subr.mxu0 0.0
    %1163 = vmatpush1.xpose.msra.mxu0 0.0
    %1164 = vmatprep.subr.mxu0 0.0
    %1165 = vmatpush1.xpose.msra.mxu0 0.0
    %1166 = vmatprep.subr.mxu0 0.0
    %1167 = vmatpush1.xpose.msra.mxu0 0.0
    %1168 = vmatprep.subr.mxu0 0.0
    %1169 = vmatpush1.xpose.msra.mxu0 0.0
    %1170 = vmatprep.subr.mxu0 0.0
    %1171 = vmatpush1.xpose.msra.mxu0 0.0
    %1172 = vmatprep.mubr.f32.mxu0 0.0
    %1173 = vmatmul.mubr.f32.gmra.mrb[0].mxu0 %v1104
    %v1174 = vpop.f32.mrb[0].mxu0
    %v1175 = vadd.f32 0.0, %v1174
    %v1176 = vpop.f32.mrb[0].mxu0
    %1177 = vdwg.mxu0
    %v1183 = vcombine.low %v695, %v696
    %v1184 = vcombine.low %v697, %v698
    %v1186 = vunpack.c.l.s4 1966171168
    %v1187 = vunpack.c.0.s8 %v1186
    %v1188 = vlaneseq
    %v1189 = vshrl.u32 %v1188, 7
    %v1190 = vsub.s32 %v1187, %v1189
    %v1191 = vrot.slane %v1183, %v1190
    %v1193 = vunpack.c.l.s4 1966171168
    %v1194 = vunpack.c.0.s8 %v1193
    %v1195 = vlaneseq
    %v1196 = vshrl.u32 %v1195, 7
    %v1197 = vsub.s32 %v1194, %v1196
    %v1198 = vrot.slane %v1184, %v1197
    %v1200 = vunpack.c.l.s4 1966171168
    %v1201 = vunpack.c.0.s8 %v1200
    %v1202 = vlaneseq
    %v1203 = vshrl.u32 %v1202, 7
    %v1204 = vsub.s32 %v1201, %v1203
    %v1205 = vrot.slane %v699, %v1204
    %v1206 = vcombine.low %v1191, %v1198
    %v1208 = vunpack.c.l.s4 1966171168
    %v1209 = vunpack.c.0.s8 %v1208
    %v1210 = vlaneseq
    %v1211 = vshrl.u32 %v1210, 7
    %v1212 = vsub.s32 %v1209, %v1211
    %v1213 = vrot.slane %v1206, %v1212
    %v1215 = vunpack.c.l.s4 1966171168
    %v1216 = vunpack.c.0.s8 %v1215
    %v1217 = vlaneseq
    %v1218 = vshrl.u32 %v1217, 7
    %v1219 = vsub.s32 %v1216, %v1218
    %v1220 = vrot.slane %v1205, %v1219
    %v1221 = vcombine.low %v1213, %v1220
    %v1222 = vcombine.low %v661, %v663
    %v1223 = vcombine.low %v665, %v667
    %v1225 = vunpack.c.l.s4 1966171168
    %v1226 = vunpack.c.0.s8 %v1225
    %v1227 = vlaneseq
    %v1228 = vshrl.u32 %v1227, 7
    %v1229 = vsub.s32 %v1226, %v1228
    %v1230 = vrot.slane %v1222, %v1229
    %v1232 = vunpack.c.l.s4 1966171168
    %v1233 = vunpack.c.0.s8 %v1232
    %v1234 = vlaneseq
    %v1235 = vshrl.u32 %v1234, 7
    %v1236 = vsub.s32 %v1233, %v1235
    %v1237 = vrot.slane %v1223, %v1236
    %v1239 = vunpack.c.l.s4 1966171168
    %v1240 = vunpack.c.0.s8 %v1239
    %v1241 = vlaneseq
    %v1242 = vshrl.u32 %v1241, 7
    %v1243 = vsub.s32 %v1240, %v1242
    %v1244 = vrot.slane %v669, %v1243
    %v1245 = vcombine.low %v1230, %v1237
    %v1247 = vunpack.c.l.s4 1966171168
    %v1248 = vunpack.c.0.s8 %v1247
    %v1249 = vlaneseq
    %v1250 = vshrl.u32 %v1249, 7
    %v1251 = vsub.s32 %v1248, %v1250
    %v1252 = vrot.slane %v1245, %v1251
    %v1254 = vunpack.c.l.s4 1966171168
    %v1255 = vunpack.c.0.s8 %v1254
    %v1256 = vlaneseq
    %v1257 = vshrl.u32 %v1256, 7
    %v1258 = vsub.s32 %v1255, %v1257
    %v1259 = vrot.slane %v1244, %v1258
    %v1260 = vcombine.low %v1252, %v1259
    %1261 = vrot.lane.b32.xlu0 %v1260, 96
    %v1262 = vpop.permute.xlu0 %1261
    %v1263 = vsel %vm785, %v1221, 0
    %v1265 = vsel %vm785, %v1262, 0
    %1267 = vmatprep.subr.mxu0 0.0
    %1268 = vmatpush1.xpose.msra.mxu0 %v1265
    %1269 = vmatprep.subr.mxu0 0.0
    %1270 = vmatpush1.xpose.msra.mxu0 0.0
    %1271 = vmatprep.subr.mxu0 0.0
    %1272 = vmatpush1.xpose.msra.mxu0 0.0
    %1273 = vmatprep.subr.mxu0 0.0
    %1274 = vmatpush1.xpose.msra.mxu0 0.0
    %1275 = vmatprep.subr.mxu0 0.0
    %1276 = vmatpush1.xpose.msra.mxu0 0.0
    %1277 = vmatprep.subr.mxu0 0.0
    %1278 = vmatpush1.xpose.msra.mxu0 0.0
    %1279 = vmatprep.subr.mxu0 0.0
    %1280 = vmatpush1.xpose.msra.mxu0 0.0
    %1281 = vmatprep.subr.mxu0 0.0
    %1282 = vmatpush1.xpose.msra.mxu0 0.0
    %1283 = vmatprep.subr.mxu0 0.0
    %1284 = vmatpush1.xpose.msra.mxu0 0.0
    %1285 = vmatprep.subr.mxu0 0.0
    %1286 = vmatpush1.xpose.msra.mxu0 0.0
    %1287 = vmatprep.subr.mxu0 0.0
    %1288 = vmatpush1.xpose.msra.mxu0 0.0
    %1289 = vmatprep.subr.mxu0 0.0
    %1290 = vmatpush1.xpose.msra.mxu0 0.0
    %1291 = vmatprep.subr.mxu0 0.0
    %1292 = vmatpush1.xpose.msra.mxu0 0.0
    %1293 = vmatprep.subr.mxu0 0.0
    %1294 = vmatpush1.xpose.msra.mxu0 0.0
    %1295 = vmatprep.subr.mxu0 0.0
    %1296 = vmatpush1.xpose.msra.mxu0 0.0
    %1297 = vmatprep.subr.mxu0 0.0
    %1298 = vmatpush1.xpose.msra.mxu0 0.0
    %1299 = vmatprep.subr.mxu0 0.0
    %1300 = vmatpush1.xpose.msra.mxu0 0.0
    %1301 = vmatprep.subr.mxu0 0.0
    %1302 = vmatpush1.xpose.msra.mxu0 0.0
    %1303 = vmatprep.subr.mxu0 0.0
    %1304 = vmatpush1.xpose.msra.mxu0 0.0
    %1305 = vmatprep.subr.mxu0 0.0
    %1306 = vmatpush1.xpose.msra.mxu0 0.0
    %1307 = vmatprep.subr.mxu0 0.0
    %1308 = vmatpush1.xpose.msra.mxu0 0.0
    %1309 = vmatprep.subr.mxu0 0.0
    %1310 = vmatpush1.xpose.msra.mxu0 0.0
    %1311 = vmatprep.subr.mxu0 0.0
    %1312 = vmatpush1.xpose.msra.mxu0 0.0
    %1313 = vmatprep.subr.mxu0 0.0
    %1314 = vmatpush1.xpose.msra.mxu0 0.0
    %1315 = vmatprep.subr.mxu0 0.0
    %1316 = vmatpush1.xpose.msra.mxu0 0.0
    %1317 = vmatprep.subr.mxu0 0.0
    %1318 = vmatpush1.xpose.msra.mxu0 0.0
    %1319 = vmatprep.subr.mxu0 0.0
    %1320 = vmatpush1.xpose.msra.mxu0 0.0
    %1321 = vmatprep.subr.mxu0 0.0
    %1322 = vmatpush1.xpose.msra.mxu0 0.0
    %1323 = vmatprep.subr.mxu0 0.0
    %1324 = vmatpush1.xpose.msra.mxu0 0.0
    %1325 = vmatprep.subr.mxu0 0.0
    %1326 = vmatpush1.xpose.msra.mxu0 0.0
    %1327 = vmatprep.subr.mxu0 0.0
    %1328 = vmatpush1.xpose.msra.mxu0 0.0
    %1329 = vmatprep.subr.mxu0 0.0
    %1330 = vmatpush1.xpose.msra.mxu0 0.0
    %1331 = vmatprep.mubr.f32.mxu0 0.0
    %1332 = vmatmul.mubr.f32.gmra.mrb[0].mxu0 %v1263
    %v1333 = vpop.f32.mrb[0].mxu0
    %v1334 = vadd.f32 0.0, %v1333
    %v1335 = vpop.f32.mrb[0].mxu0
    %1336 = vdwg.mxu0
    %vm1337 = vcmask 36864
    %v1338 = vsel %vm1337, %v857, -inf
    %1339 = vmax.xlane.f32.xlu0 %v1338
    %v1340 = vpop.xlane.xlu0 %1339
    %v1341 = vsel %vm1337, %v1016, -inf
    %1342 = vmax.xlane.f32.xlu0 %v1341
    %v1343 = vpop.xlane.xlu0 %1342
    %v1344 = vsel %vm1337, %v1175, -inf
    %1345 = vmax.xlane.f32.xlu0 %v1344
    %v1346 = vpop.xlane.xlu0 %1345
    %v1347 = vsel %vm1337, %v1334, -inf
    %1348 = vmax.xlane.f32.xlu0 %v1347
    %v1349 = vpop.xlane.xlu0 %1348
    %v1350 = vsub.f32 %v857, %v1340
    %v1351 = vsub.f32 %v1016, %v1343
    %v1352 = vsub.f32 %v1175, %v1346
    %v1353 = vsub.f32 %v1334, %v1349
    %v1354 = vmul.f32 %v1350, 1.442695
    %v1355 = vpow.pop %v1354
    %v1356 = vmul.f32 %v1351, 1.442695
    %v1357 = vpow.pop %v1356
    %v1358 = vmul.f32 %v1352, 1.442695
    %v1359 = vpow.pop %v1358
    %v1360 = vmul.f32 %v1353, 1.442695
    %v1361 = vpow.pop %v1360
    %v1362 = vsel %vm1337, %v1355, 0.0
    %1363 = vadd.xlane.f32.xlu0 %v1362
    %v1364 = vpop.xlane.xlu0 %1363
    %v1365 = vsel %vm1337, %v1357, 0.0
    %1366 = vadd.xlane.f32.xlu0 %v1365
    %v1367 = vpop.xlane.xlu0 %1366
    %v1368 = vsel %vm1337, %v1359, 0.0
    %1369 = vadd.xlane.f32.xlu0 %v1368
    %v1370 = vpop.xlane.xlu0 %1369
    %v1371 = vsel %vm1337, %v1361, 0.0
    %1372 = vadd.xlane.f32.xlu0 %v1371
    %v1373 = vpop.xlane.xlu0 %1372
    %v1374 = vrcp.pop %v1364
    %v1375 = vmul.f32 %v1355, %v1374
    %v1376 = vrcp.pop %v1367
    %v1377 = vmul.f32 %v1357, %v1376
    %v1378 = vrcp.pop %v1370
    %v1379 = vmul.f32 %v1359, %v1378
    %v1380 = vrcp.pop %v1373
    %v1381 = vmul.f32 %v1361, %v1380
    %1382 = vrot.lane.b32.xlu0 %v782, 64
    %v1383 = vpop.permute.xlu0 %1382
    %vm1384 = vcmask 39936
    %v1386 = vsel %vm1384, %v1375, 0
    %vm1388 = vcmask 1044480
    %v1389 = vsel %vm1388, %v1383, 0
    %1391 = vmatprep.subr.mxu0 0.0
    %1392 = vmatpush1.msra.mxu0 %v1389
    %1393 = vmatprep.subr.mxu0 0.0
    %1394 = vmatpush1.msra.mxu0 0.0
    %1395 = vmatprep.subr.mxu0 0.0
    %1396 = vmatpush1.msra.mxu0 0.0
    %1397 = vmatprep.subr.mxu0 0.0
    %1398 = vmatpush1.msra.mxu0 0.0
    %1399 = vmatprep.subr.mxu0 0.0
    %1400 = vmatpush1.msra.mxu0 0.0
    %1401 = vmatprep.subr.mxu0 0.0
    %1402 = vmatpush1.msra.mxu0 0.0
    %1403 = vmatprep.subr.mxu0 0.0
    %1404 = vmatpush1.msra.mxu0 0.0
    %1405 = vmatprep.subr.mxu0 0.0
    %1406 = vmatpush1.msra.mxu0 0.0
    %1407 = vmatprep.subr.mxu0 0.0
    %1408 = vmatpush1.msra.mxu0 0.0
    %1409 = vmatprep.subr.mxu0 0.0
    %1410 = vmatpush1.msra.mxu0 0.0
    %1411 = vmatprep.subr.mxu0 0.0
    %1412 = vmatpush1.msra.mxu0 0.0
    %1413 = vmatprep.subr.mxu0 0.0
    %1414 = vmatpush1.msra.mxu0 0.0
    %1415 = vmatprep.subr.mxu0 0.0
    %1416 = vmatpush1.msra.mxu0 0.0
    %1417 = vmatprep.subr.mxu0 0.0
    %1418 = vmatpush1.msra.mxu0 0.0
    %1419 = vmatprep.subr.mxu0 0.0
    %1420 = vmatpush1.msra.mxu0 0.0
    %1421 = vmatprep.subr.mxu0 0.0
    %1422 = vmatpush1.msra.mxu0 0.0
    %1423 = vmatprep.subr.mxu0 0.0
    %1424 = vmatpush1.msra.mxu0 0.0
    %1425 = vmatprep.subr.mxu0 0.0
    %1426 = vmatpush1.msra.mxu0 0.0
    %1427 = vmatprep.subr.mxu0 0.0
    %1428 = vmatpush1.msra.mxu0 0.0
    %1429 = vmatprep.subr.mxu0 0.0
    %1430 = vmatpush1.msra.mxu0 0.0
    %1431 = vmatprep.subr.mxu0 0.0
    %1432 = vmatpush1.msra.mxu0 0.0
    %1433 = vmatprep.subr.mxu0 0.0
    %1434 = vmatpush1.msra.mxu0 0.0
    %1435 = vmatprep.subr.mxu0 0.0
    %1436 = vmatpush1.msra.mxu0 0.0
    %1437 = vmatprep.subr.mxu0 0.0
    %1438 = vmatpush1.msra.mxu0 0.0
    %1439 = vmatprep.subr.mxu0 0.0
    %1440 = vmatpush1.msra.mxu0 0.0
    %1441 = vmatprep.subr.mxu0 0.0
    %1442 = vmatpush1.msra.mxu0 0.0
    %1443 = vmatprep.subr.mxu0 0.0
    %1444 = vmatpush1.msra.mxu0 0.0
    %1445 = vmatprep.subr.mxu0 0.0
    %1446 = vmatpush1.msra.mxu0 0.0
    %1447 = vmatprep.subr.mxu0 0.0
    %1448 = vmatpush1.msra.mxu0 0.0
    %1449 = vmatprep.subr.mxu0 0.0
    %1450 = vmatpush1.msra.mxu0 0.0
    %1451 = vmatprep.subr.mxu0 0.0
    %1452 = vmatpush1.msra.mxu0 0.0
    %1453 = vmatprep.subr.mxu0 0.0
    %1454 = vmatpush1.msra.mxu0 0.0
    %1455 = vmatprep.mubr.f32.mxu0 0.0
    %1456 = vmatmul.mubr.f32.gmra.mrb[0].mxu0 %v1386
    %v1457 = vpop.f32.mrb[0].mxu0
    %v1458 = vadd.f32 0.0, %v1457
    %v1459 = vpop.f32.mrb[0].mxu0
    %1460 = vdwg.mxu0
    %1461 = vrot.lane.b32.xlu0 %v942, 64
    %v1462 = vpop.permute.xlu0 %1461
    %v1464 = vsel %vm1384, %v1377, 0
    %v1466 = vsel %vm1388, %v1462, 0
    %1468 = vmatprep.subr.mxu0 0.0
    %1469 = vmatpush1.msra.mxu0 %v1466
    %1470 = vmatprep.subr.mxu0 0.0
    %1471 = vmatpush1.msra.mxu0 0.0
    %1472 = vmatprep.subr.mxu0 0.0
    %1473 = vmatpush1.msra.mxu0 0.0
    %1474 = vmatprep.subr.mxu0 0.0
    %1475 = vmatpush1.msra.mxu0 0.0
    %1476 = vmatprep.subr.mxu0 0.0
    %1477 = vmatpush1.msra.mxu0 0.0
    %1478 = vmatprep.subr.mxu0 0.0
    %1479 = vmatpush1.msra.mxu0 0.0
    %1480 = vmatprep.subr.mxu0 0.0
    %1481 = vmatpush1.msra.mxu0 0.0
    %1482 = vmatprep.subr.mxu0 0.0
    %1483 = vmatpush1.msra.mxu0 0.0
    %1484 = vmatprep.subr.mxu0 0.0
    %1485 = vmatpush1.msra.mxu0 0.0
    %1486 = vmatprep.subr.mxu0 0.0
    %1487 = vmatpush1.msra.mxu0 0.0
    %1488 = vmatprep.subr.mxu0 0.0
    %1489 = vmatpush1.msra.mxu0 0.0
    %1490 = vmatprep.subr.mxu0 0.0
    %1491 = vmatpush1.msra.mxu0 0.0
    %1492 = vmatprep.subr.mxu0 0.0
    %1493 = vmatpush1.msra.mxu0 0.0
    %1494 = vmatprep.subr.mxu0 0.0
    %1495 = vmatpush1.msra.mxu0 0.0
    %1496 = vmatprep.subr.mxu0 0.0
    %1497 = vmatpush1.msra.mxu0 0.0
    %1498 = vmatprep.subr.mxu0 0.0
    %1499 = vmatpush1.msra.mxu0 0.0
    %1500 = vmatprep.subr.mxu0 0.0
    %1501 = vmatpush1.msra.mxu0 0.0
    %1502 = vmatprep.subr.mxu0 0.0
    %1503 = vmatpush1.msra.mxu0 0.0
    %1504 = vmatprep.subr.mxu0 0.0
    %1505 = vmatpush1.msra.mxu0 0.0
    %1506 = vmatprep.subr.mxu0 0.0
    %1507 = vmatpush1.msra.mxu0 0.0
    %1508 = vmatprep.subr.mxu0 0.0
    %1509 = vmatpush1.msra.mxu0 0.0
    %1510 = vmatprep.subr.mxu0 0.0
    %1511 = vmatpush1.msra.mxu0 0.0
    %1512 = vmatprep.subr.mxu0 0.0
    %1513 = vmatpush1.msra.mxu0 0.0
    %1514 = vmatprep.subr.mxu0 0.0
    %1515 = vmatpush1.msra.mxu0 0.0
    %1516 = vmatprep.subr.mxu0 0.0
    %1517 = vmatpush1.msra.mxu0 0.0
    %1518 = vmatprep.subr.mxu0 0.0
    %1519 = vmatpush1.msra.mxu0 0.0
    %1520 = vmatprep.subr.mxu0 0.0
    %1521 = vmatpush1.msra.mxu0 0.0
    %1522 = vmatprep.subr.mxu0 0.0
    %1523 = vmatpush1.msra.mxu0 0.0
    %1524 = vmatprep.subr.mxu0 0.0
    %1525 = vmatpush1.msra.mxu0 0.0
    %1526 = vmatprep.subr.mxu0 0.0
    %1527 = vmatpush1.msra.mxu0 0.0
    %1528 = vmatprep.subr.mxu0 0.0
    %1529 = vmatpush1.msra.mxu0 0.0
    %1530 = vmatprep.subr.mxu0 0.0
    %1531 = vmatpush1.msra.mxu0 0.0
    %1532 = vmatprep.mubr.f32.mxu0 0.0
    %1533 = vmatmul.mubr.f32.gmra.mrb[0].mxu0 %v1464
    %v1534 = vpop.f32.mrb[0].mxu0
    %v1535 = vadd.f32 0.0, %v1534
    %v1536 = vpop.f32.mrb[0].mxu0
    %1537 = vdwg.mxu0
    %1538 = vrot.lane.b32.xlu0 %v1101, 64
    %v1539 = vpop.permute.xlu0 %1538
    %v1541 = vsel %vm1384, %v1379, 0
    %v1543 = vsel %vm1388, %v1539, 0
    %1545 = vmatprep.subr.mxu0 0.0
    %1546 = vmatpush1.msra.mxu0 %v1543
    %1547 = vmatprep.subr.mxu0 0.0
    %1548 = vmatpush1.msra.mxu0 0.0
    %1549 = vmatprep.subr.mxu0 0.0
    %1550 = vmatpush1.msra.mxu0 0.0
    %1551 = vmatprep.subr.mxu0 0.0
    %1552 = vmatpush1.msra.mxu0 0.0
    %1553 = vmatprep.subr.mxu0 0.0
    %1554 = vmatpush1.msra.mxu0 0.0
    %1555 = vmatprep.subr.mxu0 0.0
    %1556 = vmatpush1.msra.mxu0 0.0
    %1557 = vmatprep.subr.mxu0 0.0
    %1558 = vmatpush1.msra.mxu0 0.0
    %1559 = vmatprep.subr.mxu0 0.0
    %1560 = vmatpush1.msra.mxu0 0.0
    %1561 = vmatprep.subr.mxu0 0.0
    %1562 = vmatpush1.msra.mxu0 0.0
    %1563 = vmatprep.subr.mxu0 0.0
    %1564 = vmatpush1.msra.mxu0 0.0
    %1565 = vmatprep.subr.mxu0 0.0
    %1566 = vmatpush1.msra.mxu0 0.0
    %1567 = vmatprep.subr.mxu0 0.0
    %1568 = vmatpush1.msra.mxu0 0.0
    %1569 = vmatprep.subr.mxu0 0.0
    %1570 = vmatpush1.msra.mxu0 0.0
    %1571 = vmatprep.subr.mxu0 0.0
    %1572 = vmatpush1.msra.mxu0 0.0
    %1573 = vmatprep.subr.mxu0 0.0
    %1574 = vmatpush1.msra.mxu0 0.0
    %1575 = vmatprep.subr.mxu0 0.0
    %1576 = vmatpush1.msra.mxu0 0.0
    %1577 = vmatprep.subr.mxu0 0.0
    %1578 = vmatpush1.msra.mxu0 0.0
    %1579 = vmatprep.subr.mxu0 0.0
    %1580 = vmatpush1.msra.mxu0 0.0
    %1581 = vmatprep.subr.mxu0 0.0
    %1582 = vmatpush1.msra.mxu0 0.0
    %1583 = vmatprep.subr.mxu0 0.0
    %1584 = vmatpush1.msra.mxu0 0.0
    %1585 = vmatprep.subr.mxu0 0.0
    %1586 = vmatpush1.msra.mxu0 0.0
    %1587 = vmatprep.subr.mxu0 0.0
    %1588 = vmatpush1.msra.mxu0 0.0
    %1589 = vmatprep.subr.mxu0 0.0
    %1590 = vmatpush1.msra.mxu0 0.0
    %1591 = vmatprep.subr.mxu0 0.0
    %1592 = vmatpush1.msra.mxu0 0.0
    %1593 = vmatprep.subr.mxu0 0.0
    %1594 = vmatpush1.msra.mxu0 0.0
    %1595 = vmatprep.subr.mxu0 0.0
    %1596 = vmatpush1.msra.mxu0 0.0
    %1597 = vmatprep.subr.mxu0 0.0
    %1598 = vmatpush1.msra.mxu0 0.0
    %1599 = vmatprep.subr.mxu0 0.0
    %1600 = vmatpush1.msra.mxu0 0.0
    %1601 = vmatprep.subr.mxu0 0.0
    %1602 = vmatpush1.msra.mxu0 0.0
    %1603 = vmatprep.subr.mxu0 0.0
    %1604 = vmatpush1.msra.mxu0 0.0
    %1605 = vmatprep.subr.mxu0 0.0
    %1606 = vmatpush1.msra.mxu0 0.0
    %1607 = vmatprep.subr.mxu0 0.0
    %1608 = vmatpush1.msra.mxu0 0.0
    %1609 = vmatprep.mubr.f32.mxu0 0.0
    %1610 = vmatmul.mubr.f32.gmra.mrb[0].mxu0 %v1541
    %v1611 = vpop.f32.mrb[0].mxu0
    %v1612 = vadd.f32 0.0, %v1611
    %v1613 = vpop.f32.mrb[0].mxu0
    %1614 = vdwg.mxu0
    %1615 = vrot.lane.b32.xlu0 %v1260, 64
    %v1616 = vpop.permute.xlu0 %1615
    %v1618 = vsel %vm1384, %v1381, 0
    %v1620 = vsel %vm1388, %v1616, 0
    %1622 = vmatprep.subr.mxu0 0.0
    %1623 = vmatpush1.msra.mxu0 %v1620
    %1624 = vmatprep.subr.mxu0 0.0
    %1625 = vmatpush1.msra.mxu0 0.0
    %1626 = vmatprep.subr.mxu0 0.0
    %1627 = vmatpush1.msra.mxu0 0.0
    %1628 = vmatprep.subr.mxu0 0.0
    %1629 = vmatpush1.msra.mxu0 0.0
    %1630 = vmatprep.subr.mxu0 0.0
    %1631 = vmatpush1.msra.mxu0 0.0
    %1632 = vmatprep.subr.mxu0 0.0
    %1633 = vmatpush1.msra.mxu0 0.0
    %1634 = vmatprep.subr.mxu0 0.0
    %1635 = vmatpush1.msra.mxu0 0.0
    %1636 = vmatprep.subr.mxu0 0.0
    %1637 = vmatpush1.msra.mxu0 0.0
    %1638 = vmatprep.subr.mxu0 0.0
    %1639 = vmatpush1.msra.mxu0 0.0
    %1640 = vmatprep.subr.mxu0 0.0
    %1641 = vmatpush1.msra.mxu0 0.0
    %1642 = vmatprep.subr.mxu0 0.0
    %1643 = vmatpush1.msra.mxu0 0.0
    %1644 = vmatprep.subr.mxu0 0.0
    %1645 = vmatpush1.msra.mxu0 0.0
    %1646 = vmatprep.subr.mxu0 0.0
    %1647 = vmatpush1.msra.mxu0 0.0
    %1648 = vmatprep.subr.mxu0 0.0
    %1649 = vmatpush1.msra.mxu0 0.0
    %1650 = vmatprep.subr.mxu0 0.0
    %1651 = vmatpush1.msra.mxu0 0.0
    %1652 = vmatprep.subr.mxu0 0.0
    %1653 = vmatpush1.msra.mxu0 0.0
    %1654 = vmatprep.subr.mxu0 0.0
    %1655 = vmatpush1.msra.mxu0 0.0
    %1656 = vmatprep.subr.mxu0 0.0
    %1657 = vmatpush1.msra.mxu0 0.0
    %1658 = vmatprep.subr.mxu0 0.0
    %1659 = vmatpush1.msra.mxu0 0.0
    %1660 = vmatprep.subr.mxu0 0.0
    %1661 = vmatpush1.msra.mxu0 0.0
    %1662 = vmatprep.subr.mxu0 0.0
    %1663 = vmatpush1.msra.mxu0 0.0
    %1664 = vmatprep.subr.mxu0 0.0
    %1665 = vmatpush1.msra.mxu0 0.0
    %1666 = vmatprep.subr.mxu0 0.0
    %1667 = vmatpush1.msra.mxu0 0.0
    %1668 = vmatprep.subr.mxu0 0.0
    %1669 = vmatpush1.msra.mxu0 0.0
    %1670 = vmatprep.subr.mxu0 0.0
    %1671 = vmatpush1.msra.mxu0 0.0
    %1672 = vmatprep.subr.mxu0 0.0
    %1673 = vmatpush1.msra.mxu0 0.0
    %1674 = vmatprep.subr.mxu0 0.0
    %1675 = vmatpush1.msra.mxu0 0.0
    %1676 = vmatprep.subr.mxu0 0.0
    %1677 = vmatpush1.msra.mxu0 0.0
    %1678 = vmatprep.subr.mxu0 0.0
    %1679 = vmatpush1.msra.mxu0 0.0
    %1680 = vmatprep.subr.mxu0 0.0
    %1681 = vmatpush1.msra.mxu0 0.0
    %1682 = vmatprep.subr.mxu0 0.0
    %1683 = vmatpush1.msra.mxu0 0.0
    %1684 = vmatprep.subr.mxu0 0.0
    %1685 = vmatpush1.msra.mxu0 0.0
    %1686 = vmatprep.mubr.f32.mxu0 0.0
    %1687 = vmatmul.mubr.f32.gmra.mrb[0].mxu0 %v1618
    %v1688 = vpop.f32.mrb[0].mxu0
    %v1689 = vadd.f32 0.0, %v1688
    %v1690 = vpop.f32.mrb[0].mxu0
    %1691 = vdwg.mxu0
    %1694 = vrot.lane.b32.xlu0 %v1612, 16
    %v1695 = vpop.permute.xlu0 %1694
    %1696 = vrot.lane.b32.xlu0 %v1689, 16
    %v1697 = vpop.permute.xlu0 %1696
    %v1700 = vsel %vm785, %v1458, %v1695
    %v1701 = vsel %vm785, %v1535, %v1697
    %v1702 = vld [vmem:[%s5] sm:$0xff]
    %v1703 = vld [vmem:[%s5 + $0x8] sm:$0xff]
    %v1704 = vld [vmem:[%s5 + $0x10] sm:$0xff]
    %v1705 = vld [vmem:[%s5 + $0x18] sm:$0xff]
    %v1706 = vlaneseq
    %v1707 = vshrl.u32 %v1706, 7
    %v1708 = vsub.s32 1, %v1707
    %v1709 = vrot.slane %v202, %v1708
    %v1712 = vcombine.high %v1700, %v1700
    %v1714 = vunpack.c.l.s4 1966171168
    %v1715 = vunpack.c.0.s8 %v1714
    %v1716 = vlaneseq
    %v1717 = vshrl.u32 %v1716, 7
    %v1718 = vsub.s32 %v1715, %v1717
    %v1719 = vrot.slane %v1700, %v1718
    %v1721 = vunpack.c.l.s4 1966171168
    %v1722 = vunpack.c.0.s8 %v1721
    %v1723 = vlaneseq
    %v1724 = vshrl.u32 %v1723, 7
    %v1725 = vsub.s32 %v1722, %v1724
    %v1726 = vrot.slane %v1712, %v1725
    %v1727 = vcombine.high %v1719, %v1719
    %v1729 = vunpack.c.l.s4 1966171168
    %v1730 = vunpack.c.0.s8 %v1729
    %v1731 = vlaneseq
    %v1732 = vshrl.u32 %v1731, 7
    %v1733 = vsub.s32 %v1730, %v1732
    %v1734 = vrot.slane %v1719, %v1733
    %v1736 = vunpack.c.l.s4 1966171168
    %v1737 = vunpack.c.0.s8 %v1736
    %v1738 = vlaneseq
    %v1739 = vshrl.u32 %v1738, 7
    %v1740 = vsub.s32 %v1737, %v1739
    %v1741 = vrot.slane %v1726, %v1740
    %v1743 = vunpack.c.l.s4 1966171168
    %v1744 = vunpack.c.0.s8 %v1743
    %v1745 = vlaneseq
    %v1746 = vshrl.u32 %v1745, 7
    %v1747 = vsub.s32 %v1744, %v1746
    %v1748 = vrot.slane %v1727, %v1747
    %v1749 = vcombine.high %v1734, %v1734
    %v1750 = vcombine.high %v1748, %v1748
    %v1751 = vcombine.high %v1701, %v1701
    %v1753 = vunpack.c.l.s4 1966171168
    %v1754 = vunpack.c.0.s8 %v1753
    %v1755 = vlaneseq
    %v1756 = vshrl.u32 %v1755, 7
    %v1757 = vsub.s32 %v1754, %v1756
    %v1758 = vrot.slane %v1701, %v1757
    %v1760 = vunpack.c.l.s4 1966171168
    %v1761 = vunpack.c.0.s8 %v1760
    %v1762 = vlaneseq
    %v1763 = vshrl.u32 %v1762, 7
    %v1764 = vsub.s32 %v1761, %v1763
    %v1765 = vrot.slane %v1751, %v1764
    %v1766 = vcombine.high %v1758, %v1758
    %v1768 = vunpack.c.l.s4 1966171168
    %v1769 = vunpack.c.0.s8 %v1768
    %v1770 = vlaneseq
    %v1771 = vshrl.u32 %v1770, 7
    %v1772 = vsub.s32 %v1769, %v1771
    %v1773 = vrot.slane %v1758, %v1772
    %v1775 = vunpack.c.l.s4 1966171168
    %v1776 = vunpack.c.0.s8 %v1775
    %v1777 = vlaneseq
    %v1778 = vshrl.u32 %v1777, 7
    %v1779 = vsub.s32 %v1776, %v1778
    %v1780 = vrot.slane %v1765, %v1779
    %v1782 = vunpack.c.l.s4 1966171168
    %v1783 = vunpack.c.0.s8 %v1782
    %v1784 = vlaneseq
    %v1785 = vshrl.u32 %v1784, 7
    %v1786 = vsub.s32 %v1783, %v1785
    %v1787 = vrot.slane %v1766, %v1786
    %v1788 = vcombine.high %v1773, %v1773
    %v1789 = vcombine.high %v1787, %v1787
    %v1791 = vcombine.high %v1709, %v1709
    %v1793 = vunpack.c.l.s4 1966171168
    %v1794 = vunpack.c.0.s8 %v1793
    %v1795 = vlaneseq
    %v1796 = vshrl.u32 %v1795, 7
    %v1797 = vsub.s32 %v1794, %v1796
    %v1798 = vrot.slane %v1709, %v1797
    %v1800 = vunpack.c.l.s4 1966171168
    %v1801 = vunpack.c.0.s8 %v1800
    %v1802 = vlaneseq
    %v1803 = vshrl.u32 %v1802, 7
    %v1804 = vsub.s32 %v1801, %v1803
    %v1805 = vrot.slane %v1791, %v1804
    %v1806 = vcombine.high %v1798, %v1798
    %v1808 = vunpack.c.l.s4 1966171168
    %v1809 = vunpack.c.0.s8 %v1808
    %v1810 = vlaneseq
    %v1811 = vshrl.u32 %v1810, 7
    %v1812 = vsub.s32 %v1809, %v1811
    %v1813 = vrot.slane %v1798, %v1812
    %v1815 = vunpack.c.l.s4 1966171168
    %v1816 = vunpack.c.0.s8 %v1815
    %v1817 = vlaneseq
    %v1818 = vshrl.u32 %v1817, 7
    %v1819 = vsub.s32 %v1816, %v1818
    %v1820 = vrot.slane %v1805, %v1819
    %v1822 = vunpack.c.l.s4 1966171168
    %v1823 = vunpack.c.0.s8 %v1822
    %v1824 = vlaneseq
    %v1825 = vshrl.u32 %v1824, 7
    %v1826 = vsub.s32 %v1823, %v1825
    %v1827 = vrot.slane %v1806, %v1826
    %v1828 = vcombine.high %v1813, %v1813
    %v1829 = vcombine.high %v1827, %v1827
    %v1830 = vcombine.low %v1734, %v1748
    %v1831 = vcombine.low %v1749, %v1750
    %v1832 = vcombine.low %v1741, %v1773
    %v1833 = vcombine.low %v1787, %v1788
    %v1835 = vunpack.c.l.s4 1966171168
    %v1836 = vunpack.c.0.s8 %v1835
    %v1837 = vlaneseq
    %v1838 = vshrl.u32 %v1837, 7
    %v1839 = vsub.s32 %v1836, %v1838
    %v1840 = vrot.slane %v1830, %v1839
    %v1842 = vunpack.c.l.s4 1966171168
    %v1843 = vunpack.c.0.s8 %v1842
    %v1844 = vlaneseq
    %v1845 = vshrl.u32 %v1844, 7
    %v1846 = vsub.s32 %v1843, %v1845
    %v1847 = vrot.slane %v1831, %v1846
    %v1849 = vunpack.c.l.s4 1966171168
    %v1850 = vunpack.c.0.s8 %v1849
    %v1851 = vlaneseq
    %v1852 = vshrl.u32 %v1851, 7
    %v1853 = vsub.s32 %v1850, %v1852
    %v1854 = vrot.slane %v1832, %v1853
    %v1856 = vunpack.c.l.s4 1966171168
    %v1857 = vunpack.c.0.s8 %v1856
    %v1858 = vlaneseq
    %v1859 = vshrl.u32 %v1858, 7
    %v1860 = vsub.s32 %v1857, %v1859
    %v1861 = vrot.slane %v1833, %v1860
    %v1862 = vcombine.low %v1840, %v1847
    %v1863 = vcombine.low %v1854, %v1861
    %v1865 = vunpack.c.l.s4 1966171168
    %v1866 = vunpack.c.0.s8 %v1865
    %v1867 = vlaneseq
    %v1868 = vshrl.u32 %v1867, 7
    %v1869 = vsub.s32 %v1866, %v1868
    %v1870 = vrot.slane %v1862, %v1869
    %v1872 = vunpack.c.l.s4 1966171168
    %v1873 = vunpack.c.0.s8 %v1872
    %v1874 = vlaneseq
    %v1875 = vshrl.u32 %v1874, 7
    %v1876 = vsub.s32 %v1873, %v1875
    %v1877 = vrot.slane %v1863, %v1876
    %v1878 = vcombine.low %v1870, %v1877
    %v1879 = vcombine.low %v1789, %v1780
    %v1881 = vunpack.c.l.s4 1966171168
    %v1882 = vunpack.c.0.s8 %v1881
    %v1883 = vlaneseq
    %v1884 = vshrl.u32 %v1883, 7
    %v1885 = vsub.s32 %v1882, %v1884
    %v1886 = vrot.slane %v1879, %v1885
    %v1888 = vunpack.c.l.s4 1966171168
    %v1889 = vunpack.c.0.s8 %v1888
    %v1890 = vlaneseq
    %v1891 = vshrl.u32 %v1890, 7
    %v1892 = vsub.s32 %v1889, %v1891
    %v1893 = vrot.slane %v1886, %v1892
    %v1894 = vcombine.low %v1813, %v1827
    %v1895 = vcombine.low %v1828, %v1829
    %v1896 = vcombine.low %v1820, %v1813
    %v1897 = vcombine.low %v1827, %v1828
    %v1899 = vunpack.c.l.s4 1966171168
    %v1900 = vunpack.c.0.s8 %v1899
    %v1901 = vlaneseq
    %v1902 = vshrl.u32 %v1901, 7
    %v1903 = vsub.s32 %v1900, %v1902
    %v1904 = vrot.slane %v1894, %v1903
    %v1906 = vunpack.c.l.s4 1966171168
    %v1907 = vunpack.c.0.s8 %v1906
    %v1908 = vlaneseq
    %v1909 = vshrl.u32 %v1908, 7
    %v1910 = vsub.s32 %v1907, %v1909
    %v1911 = vrot.slane %v1895, %v1910
    %v1913 = vunpack.c.l.s4 1966171168
    %v1914 = vunpack.c.0.s8 %v1913
    %v1915 = vlaneseq
    %v1916 = vshrl.u32 %v1915, 7
    %v1917 = vsub.s32 %v1914, %v1916
    %v1918 = vrot.slane %v1896, %v1917
    %v1920 = vunpack.c.l.s4 1966171168
    %v1921 = vunpack.c.0.s8 %v1920
    %v1922 = vlaneseq
    %v1923 = vshrl.u32 %v1922, 7
    %v1924 = vsub.s32 %v1921, %v1923
    %v1925 = vrot.slane %v1897, %v1924
    %v1926 = vcombine.low %v1904, %v1911
    %v1927 = vcombine.low %v1918, %v1925
    %v1929 = vunpack.c.l.s4 1966171168
    %v1930 = vunpack.c.0.s8 %v1929
    %v1931 = vlaneseq
    %v1932 = vshrl.u32 %v1931, 7
    %v1933 = vsub.s32 %v1930, %v1932
    %v1934 = vrot.slane %v1926, %v1933
    %v1936 = vunpack.c.l.s4 1966171168
    %v1937 = vunpack.c.0.s8 %v1936
    %v1938 = vlaneseq
    %v1939 = vshrl.u32 %v1938, 7
    %v1940 = vsub.s32 %v1937, %v1939
    %v1941 = vrot.slane %v1927, %v1940
    %v1942 = vcombine.low %v1934, %v1941
    %v1943 = vcombine.low %v1829, %v1820
    %v1945 = vunpack.c.l.s4 1966171168
    %v1946 = vunpack.c.0.s8 %v1945
    %v1947 = vlaneseq
    %v1948 = vshrl.u32 %v1947, 7
    %v1949 = vsub.s32 %v1946, %v1948
    %v1950 = vrot.slane %v1943, %v1949
    %v1952 = vunpack.c.l.s4 1966171168
    %v1953 = vunpack.c.0.s8 %v1952
    %v1954 = vlaneseq
    %v1955 = vshrl.u32 %v1954, 7
    %v1956 = vsub.s32 %v1953, %v1955
    %v1957 = vrot.slane %v1950, %v1956
    %v1960 = vsel %vm487, %v1878, 0
    %v1962 = vsel %vm487, %v1893, 0
    %1964 = vmatprep.subr.mxu0 0.0
    %1965 = vmatpush1.msra.mxu0 %v1702
    %1966 = vmatprep.subr.mxu0 0.0
    %1967 = vmatpush1.msra.mxu0 %v1703
    %1968 = vmatprep.subr.mxu0 0.0
    %1969 = vmatpush1.msra.mxu0 %v1704
    %1970 = vmatprep.subr.mxu0 0.0
    %1971 = vmatpush1.msra.mxu0 %v1705
    %1972 = vmatprep.subr.mxu0 0.0
    %1973 = vmatpush1.msra.mxu0 0.0
    %1974 = vmatprep.subr.mxu0 0.0
    %1975 = vmatpush1.msra.mxu0 0.0
    %1976 = vmatprep.subr.mxu0 0.0
    %1977 = vmatpush1.msra.mxu0 0.0
    %1978 = vmatprep.subr.mxu0 0.0
    %1979 = vmatpush1.msra.mxu0 0.0
    %1980 = vmatprep.subr.mxu0 0.0
    %1981 = vmatpush1.msra.mxu0 0.0
    %1982 = vmatprep.subr.mxu0 0.0
    %1983 = vmatpush1.msra.mxu0 0.0
    %1984 = vmatprep.subr.mxu0 0.0
    %1985 = vmatpush1.msra.mxu0 0.0
    %1986 = vmatprep.subr.mxu0 0.0
    %1987 = vmatpush1.msra.mxu0 0.0
    %1988 = vmatprep.subr.mxu0 0.0
    %1989 = vmatpush1.msra.mxu0 0.0
    %1990 = vmatprep.subr.mxu0 0.0
    %1991 = vmatpush1.msra.mxu0 0.0
    %1992 = vmatprep.subr.mxu0 0.0
    %1993 = vmatpush1.msra.mxu0 0.0
    %1994 = vmatprep.subr.mxu0 0.0
    %1995 = vmatpush1.msra.mxu0 0.0
    %1996 = vmatprep.subr.mxu0 0.0
    %1997 = vmatpush1.msra.mxu0 0.0
    %1998 = vmatprep.subr.mxu0 0.0
    %1999 = vmatpush1.msra.mxu0 0.0
    %2000 = vmatprep.subr.mxu0 0.0
    %2001 = vmatpush1.msra.mxu0 0.0
    %2002 = vmatprep.subr.mxu0 0.0
    %2003 = vmatpush1.msra.mxu0 0.0
    %2004 = vmatprep.subr.mxu0 0.0
    %2005 = vmatpush1.msra.mxu0 0.0
    %2006 = vmatprep.subr.mxu0 0.0
    %2007 = vmatpush1.msra.mxu0 0.0
    %2008 = vmatprep.subr.mxu0 0.0
    %2009 = vmatpush1.msra.mxu0 0.0
    %2010 = vmatprep.subr.mxu0 0.0
    %2011 = vmatpush1.msra.mxu0 0.0
    %2012 = vmatprep.subr.mxu0 0.0
    %2013 = vmatpush1.msra.mxu0 0.0
    %2014 = vmatprep.subr.mxu0 0.0
    %2015 = vmatpush1.msra.mxu0 0.0
    %2016 = vmatprep.subr.mxu0 0.0
    %2017 = vmatpush1.msra.mxu0 0.0
    %2018 = vmatprep.subr.mxu0 0.0
    %2019 = vmatpush1.msra.mxu0 0.0
    %2020 = vmatprep.subr.mxu0 0.0
    %2021 = vmatpush1.msra.mxu0 0.0
    %2022 = vmatprep.subr.mxu0 0.0
    %2023 = vmatpush1.msra.mxu0 0.0
    %2024 = vmatprep.subr.mxu0 0.0
    %2025 = vmatpush1.msra.mxu0 0.0
    %2026 = vmatprep.subr.mxu0 0.0
    %2027 = vmatpush1.msra.mxu0 0.0
    %2028 = vmatprep.mubr.f32.mxu0 0.0
    %2029 = vmatmul.mubr.f32.gmra.mrb[0].mxu0 %v1960
    %v2030 = vpop.f32.mrb[0].mxu0
    %v2031 = vadd.f32 %v1942, %v2030
    %v2032 = vpop.f32.mrb[0].mxu0
    %2033 = vmatprep.mubr.f32.mxu0 0.0
    %2034 = vmatmul.mubr.f32.gmra.mrb[0].mxu0 %v1962
    %v2035 = vpop.f32.mrb[0].mxu0
    %v2036 = vadd.f32 %v1957, %v2035
    %v2037 = vpop.f32.mrb[0].mxu0
    %2038 = vdwg.mxu0
    %v2041 = vcombine.high %v2031, %v2031
    %v2043 = vunpack.c.l.s4 1966171168
    %v2044 = vunpack.c.0.s8 %v2043
    %v2045 = vlaneseq
    %v2046 = vshrl.u32 %v2045, 7
    %v2047 = vsub.s32 %v2044, %v2046
    %v2048 = vrot.slane %v2031, %v2047
    %v2050 = vunpack.c.l.s4 1966171168
    %v2051 = vunpack.c.0.s8 %v2050
    %v2052 = vlaneseq
    %v2053 = vshrl.u32 %v2052, 7
    %v2054 = vsub.s32 %v2051, %v2053
    %v2055 = vrot.slane %v2041, %v2054
    %v2056 = vcombine.high %v2048, %v2048
    %v2057 = vcombine.high %v2055, %v2055
    %v2059 = vunpack.c.l.s4 1966171168
    %v2060 = vunpack.c.0.s8 %v2059
    %v2061 = vlaneseq
    %v2062 = vshrl.u32 %v2061, 7
    %v2063 = vsub.s32 %v2060, %v2062
    %v2064 = vrot.slane %v2048, %v2063
    %v2066 = vunpack.c.l.s4 1966171168
    %v2067 = vunpack.c.0.s8 %v2066
    %v2068 = vlaneseq
    %v2069 = vshrl.u32 %v2068, 7
    %v2070 = vsub.s32 %v2067, %v2069
    %v2071 = vrot.slane %v2055, %v2070
    %v2073 = vunpack.c.l.s4 1966171168
    %v2074 = vunpack.c.0.s8 %v2073
    %v2075 = vlaneseq
    %v2076 = vshrl.u32 %v2075, 7
    %v2077 = vsub.s32 %v2074, %v2076
    %v2078 = vrot.slane %v2056, %v2077
    %v2080 = vunpack.c.l.s4 1966171168
    %v2081 = vunpack.c.0.s8 %v2080
    %v2082 = vlaneseq
    %v2083 = vshrl.u32 %v2082, 7
    %v2084 = vsub.s32 %v2081, %v2083
    %v2085 = vrot.slane %v2057, %v2084
    %v2086 = vcombine.high %v2064, %v2064
    %v2087 = vcombine.high %v2071, %v2071
    %v2088 = vcombine.high %v2078, %v2078
    %v2089 = vcombine.high %v2085, %v2085
    %v2091 = vunpack.c.l.s4 1966171168
    %v2092 = vunpack.c.0.s8 %v2091
    %v2093 = vlaneseq
    %v2094 = vshrl.u32 %v2093, 7
    %v2095 = vsub.s32 %v2092, %v2094
    %v2096 = vrot.slane %v2036, %v2095
    %v2097 = vcombine.high %v2096, %v2096
    %v2099 = vunpack.c.l.s4 1966171168
    %v2100 = vunpack.c.0.s8 %v2099
    %v2101 = vlaneseq
    %v2102 = vshrl.u32 %v2101, 7
    %v2103 = vsub.s32 %v2100, %v2102
    %v2104 = vrot.slane %v2096, %v2103
    %v2106 = vunpack.c.l.s4 1966171168
    %v2107 = vunpack.c.0.s8 %v2106
    %v2108 = vlaneseq
    %v2109 = vshrl.u32 %v2108, 7
    %v2110 = vsub.s32 %v2107, %v2109
    %v2111 = vrot.slane %v2097, %v2110
    %v2112 = vcombine.low %v2064, %v2078
    %v2113 = vcombine.low %v2086, %v2088
    %v2115 = vunpack.c.l.s4 1966171168
    %v2116 = vunpack.c.0.s8 %v2115
    %v2117 = vlaneseq
    %v2118 = vshrl.u32 %v2117, 7
    %v2119 = vsub.s32 %v2116, %v2118
    %v2120 = vrot.slane %v2112, %v2119
    %v2122 = vunpack.c.l.s4 1966171168
    %v2123 = vunpack.c.0.s8 %v2122
    %v2124 = vlaneseq
    %v2125 = vshrl.u32 %v2124, 7
    %v2126 = vsub.s32 %v2123, %v2125
    %v2127 = vrot.slane %v2113, %v2126
    %v2129 = vunpack.c.l.s4 1966171168
    %v2130 = vunpack.c.0.s8 %v2129
    %v2131 = vlaneseq
    %v2132 = vshrl.u32 %v2131, 7
    %v2133 = vsub.s32 %v2130, %v2132
    %v2134 = vrot.slane %v2071, %v2133
    %v2135 = vcombine.low %v2120, %v2127
    %v2137 = vunpack.c.l.s4 1966171168
    %v2138 = vunpack.c.0.s8 %v2137
    %v2139 = vlaneseq
    %v2140 = vshrl.u32 %v2139, 7
    %v2141 = vsub.s32 %v2138, %v2140
    %v2142 = vrot.slane %v2135, %v2141
    %v2144 = vunpack.c.l.s4 1966171168
    %v2145 = vunpack.c.0.s8 %v2144
    %v2146 = vlaneseq
    %v2147 = vshrl.u32 %v2146, 7
    %v2148 = vsub.s32 %v2145, %v2147
    %v2149 = vrot.slane %v2134, %v2148
    %v2150 = vcombine.low %v2142, %v2149
    %v2151 = vcombine.low %v2085, %v2087
    %v2152 = vcombine.low %v2089, %v2104
    %v2154 = vunpack.c.l.s4 1966171168
    %v2155 = vunpack.c.0.s8 %v2154
    %v2156 = vlaneseq
    %v2157 = vshrl.u32 %v2156, 7
    %v2158 = vsub.s32 %v2155, %v2157
    %v2159 = vrot.slane %v2151, %v2158
    %v2161 = vunpack.c.l.s4 1966171168
    %v2162 = vunpack.c.0.s8 %v2161
    %v2163 = vlaneseq
    %v2164 = vshrl.u32 %v2163, 7
    %v2165 = vsub.s32 %v2162, %v2164
    %v2166 = vrot.slane %v2152, %v2165
    %v2168 = vunpack.c.l.s4 1966171168
    %v2169 = vunpack.c.0.s8 %v2168
    %v2170 = vlaneseq
    %v2171 = vshrl.u32 %v2170, 7
    %v2172 = vsub.s32 %v2169, %v2171
    %v2173 = vrot.slane %v2111, %v2172
    %v2174 = vcombine.low %v2159, %v2166
    %v2176 = vunpack.c.l.s4 1966171168
    %v2177 = vunpack.c.0.s8 %v2176
    %v2178 = vlaneseq
    %v2179 = vshrl.u32 %v2178, 7
    %v2180 = vsub.s32 %v2177, %v2179
    %v2181 = vrot.slane %v2174, %v2180
    %v2183 = vunpack.c.l.s4 1966171168
    %v2184 = vunpack.c.0.s8 %v2183
    %v2185 = vlaneseq
    %v2186 = vshrl.u32 %v2185, 7
    %v2187 = vsub.s32 %v2184, %v2186
    %v2188 = vrot.slane %v2173, %v2187
    %v2189 = vcombine.low %v2181, %v2188
    %v2192 = vadd.f32 %v200, %v2150
    %v2193 = vadd.f32 %v201, %v2189
    %v2194 = vsel %vm162, %v2192, 0.0
    %2195 = vadd.xlane.f32.xlu0 %v2194
    %v2196 = vpop.xlane.xlu0 %2195
    %v2197 = vsel %vm162, %v2193, 0.0
    %2198 = vadd.xlane.f32.xlu0 %v2197
    %v2199 = vpop.xlane.xlu0 %2198
    %v2200 = vmul.f32 %v2196, %v169
    %v2201 = vmul.f32 %v2199, %v169
    %v2202 = vsub.f32 %v2192, %v2200
    %v2203 = vsub.f32 %v2193, %v2201
    %v2204 = vmul.f32 %v2202, %v2202
    %v2205 = vmul.f32 %v2203, %v2203
    %v2206 = vsel %vm162, %v2204, 0.0
    %2207 = vadd.xlane.f32.xlu0 %v2206
    %v2208 = vpop.xlane.xlu0 %2207
    %v2209 = vsel %vm162, %v2205, 0.0
    %2210 = vadd.xlane.f32.xlu0 %v2209
    %v2211 = vpop.xlane.xlu0 %2210
    %v2212 = vmul.f32 %v2208, %v169
    %v2213 = vmul.f32 %v2211, %v169
    %v2214 = vadd.f32 %v2212, 1e-05
    %v2215 = vadd.f32 %v2213, 1e-05
    %v2216 = vrsqrt.pop %v2214
    %v2217 = vrsqrt.pop %v2215
    %v2218 = vmul.f32 %v2202, %v2216
    %v2219 = vmul.f32 %v2203, %v2217
    %v2220 = vld [vmem:[%s6] sm:$0xff]
    %v2221 = vld [vmem:[%s6 + $0x8] sm:$0xff]
    %v2222 = vld [vmem:[%s6 + $0x10] sm:$0xff]
    %v2223 = vld [vmem:[%s6 + $0x18] sm:$0xff]
    %v2224 = vlaneseq
    %v2225 = vshrl.u32 %v2224, 7
    %v2226 = vsub.s32 2, %v2225
    %v2227 = vrot.slane %v202, %v2226
    %v2230 = vcombine.high %v2218, %v2218
    %v2232 = vunpack.c.l.s4 1966171168
    %v2233 = vunpack.c.0.s8 %v2232
    %v2234 = vlaneseq
    %v2235 = vshrl.u32 %v2234, 7
    %v2236 = vsub.s32 %v2233, %v2235
    %v2237 = vrot.slane %v2218, %v2236
    %v2239 = vunpack.c.l.s4 1966171168
    %v2240 = vunpack.c.0.s8 %v2239
    %v2241 = vlaneseq
    %v2242 = vshrl.u32 %v2241, 7
    %v2243 = vsub.s32 %v2240, %v2242
    %v2244 = vrot.slane %v2230, %v2243
    %v2245 = vcombine.high %v2237, %v2237
    %v2247 = vunpack.c.l.s4 1966171168
    %v2248 = vunpack.c.0.s8 %v2247
    %v2249 = vlaneseq
    %v2250 = vshrl.u32 %v2249, 7
    %v2251 = vsub.s32 %v2248, %v2250
    %v2252 = vrot.slane %v2237, %v2251
    %v2254 = vunpack.c.l.s4 1966171168
    %v2255 = vunpack.c.0.s8 %v2254
    %v2256 = vlaneseq
    %v2257 = vshrl.u32 %v2256, 7
    %v2258 = vsub.s32 %v2255, %v2257
    %v2259 = vrot.slane %v2244, %v2258
    %v2261 = vunpack.c.l.s4 1966171168
    %v2262 = vunpack.c.0.s8 %v2261
    %v2263 = vlaneseq
    %v2264 = vshrl.u32 %v2263, 7
    %v2265 = vsub.s32 %v2262, %v2264
    %v2266 = vrot.slane %v2245, %v2265
    %v2267 = vcombine.high %v2252, %v2252
    %v2268 = vcombine.high %v2266, %v2266
    %v2269 = vcombine.high %v2219, %v2219
    %v2271 = vunpack.c.l.s4 1966171168
    %v2272 = vunpack.c.0.s8 %v2271
    %v2273 = vlaneseq
    %v2274 = vshrl.u32 %v2273, 7
    %v2275 = vsub.s32 %v2272, %v2274
    %v2276 = vrot.slane %v2219, %v2275
    %v2278 = vunpack.c.l.s4 1966171168
    %v2279 = vunpack.c.0.s8 %v2278
    %v2280 = vlaneseq
    %v2281 = vshrl.u32 %v2280, 7
    %v2282 = vsub.s32 %v2279, %v2281
    %v2283 = vrot.slane %v2269, %v2282
    %v2284 = vcombine.high %v2276, %v2276
    %v2286 = vunpack.c.l.s4 1966171168
    %v2287 = vunpack.c.0.s8 %v2286
    %v2288 = vlaneseq
    %v2289 = vshrl.u32 %v2288, 7
    %v2290 = vsub.s32 %v2287, %v2289
    %v2291 = vrot.slane %v2276, %v2290
    %v2293 = vunpack.c.l.s4 1966171168
    %v2294 = vunpack.c.0.s8 %v2293
    %v2295 = vlaneseq
    %v2296 = vshrl.u32 %v2295, 7
    %v2297 = vsub.s32 %v2294, %v2296
    %v2298 = vrot.slane %v2283, %v2297
    %v2300 = vunpack.c.l.s4 1966171168
    %v2301 = vunpack.c.0.s8 %v2300
    %v2302 = vlaneseq
    %v2303 = vshrl.u32 %v2302, 7
    %v2304 = vsub.s32 %v2301, %v2303
    %v2305 = vrot.slane %v2284, %v2304
    %v2306 = vcombine.high %v2291, %v2291
    %v2307 = vcombine.high %v2305, %v2305
    %v2309 = vcombine.high %v2227, %v2227
    %v2311 = vunpack.c.l.s4 1966171168
    %v2312 = vunpack.c.0.s8 %v2311
    %v2313 = vlaneseq
    %v2314 = vshrl.u32 %v2313, 7
    %v2315 = vsub.s32 %v2312, %v2314
    %v2316 = vrot.slane %v2227, %v2315
    %v2318 = vunpack.c.l.s4 1966171168
    %v2319 = vunpack.c.0.s8 %v2318
    %v2320 = vlaneseq
    %v2321 = vshrl.u32 %v2320, 7
    %v2322 = vsub.s32 %v2319, %v2321
    %v2323 = vrot.slane %v2309, %v2322
    %v2324 = vcombine.high %v2316, %v2316
    %v2326 = vunpack.c.l.s4 1966171168
    %v2327 = vunpack.c.0.s8 %v2326
    %v2328 = vlaneseq
    %v2329 = vshrl.u32 %v2328, 7
    %v2330 = vsub.s32 %v2327, %v2329
    %v2331 = vrot.slane %v2316, %v2330
    %v2333 = vunpack.c.l.s4 1966171168
    %v2334 = vunpack.c.0.s8 %v2333
    %v2335 = vlaneseq
    %v2336 = vshrl.u32 %v2335, 7
    %v2337 = vsub.s32 %v2334, %v2336
    %v2338 = vrot.slane %v2323, %v2337
    %v2340 = vunpack.c.l.s4 1966171168
    %v2341 = vunpack.c.0.s8 %v2340
    %v2342 = vlaneseq
    %v2343 = vshrl.u32 %v2342, 7
    %v2344 = vsub.s32 %v2341, %v2343
    %v2345 = vrot.slane %v2324, %v2344
    %v2346 = vcombine.high %v2331, %v2331
    %v2347 = vcombine.high %v2345, %v2345
    %v2348 = vcombine.low %v2252, %v2266
    %v2349 = vcombine.low %v2267, %v2268
    %v2350 = vcombine.low %v2259, %v2291
    %v2351 = vcombine.low %v2305, %v2306
    %v2353 = vunpack.c.l.s4 1966171168
    %v2354 = vunpack.c.0.s8 %v2353
    %v2355 = vlaneseq
    %v2356 = vshrl.u32 %v2355, 7
    %v2357 = vsub.s32 %v2354, %v2356
    %v2358 = vrot.slane %v2348, %v2357
    %v2360 = vunpack.c.l.s4 1966171168
    %v2361 = vunpack.c.0.s8 %v2360
    %v2362 = vlaneseq
    %v2363 = vshrl.u32 %v2362, 7
    %v2364 = vsub.s32 %v2361, %v2363
    %v2365 = vrot.slane %v2349, %v2364
    %v2367 = vunpack.c.l.s4 1966171168
    %v2368 = vunpack.c.0.s8 %v2367
    %v2369 = vlaneseq
    %v2370 = vshrl.u32 %v2369, 7
    %v2371 = vsub.s32 %v2368, %v2370
    %v2372 = vrot.slane %v2350, %v2371
    %v2374 = vunpack.c.l.s4 1966171168
    %v2375 = vunpack.c.0.s8 %v2374
    %v2376 = vlaneseq
    %v2377 = vshrl.u32 %v2376, 7
    %v2378 = vsub.s32 %v2375, %v2377
    %v2379 = vrot.slane %v2351, %v2378
    %v2380 = vcombine.low %v2358, %v2365
    %v2381 = vcombine.low %v2372, %v2379
    %v2383 = vunpack.c.l.s4 1966171168
    %v2384 = vunpack.c.0.s8 %v2383
    %v2385 = vlaneseq
    %v2386 = vshrl.u32 %v2385, 7
    %v2387 = vsub.s32 %v2384, %v2386
    %v2388 = vrot.slane %v2380, %v2387
    %v2390 = vunpack.c.l.s4 1966171168
    %v2391 = vunpack.c.0.s8 %v2390
    %v2392 = vlaneseq
    %v2393 = vshrl.u32 %v2392, 7
    %v2394 = vsub.s32 %v2391, %v2393
    %v2395 = vrot.slane %v2381, %v2394
    %v2396 = vcombine.low %v2388, %v2395
    %v2397 = vcombine.low %v2307, %v2298
    %v2399 = vunpack.c.l.s4 1966171168
    %v2400 = vunpack.c.0.s8 %v2399
    %v2401 = vlaneseq
    %v2402 = vshrl.u32 %v2401, 7
    %v2403 = vsub.s32 %v2400, %v2402
    %v2404 = vrot.slane %v2397, %v2403
    %v2406 = vunpack.c.l.s4 1966171168
    %v2407 = vunpack.c.0.s8 %v2406
    %v2408 = vlaneseq
    %v2409 = vshrl.u32 %v2408, 7
    %v2410 = vsub.s32 %v2407, %v2409
    %v2411 = vrot.slane %v2404, %v2410
    %v2412 = vcombine.low %v2331, %v2345
    %v2413 = vcombine.low %v2346, %v2347
    %v2414 = vcombine.low %v2338, %v2331
    %v2415 = vcombine.low %v2345, %v2346
    %v2417 = vunpack.c.l.s4 1966171168
    %v2418 = vunpack.c.0.s8 %v2417
    %v2419 = vlaneseq
    %v2420 = vshrl.u32 %v2419, 7
    %v2421 = vsub.s32 %v2418, %v2420
    %v2422 = vrot.slane %v2412, %v2421
    %v2424 = vunpack.c.l.s4 1966171168
    %v2425 = vunpack.c.0.s8 %v2424
    %v2426 = vlaneseq
    %v2427 = vshrl.u32 %v2426, 7
    %v2428 = vsub.s32 %v2425, %v2427
    %v2429 = vrot.slane %v2413, %v2428
    %v2431 = vunpack.c.l.s4 1966171168
    %v2432 = vunpack.c.0.s8 %v2431
    %v2433 = vlaneseq
    %v2434 = vshrl.u32 %v2433, 7
    %v2435 = vsub.s32 %v2432, %v2434
    %v2436 = vrot.slane %v2414, %v2435
    %v2438 = vunpack.c.l.s4 1966171168
    %v2439 = vunpack.c.0.s8 %v2438
    %v2440 = vlaneseq
    %v2441 = vshrl.u32 %v2440, 7
    %v2442 = vsub.s32 %v2439, %v2441
    %v2443 = vrot.slane %v2415, %v2442
    %v2444 = vcombine.low %v2422, %v2429
    %v2445 = vcombine.low %v2436, %v2443
    %v2447 = vunpack.c.l.s4 1966171168
    %v2448 = vunpack.c.0.s8 %v2447
    %v2449 = vlaneseq
    %v2450 = vshrl.u32 %v2449, 7
    %v2451 = vsub.s32 %v2448, %v2450
    %v2452 = vrot.slane %v2444, %v2451
    %v2454 = vunpack.c.l.s4 1966171168
    %v2455 = vunpack.c.0.s8 %v2454
    %v2456 = vlaneseq
    %v2457 = vshrl.u32 %v2456, 7
    %v2458 = vsub.s32 %v2455, %v2457
    %v2459 = vrot.slane %v2445, %v2458
    %v2460 = vcombine.low %v2452, %v2459
    %v2461 = vcombine.low %v2347, %v2338
    %v2463 = vunpack.c.l.s4 1966171168
    %v2464 = vunpack.c.0.s8 %v2463
    %v2465 = vlaneseq
    %v2466 = vshrl.u32 %v2465, 7
    %v2467 = vsub.s32 %v2464, %v2466
    %v2468 = vrot.slane %v2461, %v2467
    %v2470 = vunpack.c.l.s4 1966171168
    %v2471 = vunpack.c.0.s8 %v2470
    %v2472 = vlaneseq
    %v2473 = vshrl.u32 %v2472, 7
    %v2474 = vsub.s32 %v2471, %v2473
    %v2475 = vrot.slane %v2468, %v2474
    %v2478 = vsel %vm487, %v2396, 0
    %v2480 = vsel %vm487, %v2411, 0
    %2482 = vmatprep.subr.mxu0 0.0
    %2483 = vmatpush1.msra.mxu0 %v2220
    %2484 = vmatprep.subr.mxu0 0.0
    %2485 = vmatpush1.msra.mxu0 %v2221
    %2486 = vmatprep.subr.mxu0 0.0
    %2487 = vmatpush1.msra.mxu0 %v2222
    %2488 = vmatprep.subr.mxu0 0.0
    %2489 = vmatpush1.msra.mxu0 %v2223
    %2490 = vmatprep.subr.mxu0 0.0
    %2491 = vmatpush1.msra.mxu0 0.0
    %2492 = vmatprep.subr.mxu0 0.0
    %2493 = vmatpush1.msra.mxu0 0.0
    %2494 = vmatprep.subr.mxu0 0.0
    %2495 = vmatpush1.msra.mxu0 0.0
    %2496 = vmatprep.subr.mxu0 0.0
    %2497 = vmatpush1.msra.mxu0 0.0
    %2498 = vmatprep.subr.mxu0 0.0
    %2499 = vmatpush1.msra.mxu0 0.0
    %2500 = vmatprep.subr.mxu0 0.0
    %2501 = vmatpush1.msra.mxu0 0.0
    %2502 = vmatprep.subr.mxu0 0.0
    %2503 = vmatpush1.msra.mxu0 0.0
    %2504 = vmatprep.subr.mxu0 0.0
    %2505 = vmatpush1.msra.mxu0 0.0
    %2506 = vmatprep.subr.mxu0 0.0
    %2507 = vmatpush1.msra.mxu0 0.0
    %2508 = vmatprep.subr.mxu0 0.0
    %2509 = vmatpush1.msra.mxu0 0.0
    %2510 = vmatprep.subr.mxu0 0.0
    %2511 = vmatpush1.msra.mxu0 0.0
    %2512 = vmatprep.subr.mxu0 0.0
    %2513 = vmatpush1.msra.mxu0 0.0
    %2514 = vmatprep.subr.mxu0 0.0
    %2515 = vmatpush1.msra.mxu0 0.0
    %2516 = vmatprep.subr.mxu0 0.0
    %2517 = vmatpush1.msra.mxu0 0.0
    %2518 = vmatprep.subr.mxu0 0.0
    %2519 = vmatpush1.msra.mxu0 0.0
    %2520 = vmatprep.subr.mxu0 0.0
    %2521 = vmatpush1.msra.mxu0 0.0
    %2522 = vmatprep.subr.mxu0 0.0
    %2523 = vmatpush1.msra.mxu0 0.0
    %2524 = vmatprep.subr.mxu0 0.0
    %2525 = vmatpush1.msra.mxu0 0.0
    %2526 = vmatprep.subr.mxu0 0.0
    %2527 = vmatpush1.msra.mxu0 0.0
    %2528 = vmatprep.subr.mxu0 0.0
    %2529 = vmatpush1.msra.mxu0 0.0
    %2530 = vmatprep.subr.mxu0 0.0
    %2531 = vmatpush1.msra.mxu0 0.0
    %2532 = vmatprep.subr.mxu0 0.0
    %2533 = vmatpush1.msra.mxu0 0.0
    %2534 = vmatprep.subr.mxu0 0.0
    %2535 = vmatpush1.msra.mxu0 0.0
    %2536 = vmatprep.subr.mxu0 0.0
    %2537 = vmatpush1.msra.mxu0 0.0
    %2538 = vmatprep.subr.mxu0 0.0
    %2539 = vmatpush1.msra.mxu0 0.0
    %2540 = vmatprep.subr.mxu0 0.0
    %2541 = vmatpush1.msra.mxu0 0.0
    %2542 = vmatprep.subr.mxu0 0.0
    %2543 = vmatpush1.msra.mxu0 0.0
    %2544 = vmatprep.subr.mxu0 0.0
    %2545 = vmatpush1.msra.mxu0 0.0
    %2546 = vmatprep.mubr.f32.mxu0 0.0
    %2547 = vmatmul.mubr.f32.gmra.mrb[0].mxu0 %v2478
    %v2548 = vpop.f32.mrb[0].mxu0
    %v2549 = vadd.f32 %v2460, %v2548
    %v2550 = vpop.f32.mrb[0].mxu0
    %2551 = vmatprep.mubr.f32.mxu0 0.0
    %2552 = vmatmul.mubr.f32.gmra.mrb[0].mxu0 %v2480
    %v2553 = vpop.f32.mrb[0].mxu0
    %v2554 = vadd.f32 %v2475, %v2553
    %v2555 = vpop.f32.mrb[0].mxu0
    %2556 = vdwg.mxu0
    %v2559 = vcombine.high %v2549, %v2549
    %v2561 = vunpack.c.l.s4 1966171168
    %v2562 = vunpack.c.0.s8 %v2561
    %v2563 = vlaneseq
    %v2564 = vshrl.u32 %v2563, 7
    %v2565 = vsub.s32 %v2562, %v2564
    %v2566 = vrot.slane %v2549, %v2565
    %v2568 = vunpack.c.l.s4 1966171168
    %v2569 = vunpack.c.0.s8 %v2568
    %v2570 = vlaneseq
    %v2571 = vshrl.u32 %v2570, 7
    %v2572 = vsub.s32 %v2569, %v2571
    %v2573 = vrot.slane %v2559, %v2572
    %v2574 = vcombine.high %v2566, %v2566
    %v2575 = vcombine.high %v2573, %v2573
    %v2577 = vunpack.c.l.s4 1966171168
    %v2578 = vunpack.c.0.s8 %v2577
    %v2579 = vlaneseq
    %v2580 = vshrl.u32 %v2579, 7
    %v2581 = vsub.s32 %v2578, %v2580
    %v2582 = vrot.slane %v2566, %v2581
    %v2584 = vunpack.c.l.s4 1966171168
    %v2585 = vunpack.c.0.s8 %v2584
    %v2586 = vlaneseq
    %v2587 = vshrl.u32 %v2586, 7
    %v2588 = vsub.s32 %v2585, %v2587
    %v2589 = vrot.slane %v2573, %v2588
    %v2591 = vunpack.c.l.s4 1966171168
    %v2592 = vunpack.c.0.s8 %v2591
    %v2593 = vlaneseq
    %v2594 = vshrl.u32 %v2593, 7
    %v2595 = vsub.s32 %v2592, %v2594
    %v2596 = vrot.slane %v2574, %v2595
    %v2598 = vunpack.c.l.s4 1966171168
    %v2599 = vunpack.c.0.s8 %v2598
    %v2600 = vlaneseq
    %v2601 = vshrl.u32 %v2600, 7
    %v2602 = vsub.s32 %v2599, %v2601
    %v2603 = vrot.slane %v2575, %v2602
    %v2604 = vcombine.high %v2582, %v2582
    %v2605 = vcombine.high %v2589, %v2589
    %v2606 = vcombine.high %v2596, %v2596
    %v2607 = vcombine.high %v2603, %v2603
    %v2609 = vunpack.c.l.s4 1966171168
    %v2610 = vunpack.c.0.s8 %v2609
    %v2611 = vlaneseq
    %v2612 = vshrl.u32 %v2611, 7
    %v2613 = vsub.s32 %v2610, %v2612
    %v2614 = vrot.slane %v2554, %v2613
    %v2615 = vcombine.high %v2614, %v2614
    %v2617 = vunpack.c.l.s4 1966171168
    %v2618 = vunpack.c.0.s8 %v2617
    %v2619 = vlaneseq
    %v2620 = vshrl.u32 %v2619, 7
    %v2621 = vsub.s32 %v2618, %v2620
    %v2622 = vrot.slane %v2614, %v2621
    %v2624 = vunpack.c.l.s4 1966171168
    %v2625 = vunpack.c.0.s8 %v2624
    %v2626 = vlaneseq
    %v2627 = vshrl.u32 %v2626, 7
    %v2628 = vsub.s32 %v2625, %v2627
    %v2629 = vrot.slane %v2615, %v2628
    %v2640 = vmul.f32 %v2582, 1.702
    %v2641 = vmul.f32 %v2596, 1.702
    %v2642 = vmul.f32 %v2604, 1.702
    %v2643 = vmul.f32 %v2606, 1.702
    %v2644 = vmul.f32 %v2589, 1.702
    %v2645 = vmul.f32 %v2603, 1.702
    %v2646 = vmul.f32 %v2605, 1.702
    %v2647 = vmul.f32 %v2607, 1.702
    %v2648 = vmul.f32 %v2622, 1.702
    %v2649 = vmul.f32 %v2629, 1.702
    %v2650 = vxor.u32 %v2640, 2147483648
    %v2651 = vxor.u32 %v2641, 2147483648
    %v2652 = vxor.u32 %v2642, 2147483648
    %v2653 = vxor.u32 %v2643, 2147483648
    %v2654 = vxor.u32 %v2644, 2147483648
    %v2655 = vxor.u32 %v2645, 2147483648
    %v2656 = vxor.u32 %v2646, 2147483648
    %v2657 = vxor.u32 %v2647, 2147483648
    %v2658 = vxor.u32 %v2648, 2147483648
    %v2659 = vxor.u32 %v2649, 2147483648
    %v2660 = vmul.f32 %v2650, 1.442695
    %v2661 = vpow.pop %v2660
    %v2662 = vmul.f32 %v2651, 1.442695
    %v2663 = vpow.pop %v2662
    %v2664 = vmul.f32 %v2652, 1.442695
    %v2665 = vpow.pop %v2664
    %v2666 = vmul.f32 %v2653, 1.442695
    %v2667 = vpow.pop %v2666
    %v2668 = vmul.f32 %v2654, 1.442695
    %v2669 = vpow.pop %v2668
    %v2670 = vmul.f32 %v2655, 1.442695
    %v2671 = vpow.pop %v2670
    %v2672 = vmul.f32 %v2656, 1.442695
    %v2673 = vpow.pop %v2672
    %v2674 = vmul.f32 %v2657, 1.442695
    %v2675 = vpow.pop %v2674
    %v2676 = vmul.f32 %v2658, 1.442695
    %v2677 = vpow.pop %v2676
    %v2678 = vmul.f32 %v2659, 1.442695
    %v2679 = vpow.pop %v2678
    %v2680 = vadd.f32 %v2661, 1.0
    %v2681 = vadd.f32 %v2663, 1.0
    %v2682 = vadd.f32 %v2665, 1.0
    %v2683 = vadd.f32 %v2667, 1.0
    %v2684 = vadd.f32 %v2669, 1.0
    %v2685 = vadd.f32 %v2671, 1.0
    %v2686 = vadd.f32 %v2673, 1.0
    %v2687 = vadd.f32 %v2675, 1.0
    %v2688 = vadd.f32 %v2677, 1.0
    %v2689 = vadd.f32 %v2679, 1.0
    %v2690 = vrcp.pop %v2680
    %v2691 = vmul.f32 1.0, %v2690
    %v2692 = vrcp.pop %v2681
    %v2693 = vmul.f32 1.0, %v2692
    %v2694 = vrcp.pop %v2682
    %v2695 = vmul.f32 1.0, %v2694
    %v2696 = vrcp.pop %v2683
    %v2697 = vmul.f32 1.0, %v2696
    %v2698 = vrcp.pop %v2684
    %v2699 = vmul.f32 1.0, %v2698
    %v2700 = vrcp.pop %v2685
    %v2701 = vmul.f32 1.0, %v2700
    %v2702 = vrcp.pop %v2686
    %v2703 = vmul.f32 1.0, %v2702
    %v2704 = vrcp.pop %v2687
    %v2705 = vmul.f32 1.0, %v2704
    %v2706 = vrcp.pop %v2688
    %v2707 = vmul.f32 1.0, %v2706
    %v2708 = vrcp.pop %v2689
    %v2709 = vmul.f32 1.0, %v2708
    %v2710 = vmul.f32 %v2582, %v2691
    %v2711 = vmul.f32 %v2596, %v2693
    %v2712 = vmul.f32 %v2604, %v2695
    %v2713 = vmul.f32 %v2606, %v2697
    %v2714 = vmul.f32 %v2589, %v2699
    %v2715 = vmul.f32 %v2603, %v2701
    %v2716 = vmul.f32 %v2605, %v2703
    %v2717 = vmul.f32 %v2607, %v2705
    %v2718 = vmul.f32 %v2622, %v2707
    %v2719 = vmul.f32 %v2629, %v2709
    %v2720 = vld [vmem:[%s7] sm:$0xff]
    %v2721 = vld [vmem:[%s7 + $0x8] sm:$0xff]
    %v2722 = vld [vmem:[%s7 + $0x10] sm:$0xff]
    %v2723 = vld [vmem:[%s7 + $0x18] sm:$0xff]
    %v2724 = vld [vmem:[%s7 + $0x20] sm:$0xff]
    %v2725 = vld [vmem:[%s7 + $0x28] sm:$0xff]
    %v2726 = vld [vmem:[%s7 + $0x30] sm:$0xff]
    %v2727 = vld [vmem:[%s7 + $0x38] sm:$0xff]
    %v2728 = vld [vmem:[%s7 + $0x40] sm:$0xff]
    %v2729 = vld [vmem:[%s7 + $0x48] sm:$0xff]
    %v2730 = vld [vmem:[%s7 + $0x50] sm:$0xff]
    %v2731 = vld [vmem:[%s7 + $0x58] sm:$0xff]
    %v2732 = vld [vmem:[%s7 + $0x60] sm:$0xff]
    %v2733 = vld [vmem:[%s7 + $0x68] sm:$0xff]
    %v2734 = vld [vmem:[%s7 + $0x70] sm:$0xff]
    %v2735 = vld [vmem:[%s7 + $0x78] sm:$0xff]
    %v2736 = vlaneseq
    %v2737 = vshrl.u32 %v2736, 7
    %v2738 = vsub.s32 3, %v2737
    %v2739 = vrot.slane %v202, %v2738
    %v2741 = vcombine.high %v2739, %v2739
    %v2743 = vunpack.c.l.s4 1966171168
    %v2744 = vunpack.c.0.s8 %v2743
    %v2745 = vlaneseq
    %v2746 = vshrl.u32 %v2745, 7
    %v2747 = vsub.s32 %v2744, %v2746
    %v2748 = vrot.slane %v2739, %v2747
    %v2750 = vunpack.c.l.s4 1966171168
    %v2751 = vunpack.c.0.s8 %v2750
    %v2752 = vlaneseq
    %v2753 = vshrl.u32 %v2752, 7
    %v2754 = vsub.s32 %v2751, %v2753
    %v2755 = vrot.slane %v2741, %v2754
    %v2756 = vcombine.high %v2748, %v2748
    %v2758 = vunpack.c.l.s4 1966171168
    %v2759 = vunpack.c.0.s8 %v2758
    %v2760 = vlaneseq
    %v2761 = vshrl.u32 %v2760, 7
    %v2762 = vsub.s32 %v2759, %v2761
    %v2763 = vrot.slane %v2748, %v2762
    %v2765 = vunpack.c.l.s4 1966171168
    %v2766 = vunpack.c.0.s8 %v2765
    %v2767 = vlaneseq
    %v2768 = vshrl.u32 %v2767, 7
    %v2769 = vsub.s32 %v2766, %v2768
    %v2770 = vrot.slane %v2755, %v2769
    %v2772 = vunpack.c.l.s4 1966171168
    %v2773 = vunpack.c.0.s8 %v2772
    %v2774 = vlaneseq
    %v2775 = vshrl.u32 %v2774, 7
    %v2776 = vsub.s32 %v2773, %v2775
    %v2777 = vrot.slane %v2756, %v2776
    %v2778 = vcombine.high %v2763, %v2763
    %v2779 = vcombine.high %v2777, %v2777
    %v2790 = vcombine.low %v2710, %v2711
    %v2791 = vcombine.low %v2712, %v2713
    %v2792 = vcombine.low %v2714, %v2715
    %v2793 = vcombine.low %v2716, %v2717
    %v2795 = vunpack.c.l.s4 1966171168
    %v2796 = vunpack.c.0.s8 %v2795
    %v2797 = vlaneseq
    %v2798 = vshrl.u32 %v2797, 7
    %v2799 = vsub.s32 %v2796, %v2798
    %v2800 = vrot.slane %v2790, %v2799
    %v2802 = vunpack.c.l.s4 1966171168
    %v2803 = vunpack.c.0.s8 %v2802
    %v2804 = vlaneseq
    %v2805 = vshrl.u32 %v2804, 7
    %v2806 = vsub.s32 %v2803, %v2805
    %v2807 = vrot.slane %v2791, %v2806
    %v2809 = vunpack.c.l.s4 1966171168
    %v2810 = vunpack.c.0.s8 %v2809
    %v2811 = vlaneseq
    %v2812 = vshrl.u32 %v2811, 7
    %v2813 = vsub.s32 %v2810, %v2812
    %v2814 = vrot.slane %v2792, %v2813
    %v2816 = vunpack.c.l.s4 1966171168
    %v2817 = vunpack.c.0.s8 %v2816
    %v2818 = vlaneseq
    %v2819 = vshrl.u32 %v2818, 7
    %v2820 = vsub.s32 %v2817, %v2819
    %v2821 = vrot.slane %v2793, %v2820
    %v2822 = vcombine.low %v2800, %v2807
    %v2823 = vcombine.low %v2814, %v2821
    %v2825 = vunpack.c.l.s4 1966171168
    %v2826 = vunpack.c.0.s8 %v2825
    %v2827 = vlaneseq
    %v2828 = vshrl.u32 %v2827, 7
    %v2829 = vsub.s32 %v2826, %v2828
    %v2830 = vrot.slane %v2822, %v2829
    %v2832 = vunpack.c.l.s4 1966171168
    %v2833 = vunpack.c.0.s8 %v2832
    %v2834 = vlaneseq
    %v2835 = vshrl.u32 %v2834, 7
    %v2836 = vsub.s32 %v2833, %v2835
    %v2837 = vrot.slane %v2823, %v2836
    %v2838 = vcombine.low %v2830, %v2837
    %v2839 = vcombine.low %v2718, %v2719
    %v2841 = vunpack.c.l.s4 1966171168
    %v2842 = vunpack.c.0.s8 %v2841
    %v2843 = vlaneseq
    %v2844 = vshrl.u32 %v2843, 7
    %v2845 = vsub.s32 %v2842, %v2844
    %v2846 = vrot.slane %v2839, %v2845
    %v2848 = vunpack.c.l.s4 1966171168
    %v2849 = vunpack.c.0.s8 %v2848
    %v2850 = vlaneseq
    %v2851 = vshrl.u32 %v2850, 7
    %v2852 = vsub.s32 %v2849, %v2851
    %v2853 = vrot.slane %v2846, %v2852
    %v2856 = vcombine.low %v2763, %v2777
    %v2857 = vcombine.low %v2778, %v2779
    %v2858 = vcombine.low %v2770, %v2763
    %v2859 = vcombine.low %v2777, %v2778
    %v2861 = vunpack.c.l.s4 1966171168
    %v2862 = vunpack.c.0.s8 %v2861
    %v2863 = vlaneseq
    %v2864 = vshrl.u32 %v2863, 7
    %v2865 = vsub.s32 %v2862, %v2864
    %v2866 = vrot.slane %v2856, %v2865
    %v2868 = vunpack.c.l.s4 1966171168
    %v2869 = vunpack.c.0.s8 %v2868
    %v2870 = vlaneseq
    %v2871 = vshrl.u32 %v2870, 7
    %v2872 = vsub.s32 %v2869, %v2871
    %v2873 = vrot.slane %v2857, %v2872
    %v2875 = vunpack.c.l.s4 1966171168
    %v2876 = vunpack.c.0.s8 %v2875
    %v2877 = vlaneseq
    %v2878 = vshrl.u32 %v2877, 7
    %v2879 = vsub.s32 %v2876, %v2878
    %v2880 = vrot.slane %v2858, %v2879
    %v2882 = vunpack.c.l.s4 1966171168
    %v2883 = vunpack.c.0.s8 %v2882
    %v2884 = vlaneseq
    %v2885 = vshrl.u32 %v2884, 7
    %v2886 = vsub.s32 %v2883, %v2885
    %v2887 = vrot.slane %v2859, %v2886
    %v2888 = vcombine.low %v2866, %v2873
    %v2889 = vcombine.low %v2880, %v2887
    %v2891 = vunpack.c.l.s4 1966171168
    %v2892 = vunpack.c.0.s8 %v2891
    %v2893 = vlaneseq
    %v2894 = vshrl.u32 %v2893, 7
    %v2895 = vsub.s32 %v2892, %v2894
    %v2896 = vrot.slane %v2888, %v2895
    %v2898 = vunpack.c.l.s4 1966171168
    %v2899 = vunpack.c.0.s8 %v2898
    %v2900 = vlaneseq
    %v2901 = vshrl.u32 %v2900, 7
    %v2902 = vsub.s32 %v2899, %v2901
    %v2903 = vrot.slane %v2889, %v2902
    %v2904 = vcombine.low %v2896, %v2903
    %v2905 = vcombine.low %v2779, %v2770
    %v2907 = vunpack.c.l.s4 1966171168
    %v2908 = vunpack.c.0.s8 %v2907
    %v2909 = vlaneseq
    %v2910 = vshrl.u32 %v2909, 7
    %v2911 = vsub.s32 %v2908, %v2910
    %v2912 = vrot.slane %v2905, %v2911
    %v2914 = vunpack.c.l.s4 1966171168
    %v2915 = vunpack.c.0.s8 %v2914
    %v2916 = vlaneseq
    %v2917 = vshrl.u32 %v2916, 7
    %v2918 = vsub.s32 %v2915, %v2917
    %v2919 = vrot.slane %v2912, %v2918
    %2922 = vmatprep.subr.mxu0 0.0
    %2923 = vmatpush1.msra.mxu0 %v2720
    %2924 = vmatprep.subr.mxu0 0.0
    %2925 = vmatpush1.msra.mxu0 %v2721
    %2926 = vmatprep.subr.mxu0 0.0
    %2927 = vmatpush1.msra.mxu0 %v2722
    %2928 = vmatprep.subr.mxu0 0.0
    %2929 = vmatpush1.msra.mxu0 %v2723
    %2930 = vmatprep.subr.mxu0 0.0
    %2931 = vmatpush1.msra.mxu0 %v2724
    %2932 = vmatprep.subr.mxu0 0.0
    %2933 = vmatpush1.msra.mxu0 %v2725
    %2934 = vmatprep.subr.mxu0 0.0
    %2935 = vmatpush1.msra.mxu0 %v2726
    %2936 = vmatprep.subr.mxu0 0.0
    %2937 = vmatpush1.msra.mxu0 %v2727
    %2938 = vmatprep.subr.mxu0 0.0
    %2939 = vmatpush1.msra.mxu0 %v2728
    %2940 = vmatprep.subr.mxu0 0.0
    %2941 = vmatpush1.msra.mxu0 %v2729
    %2942 = vmatprep.subr.mxu0 0.0
    %2943 = vmatpush1.msra.mxu0 %v2730
    %2944 = vmatprep.subr.mxu0 0.0
    %2945 = vmatpush1.msra.mxu0 %v2731
    %2946 = vmatprep.subr.mxu0 0.0
    %2947 = vmatpush1.msra.mxu0 %v2732
    %2948 = vmatprep.subr.mxu0 0.0
    %2949 = vmatpush1.msra.mxu0 %v2733
    %2950 = vmatprep.subr.mxu0 0.0
    %2951 = vmatpush1.msra.mxu0 %v2734
    %2952 = vmatprep.subr.mxu0 0.0
    %2953 = vmatpush1.msra.mxu0 %v2735
    %2954 = vmatprep.subr.mxu0 0.0
    %2955 = vmatpush1.msra.mxu0 0.0
    %2956 = vmatprep.subr.mxu0 0.0
    %2957 = vmatpush1.msra.mxu0 0.0
    %2958 = vmatprep.subr.mxu0 0.0
    %2959 = vmatpush1.msra.mxu0 0.0
    %2960 = vmatprep.subr.mxu0 0.0
    %2961 = vmatpush1.msra.mxu0 0.0
    %2962 = vmatprep.subr.mxu0 0.0
    %2963 = vmatpush1.msra.mxu0 0.0
    %2964 = vmatprep.subr.mxu0 0.0
    %2965 = vmatpush1.msra.mxu0 0.0
    %2966 = vmatprep.subr.mxu0 0.0
    %2967 = vmatpush1.msra.mxu0 0.0
    %2968 = vmatprep.subr.mxu0 0.0
    %2969 = vmatpush1.msra.mxu0 0.0
    %2970 = vmatprep.subr.mxu0 0.0
    %2971 = vmatpush1.msra.mxu0 0.0
    %2972 = vmatprep.subr.mxu0 0.0
    %2973 = vmatpush1.msra.mxu0 0.0
    %2974 = vmatprep.subr.mxu0 0.0
    %2975 = vmatpush1.msra.mxu0 0.0
    %2976 = vmatprep.subr.mxu0 0.0
    %2977 = vmatpush1.msra.mxu0 0.0
    %2978 = vmatprep.subr.mxu0 0.0
    %2979 = vmatpush1.msra.mxu0 0.0
    %2980 = vmatprep.subr.mxu0 0.0
    %2981 = vmatpush1.msra.mxu0 0.0
    %2982 = vmatprep.subr.mxu0 0.0
    %2983 = vmatpush1.msra.mxu0 0.0
    %2984 = vmatprep.subr.mxu0 0.0
    %2985 = vmatpush1.msra.mxu0 0.0
    %2986 = vmatprep.mubr.f32.mxu0 0.0
    %2987 = vmatmul.mubr.f32.gmra.mrb[0].mxu0 %v2838
    %v2988 = vpop.f32.mrb[0].mxu0
    %v2989 = vadd.f32 %v2904, %v2988
    %v2990 = vpop.f32.mrb[0].mxu0
    %2991 = vmatprep.mubr.f32.mxu0 0.0
    %2992 = vmatmul.mubr.f32.gmra.mrb[0].mxu0 %v2853
    %v2993 = vpop.f32.mrb[0].mxu0
    %v2994 = vadd.f32 %v2919, %v2993
    %v2995 = vpop.f32.mrb[0].mxu0
    %2996 = vdwg.mxu0
    %v2999 = vcombine.high %v2989, %v2989
    %v3001 = vunpack.c.l.s4 1966171168
    %v3002 = vunpack.c.0.s8 %v3001
    %v3003 = vlaneseq
    %v3004 = vshrl.u32 %v3003, 7
    %v3005 = vsub.s32 %v3002, %v3004
    %v3006 = vrot.slane %v2989, %v3005
    %v3008 = vunpack.c.l.s4 1966171168
    %v3009 = vunpack.c.0.s8 %v3008
    %v3010 = vlaneseq
    %v3011 = vshrl.u32 %v3010, 7
    %v3012 = vsub.s32 %v3009, %v3011
    %v3013 = vrot.slane %v2999, %v3012
    %v3014 = vcombine.high %v3006, %v3006
    %v3015 = vcombine.high %v3013, %v3013
    %v3017 = vunpack.c.l.s4 1966171168
    %v3018 = vunpack.c.0.s8 %v3017
    %v3019 = vlaneseq
    %v3020 = vshrl.u32 %v3019, 7
    %v3021 = vsub.s32 %v3018, %v3020
    %v3022 = vrot.slane %v3006, %v3021
    %v3024 = vunpack.c.l.s4 1966171168
    %v3025 = vunpack.c.0.s8 %v3024
    %v3026 = vlaneseq
    %v3027 = vshrl.u32 %v3026, 7
    %v3028 = vsub.s32 %v3025, %v3027
    %v3029 = vrot.slane %v3013, %v3028
    %v3031 = vunpack.c.l.s4 1966171168
    %v3032 = vunpack.c.0.s8 %v3031
    %v3033 = vlaneseq
    %v3034 = vshrl.u32 %v3033, 7
    %v3035 = vsub.s32 %v3032, %v3034
    %v3036 = vrot.slane %v3014, %v3035
    %v3038 = vunpack.c.l.s4 1966171168
    %v3039 = vunpack.c.0.s8 %v3038
    %v3040 = vlaneseq
    %v3041 = vshrl.u32 %v3040, 7
    %v3042 = vsub.s32 %v3039, %v3041
    %v3043 = vrot.slane %v3015, %v3042
    %v3044 = vcombine.high %v3022, %v3022
    %v3045 = vcombine.high %v3029, %v3029
    %v3046 = vcombine.high %v3036, %v3036
    %v3047 = vcombine.high %v3043, %v3043
    %v3049 = vunpack.c.l.s4 1966171168
    %v3050 = vunpack.c.0.s8 %v3049
    %v3051 = vlaneseq
    %v3052 = vshrl.u32 %v3051, 7
    %v3053 = vsub.s32 %v3050, %v3052
    %v3054 = vrot.slane %v2994, %v3053
    %v3055 = vcombine.high %v3054, %v3054
    %v3057 = vunpack.c.l.s4 1966171168
    %v3058 = vunpack.c.0.s8 %v3057
    %v3059 = vlaneseq
    %v3060 = vshrl.u32 %v3059, 7
    %v3061 = vsub.s32 %v3058, %v3060
    %v3062 = vrot.slane %v3054, %v3061
    %v3064 = vunpack.c.l.s4 1966171168
    %v3065 = vunpack.c.0.s8 %v3064
    %v3066 = vlaneseq
    %v3067 = vshrl.u32 %v3066, 7
    %v3068 = vsub.s32 %v3065, %v3067
    %v3069 = vrot.slane %v3055, %v3068
    %v3070 = vcombine.low %v3022, %v3036
    %v3071 = vcombine.low %v3044, %v3046
    %v3073 = vunpack.c.l.s4 1966171168
    %v3074 = vunpack.c.0.s8 %v3073
    %v3075 = vlaneseq
    %v3076 = vshrl.u32 %v3075, 7
    %v3077 = vsub.s32 %v3074, %v3076
    %v3078 = vrot.slane %v3070, %v3077
    %v3080 = vunpack.c.l.s4 1966171168
    %v3081 = vunpack.c.0.s8 %v3080
    %v3082 = vlaneseq
    %v3083 = vshrl.u32 %v3082, 7
    %v3084 = vsub.s32 %v3081, %v3083
    %v3085 = vrot.slane %v3071, %v3084
    %v3087 = vunpack.c.l.s4 1966171168
    %v3088 = vunpack.c.0.s8 %v3087
    %v3089 = vlaneseq
    %v3090 = vshrl.u32 %v3089, 7
    %v3091 = vsub.s32 %v3088, %v3090
    %v3092 = vrot.slane %v3029, %v3091
    %v3093 = vcombine.low %v3078, %v3085
    %v3095 = vunpack.c.l.s4 1966171168
    %v3096 = vunpack.c.0.s8 %v3095
    %v3097 = vlaneseq
    %v3098 = vshrl.u32 %v3097, 7
    %v3099 = vsub.s32 %v3096, %v3098
    %v3100 = vrot.slane %v3093, %v3099
    %v3102 = vunpack.c.l.s4 1966171168
    %v3103 = vunpack.c.0.s8 %v3102
    %v3104 = vlaneseq
    %v3105 = vshrl.u32 %v3104, 7
    %v3106 = vsub.s32 %v3103, %v3105
    %v3107 = vrot.slane %v3092, %v3106
    %v3108 = vcombine.low %v3100, %v3107
    %v3109 = vcombine.low %v3043, %v3045
    %v3110 = vcombine.low %v3047, %v3062
    %v3112 = vunpack.c.l.s4 1966171168
    %v3113 = vunpack.c.0.s8 %v3112
    %v3114 = vlaneseq
    %v3115 = vshrl.u32 %v3114, 7
    %v3116 = vsub.s32 %v3113, %v3115
    %v3117 = vrot.slane %v3109, %v3116
    %v3119 = vunpack.c.l.s4 1966171168
    %v3120 = vunpack.c.0.s8 %v3119
    %v3121 = vlaneseq
    %v3122 = vshrl.u32 %v3121, 7
    %v3123 = vsub.s32 %v3120, %v3122
    %v3124 = vrot.slane %v3110, %v3123
    %v3126 = vunpack.c.l.s4 1966171168
    %v3127 = vunpack.c.0.s8 %v3126
    %v3128 = vlaneseq
    %v3129 = vshrl.u32 %v3128, 7
    %v3130 = vsub.s32 %v3127, %v3129
    %v3131 = vrot.slane %v3069, %v3130
    %v3132 = vcombine.low %v3117, %v3124
    %v3134 = vunpack.c.l.s4 1966171168
    %v3135 = vunpack.c.0.s8 %v3134
    %v3136 = vlaneseq
    %v3137 = vshrl.u32 %v3136, 7
    %v3138 = vsub.s32 %v3135, %v3137
    %v3139 = vrot.slane %v3132, %v3138
    %v3141 = vunpack.c.l.s4 1966171168
    %v3142 = vunpack.c.0.s8 %v3141
    %v3143 = vlaneseq
    %v3144 = vshrl.u32 %v3143, 7
    %v3145 = vsub.s32 %v3142, %v3144
    %v3146 = vrot.slane %v3131, %v3145
    %v3147 = vcombine.low %v3139, %v3146
    %v3150 = vadd.f32 %v2192, %v3108
    %v3151 = vadd.f32 %v2193, %v3147
    %v3154 = vrot.slane %v3151, 7
    %vm3155 = vcmask 1041409
    %v3156 = vsel %vm3155, %v3154, %v3150
    %vm3158 = vcmask 254976
    %v3159 = vsel %vm3158, %v3156, 0.0
    %3160 = vadd.xlane.f32.xlu0 %v3159
    %v3161 = vpop.xlane.xlu0 %3160
    %v3162 = vmul.f32 %v3161, %v169
    %v3164 = vrot.slane %v3162, 1
    %v3167 = vsub.f32 %v3150, %v3162
    %v3168 = vsub.f32 %v3151, %v3164
    %v3169 = vmul.f32 %v3167, %v3167
    %v3170 = vmul.f32 %v3168, %v3168
    %v3173 = vrot.slane %v3170, 7
    %v3174 = vsel %vm3155, %v3173, %v3169
    %v3176 = vsel %vm3158, %v3174, 0.0
    %3177 = vadd.xlane.f32.xlu0 %v3176
    %v3178 = vpop.xlane.xlu0 %3177
    %v3179 = vmul.f32 %v3178, %v169
    %v3180 = vadd.f32 %v3179, 1e-05
    %v3181 = vrsqrt.pop %v3180
    %v3183 = vrot.slane %v3181, 1
    %v3186 = vmul.f32 %v3167, %v3181
    %v3187 = vmul.f32 %v3168, %v3183
    %v3188 = vlaneseq
    %v3189 = vshrl.u32 %v3188, 7
    %v3190 = vsub.s32 0, %v3189
    %v3191 = vrot.slane %v160, %v3190
    %v3192 = vmul.f32 %v3186, %v3191
    %v3193 = vmul.f32 %v3187, %v3191
    %v3194 = vlaneseq
    %v3195 = vshrl.u32 %v3194, 7
    %v3196 = vsub.s32 0, %v3195
    %v3197 = vrot.slane %v161, %v3196
    %v3198 = vadd.f32 %v3192, %v3197
    %v3199 = vadd.f32 %v3193, %v3197
    %v3202 = vrot.slane %v3199, 7
    %v3203 = vsel %vm3155, %v3202, %v3198
    %3205 = vst.msk [vmem:[#allocation2] sm:$0x3] %vm3158, %v3203
    %s3206 = scalar_lea.vmem %s8, 4
    %v3207 = vld [vmem:[%s3206] sm:$0xf]
    %v3208 = vsel %vm162, %v3150, 0.0
    %3209 = vadd.xlane.f32.xlu0 %v3208
    %v3210 = vpop.xlane.xlu0 %3209
    %v3211 = vsel %vm162, %v3151, 0.0
    %3212 = vadd.xlane.f32.xlu0 %v3211
    %v3213 = vpop.xlane.xlu0 %3212
    %v3214 = vmul.f32 %v3210, %v169
    %v3215 = vmul.f32 %v3213, %v169
    %v3216 = vsub.f32 %v3150, %v3214
    %v3217 = vsub.f32 %v3151, %v3215
    %v3218 = vmul.f32 %v3216, %v3216
    %v3219 = vmul.f32 %v3217, %v3217
    %v3220 = vsel %vm162, %v3218, 0.0
    %3221 = vadd.xlane.f32.xlu0 %v3220
    %v3222 = vpop.xlane.xlu0 %3221
    %v3223 = vsel %vm162, %v3219, 0.0
    %3224 = vadd.xlane.f32.xlu0 %v3223
    %v3225 = vpop.xlane.xlu0 %3224
    %v3226 = vmul.f32 %v3222, %v169
    %v3227 = vmul.f32 %v3225, %v169
    %v3228 = vadd.f32 %v3226, 1e-05
    %v3229 = vadd.f32 %v3227, 1e-05
    %v3230 = vrsqrt.pop %v3228
    %v3231 = vrsqrt.pop %v3229
    %v3232 = vmul.f32 %v3216, %v3230
    %v3233 = vmul.f32 %v3217, %v3231
    %s3234 = scalar_lea.vmem %s4, 32
    %v3235 = vld [vmem:[%s3234] sm:$0xff]
    %v3236 = vld [vmem:[%s3234 + $0x8] sm:$0xff]
    %v3237 = vld [vmem:[%s3234 + $0x10] sm:$0xff]
    %v3238 = vld [vmem:[%s3234 + $0x18] sm:$0xff]
    %v3239 = vlaneseq
    %v3240 = vshrl.u32 %v3239, 7
    %v3241 = vsub.s32 0, %v3240
    %v3242 = vrot.slane %v3207, %v3241
    %v3245 = vcombine.high %v3232, %v3232
    %v3247 = vunpack.c.l.s4 1966171168
    %v3248 = vunpack.c.0.s8 %v3247
    %v3249 = vlaneseq
    %v3250 = vshrl.u32 %v3249, 7
    %v3251 = vsub.s32 %v3248, %v3250
    %v3252 = vrot.slane %v3232, %v3251
    %v3254 = vunpack.c.l.s4 1966171168
    %v3255 = vunpack.c.0.s8 %v3254
    %v3256 = vlaneseq
    %v3257 = vshrl.u32 %v3256, 7
    %v3258 = vsub.s32 %v3255, %v3257
    %v3259 = vrot.slane %v3245, %v3258
    %v3260 = vcombine.high %v3252, %v3252
    %v3262 = vunpack.c.l.s4 1966171168
    %v3263 = vunpack.c.0.s8 %v3262
    %v3264 = vlaneseq
    %v3265 = vshrl.u32 %v3264, 7
    %v3266 = vsub.s32 %v3263, %v3265
    %v3267 = vrot.slane %v3252, %v3266
    %v3269 = vunpack.c.l.s4 1966171168
    %v3270 = vunpack.c.0.s8 %v3269
    %v3271 = vlaneseq
    %v3272 = vshrl.u32 %v3271, 7
    %v3273 = vsub.s32 %v3270, %v3272
    %v3274 = vrot.slane %v3259, %v3273
    %v3276 = vunpack.c.l.s4 1966171168
    %v3277 = vunpack.c.0.s8 %v3276
    %v3278 = vlaneseq
    %v3279 = vshrl.u32 %v3278, 7
    %v3280 = vsub.s32 %v3277, %v3279
    %v3281 = vrot.slane %v3260, %v3280
    %v3282 = vcombine.high %v3267, %v3267
    %v3283 = vcombine.high %v3281, %v3281
    %v3284 = vcombine.high %v3233, %v3233
    %v3286 = vunpack.c.l.s4 1966171168
    %v3287 = vunpack.c.0.s8 %v3286
    %v3288 = vlaneseq
    %v3289 = vshrl.u32 %v3288, 7
    %v3290 = vsub.s32 %v3287, %v3289
    %v3291 = vrot.slane %v3233, %v3290
    %v3293 = vunpack.c.l.s4 1966171168
    %v3294 = vunpack.c.0.s8 %v3293
    %v3295 = vlaneseq
    %v3296 = vshrl.u32 %v3295, 7
    %v3297 = vsub.s32 %v3294, %v3296
    %v3298 = vrot.slane %v3284, %v3297
    %v3299 = vcombine.high %v3291, %v3291
    %v3301 = vunpack.c.l.s4 1966171168
    %v3302 = vunpack.c.0.s8 %v3301
    %v3303 = vlaneseq
    %v3304 = vshrl.u32 %v3303, 7
    %v3305 = vsub.s32 %v3302, %v3304
    %v3306 = vrot.slane %v3291, %v3305
    %v3308 = vunpack.c.l.s4 1966171168
    %v3309 = vunpack.c.0.s8 %v3308
    %v3310 = vlaneseq
    %v3311 = vshrl.u32 %v3310, 7
    %v3312 = vsub.s32 %v3309, %v3311
    %v3313 = vrot.slane %v3298, %v3312
    %v3315 = vunpack.c.l.s4 1966171168
    %v3316 = vunpack.c.0.s8 %v3315
    %v3317 = vlaneseq
    %v3318 = vshrl.u32 %v3317, 7
    %v3319 = vsub.s32 %v3316, %v3318
    %v3320 = vrot.slane %v3299, %v3319
    %v3321 = vcombine.high %v3306, %v3306
    %v3322 = vcombine.high %v3320, %v3320
    %v3324 = vcombine.high %v3242, %v3242
    %v3326 = vunpack.c.l.s4 1966171168
    %v3327 = vunpack.c.0.s8 %v3326
    %v3328 = vlaneseq
    %v3329 = vshrl.u32 %v3328, 7
    %v3330 = vsub.s32 %v3327, %v3329
    %v3331 = vrot.slane %v3242, %v3330
    %v3333 = vunpack.c.l.s4 1966171168
    %v3334 = vunpack.c.0.s8 %v3333
    %v3335 = vlaneseq
    %v3336 = vshrl.u32 %v3335, 7
    %v3337 = vsub.s32 %v3334, %v3336
    %v3338 = vrot.slane %v3324, %v3337
    %v3339 = vcombine.high %v3331, %v3331
    %v3341 = vunpack.c.l.s4 1966171168
    %v3342 = vunpack.c.0.s8 %v3341
    %v3343 = vlaneseq
    %v3344 = vshrl.u32 %v3343, 7
    %v3345 = vsub.s32 %v3342, %v3344
    %v3346 = vrot.slane %v3331, %v3345
    %v3348 = vunpack.c.l.s4 1966171168
    %v3349 = vunpack.c.0.s8 %v3348
    %v3350 = vlaneseq
    %v3351 = vshrl.u32 %v3350, 7
    %v3352 = vsub.s32 %v3349, %v3351
    %v3353 = vrot.slane %v3338, %v3352
    %v3355 = vunpack.c.l.s4 1966171168
    %v3356 = vunpack.c.0.s8 %v3355
    %v3357 = vlaneseq
    %v3358 = vshrl.u32 %v3357, 7
    %v3359 = vsub.s32 %v3356, %v3358
    %v3360 = vrot.slane %v3339, %v3359
    %v3361 = vcombine.high %v3346, %v3346
    %v3362 = vcombine.high %v3360, %v3360
    %v3363 = vcombine.low %v3267, %v3281
    %v3364 = vcombine.low %v3282, %v3283
    %v3365 = vcombine.low %v3274, %v3306
    %v3366 = vcombine.low %v3320, %v3321
    %v3368 = vunpack.c.l.s4 1966171168
    %v3369 = vunpack.c.0.s8 %v3368
    %v3370 = vlaneseq
    %v3371 = vshrl.u32 %v3370, 7
    %v3372 = vsub.s32 %v3369, %v3371
    %v3373 = vrot.slane %v3363, %v3372
    %v3375 = vunpack.c.l.s4 1966171168
    %v3376 = vunpack.c.0.s8 %v3375
    %v3377 = vlaneseq
    %v3378 = vshrl.u32 %v3377, 7
    %v3379 = vsub.s32 %v3376, %v3378
    %v3380 = vrot.slane %v3364, %v3379
    %v3382 = vunpack.c.l.s4 1966171168
    %v3383 = vunpack.c.0.s8 %v3382
    %v3384 = vlaneseq
    %v3385 = vshrl.u32 %v3384, 7
    %v3386 = vsub.s32 %v3383, %v3385
    %v3387 = vrot.slane %v3365, %v3386
    %v3389 = vunpack.c.l.s4 1966171168
    %v3390 = vunpack.c.0.s8 %v3389
    %v3391 = vlaneseq
    %v3392 = vshrl.u32 %v3391, 7
    %v3393 = vsub.s32 %v3390, %v3392
    %v3394 = vrot.slane %v3366, %v3393
    %v3395 = vcombine.low %v3373, %v3380
    %v3396 = vcombine.low %v3387, %v3394
    %v3398 = vunpack.c.l.s4 1966171168
    %v3399 = vunpack.c.0.s8 %v3398
    %v3400 = vlaneseq
    %v3401 = vshrl.u32 %v3400, 7
    %v3402 = vsub.s32 %v3399, %v3401
    %v3403 = vrot.slane %v3395, %v3402
    %v3405 = vunpack.c.l.s4 1966171168
    %v3406 = vunpack.c.0.s8 %v3405
    %v3407 = vlaneseq
    %v3408 = vshrl.u32 %v3407, 7
    %v3409 = vsub.s32 %v3406, %v3408
    %v3410 = vrot.slane %v3396, %v3409
    %v3411 = vcombine.low %v3403, %v3410
    %v3412 = vcombine.low %v3322, %v3313
    %v3414 = vunpack.c.l.s4 1966171168
    %v3415 = vunpack.c.0.s8 %v3414
    %v3416 = vlaneseq
    %v3417 = vshrl.u32 %v3416, 7
    %v3418 = vsub.s32 %v3415, %v3417
    %v3419 = vrot.slane %v3412, %v3418
    %v3421 = vunpack.c.l.s4 1966171168
    %v3422 = vunpack.c.0.s8 %v3421
    %v3423 = vlaneseq
    %v3424 = vshrl.u32 %v3423, 7
    %v3425 = vsub.s32 %v3422, %v3424
    %v3426 = vrot.slane %v3419, %v3425
    %v3427 = vcombine.low %v3346, %v3360
    %v3428 = vcombine.low %v3361, %v3362
    %v3429 = vcombine.low %v3353, %v3346
    %v3430 = vcombine.low %v3360, %v3361
    %v3432 = vunpack.c.l.s4 1966171168
    %v3433 = vunpack.c.0.s8 %v3432
    %v3434 = vlaneseq
    %v3435 = vshrl.u32 %v3434, 7
    %v3436 = vsub.s32 %v3433, %v3435
    %v3437 = vrot.slane %v3427, %v3436
    %v3439 = vunpack.c.l.s4 1966171168
    %v3440 = vunpack.c.0.s8 %v3439
    %v3441 = vlaneseq
    %v3442 = vshrl.u32 %v3441, 7
    %v3443 = vsub.s32 %v3440, %v3442
    %v3444 = vrot.slane %v3428, %v3443
    %v3446 = vunpack.c.l.s4 1966171168
    %v3447 = vunpack.c.0.s8 %v3446
    %v3448 = vlaneseq
    %v3449 = vshrl.u32 %v3448, 7
    %v3450 = vsub.s32 %v3447, %v3449
    %v3451 = vrot.slane %v3429, %v3450
    %v3453 = vunpack.c.l.s4 1966171168
    %v3454 = vunpack.c.0.s8 %v3453
    %v3455 = vlaneseq
    %v3456 = vshrl.u32 %v3455, 7
    %v3457 = vsub.s32 %v3454, %v3456
    %v3458 = vrot.slane %v3430, %v3457
    %v3459 = vcombine.low %v3437, %v3444
    %v3460 = vcombine.low %v3451, %v3458
    %v3462 = vunpack.c.l.s4 1966171168
    %v3463 = vunpack.c.0.s8 %v3462
    %v3464 = vlaneseq
    %v3465 = vshrl.u32 %v3464, 7
    %v3466 = vsub.s32 %v3463, %v3465
    %v3467 = vrot.slane %v3459, %v3466
    %v3469 = vunpack.c.l.s4 1966171168
    %v3470 = vunpack.c.0.s8 %v3469
    %v3471 = vlaneseq
    %v3472 = vshrl.u32 %v3471, 7
    %v3473 = vsub.s32 %v3470, %v3472
    %v3474 = vrot.slane %v3460, %v3473
    %v3475 = vcombine.low %v3467, %v3474
    %v3476 = vcombine.low %v3362, %v3353
    %v3478 = vunpack.c.l.s4 1966171168
    %v3479 = vunpack.c.0.s8 %v3478
    %v3480 = vlaneseq
    %v3481 = vshrl.u32 %v3480, 7
    %v3482 = vsub.s32 %v3479, %v3481
    %v3483 = vrot.slane %v3476, %v3482
    %v3485 = vunpack.c.l.s4 1966171168
    %v3486 = vunpack.c.0.s8 %v3485
    %v3487 = vlaneseq
    %v3488 = vshrl.u32 %v3487, 7
    %v3489 = vsub.s32 %v3486, %v3488
    %v3490 = vrot.slane %v3483, %v3489
    %v3493 = vsel %vm487, %v3411, 0
    %v3495 = vsel %vm487, %v3426, 0
    %3497 = vmatprep.subr.mxu0 0.0
    %3498 = vmatpush1.msra.mxu0 %v3235
    %3499 = vmatprep.subr.mxu0 0.0
    %3500 = vmatpush1.msra.mxu0 %v3236
    %3501 = vmatprep.subr.mxu0 0.0
    %3502 = vmatpush1.msra.mxu0 %v3237
    %3503 = vmatprep.subr.mxu0 0.0
    %3504 = vmatpush1.msra.mxu0 %v3238
    %3505 = vmatprep.subr.mxu0 0.0
    %3506 = vmatpush1.msra.mxu0 0.0
    %3507 = vmatprep.subr.mxu0 0.0
    %3508 = vmatpush1.msra.mxu0 0.0
    %3509 = vmatprep.subr.mxu0 0.0
    %3510 = vmatpush1.msra.mxu0 0.0
    %3511 = vmatprep.subr.mxu0 0.0
    %3512 = vmatpush1.msra.mxu0 0.0
    %3513 = vmatprep.subr.mxu0 0.0
    %3514 = vmatpush1.msra.mxu0 0.0
    %3515 = vmatprep.subr.mxu0 0.0
    %3516 = vmatpush1.msra.mxu0 0.0
    %3517 = vmatprep.subr.mxu0 0.0
    %3518 = vmatpush1.msra.mxu0 0.0
    %3519 = vmatprep.subr.mxu0 0.0
    %3520 = vmatpush1.msra.mxu0 0.0
    %3521 = vmatprep.subr.mxu0 0.0
    %3522 = vmatpush1.msra.mxu0 0.0
    %3523 = vmatprep.subr.mxu0 0.0
    %3524 = vmatpush1.msra.mxu0 0.0
    %3525 = vmatprep.subr.mxu0 0.0
    %3526 = vmatpush1.msra.mxu0 0.0
    %3527 = vmatprep.subr.mxu0 0.0
    %3528 = vmatpush1.msra.mxu0 0.0
    %3529 = vmatprep.subr.mxu0 0.0
    %3530 = vmatpush1.msra.mxu0 0.0
    %3531 = vmatprep.subr.mxu0 0.0
    %3532 = vmatpush1.msra.mxu0 0.0
    %3533 = vmatprep.subr.mxu0 0.0
    %3534 = vmatpush1.msra.mxu0 0.0
    %3535 = vmatprep.subr.mxu0 0.0
    %3536 = vmatpush1.msra.mxu0 0.0
    %3537 = vmatprep.subr.mxu0 0.0
    %3538 = vmatpush1.msra.mxu0 0.0
    %3539 = vmatprep.subr.mxu0 0.0
    %3540 = vmatpush1.msra.mxu0 0.0
    %3541 = vmatprep.subr.mxu0 0.0
    %3542 = vmatpush1.msra.mxu0 0.0
    %3543 = vmatprep.subr.mxu0 0.0
    %3544 = vmatpush1.msra.mxu0 0.0
    %3545 = vmatprep.subr.mxu0 0.0
    %3546 = vmatpush1.msra.mxu0 0.0
    %3547 = vmatprep.subr.mxu0 0.0
    %3548 = vmatpush1.msra.mxu0 0.0
    %3549 = vmatprep.subr.mxu0 0.0
    %3550 = vmatpush1.msra.mxu0 0.0
    %3551 = vmatprep.subr.mxu0 0.0
    %3552 = vmatpush1.msra.mxu0 0.0
    %3553 = vmatprep.subr.mxu0 0.0
    %3554 = vmatpush1.msra.mxu0 0.0
    %3555 = vmatprep.subr.mxu0 0.0
    %3556 = vmatpush1.msra.mxu0 0.0
    %3557 = vmatprep.subr.mxu0 0.0
    %3558 = vmatpush1.msra.mxu0 0.0
    %3559 = vmatprep.subr.mxu0 0.0
    %3560 = vmatpush1.msra.mxu0 0.0
    %3561 = vmatprep.mubr.f32.mxu0 0.0
    %3562 = vmatmul.mubr.f32.gmra.mrb[0].mxu0 %v3493
    %v3563 = vpop.f32.mrb[0].mxu0
    %v3564 = vadd.f32 %v3475, %v3563
    %v3565 = vpop.f32.mrb[0].mxu0
    %3566 = vmatprep.mubr.f32.mxu0 0.0
    %3567 = vmatmul.mubr.f32.gmra.mrb[0].mxu0 %v3495
    %v3568 = vpop.f32.mrb[0].mxu0
    %v3569 = vadd.f32 %v3490, %v3568
    %v3570 = vpop.f32.mrb[0].mxu0
    %3571 = vdwg.mxu0
    %v3574 = vcombine.high %v3564, %v3564
    %v3576 = vunpack.c.l.s4 1966171168
    %v3577 = vunpack.c.0.s8 %v3576
    %v3578 = vlaneseq
    %v3579 = vshrl.u32 %v3578, 7
    %v3580 = vsub.s32 %v3577, %v3579
    %v3581 = vrot.slane %v3564, %v3580
    %v3583 = vunpack.c.l.s4 1966171168
    %v3584 = vunpack.c.0.s8 %v3583
    %v3585 = vlaneseq
    %v3586 = vshrl.u32 %v3585, 7
    %v3587 = vsub.s32 %v3584, %v3586
    %v3588 = vrot.slane %v3574, %v3587
    %v3589 = vcombine.high %v3581, %v3581
    %v3590 = vcombine.high %v3588, %v3588
    %v3592 = vunpack.c.l.s4 1966171168
    %v3593 = vunpack.c.0.s8 %v3592
    %v3594 = vlaneseq
    %v3595 = vshrl.u32 %v3594, 7
    %v3596 = vsub.s32 %v3593, %v3595
    %v3597 = vrot.slane %v3581, %v3596
    %v3599 = vunpack.c.l.s4 1966171168
    %v3600 = vunpack.c.0.s8 %v3599
    %v3601 = vlaneseq
    %v3602 = vshrl.u32 %v3601, 7
    %v3603 = vsub.s32 %v3600, %v3602
    %v3604 = vrot.slane %v3588, %v3603
    %v3606 = vunpack.c.l.s4 1966171168
    %v3607 = vunpack.c.0.s8 %v3606
    %v3608 = vlaneseq
    %v3609 = vshrl.u32 %v3608, 7
    %v3610 = vsub.s32 %v3607, %v3609
    %v3611 = vrot.slane %v3589, %v3610
    %v3613 = vunpack.c.l.s4 1966171168
    %v3614 = vunpack.c.0.s8 %v3613
    %v3615 = vlaneseq
    %v3616 = vshrl.u32 %v3615, 7
    %v3617 = vsub.s32 %v3614, %v3616
    %v3618 = vrot.slane %v3590, %v3617
    %v3619 = vcombine.high %v3597, %v3597
    %v3620 = vcombine.high %v3604, %v3604
    %v3621 = vcombine.high %v3611, %v3611
    %v3622 = vcombine.high %v3618, %v3618
    %v3624 = vunpack.c.l.s4 1966171168
    %v3625 = vunpack.c.0.s8 %v3624
    %v3626 = vlaneseq
    %v3627 = vshrl.u32 %v3626, 7
    %v3628 = vsub.s32 %v3625, %v3627
    %v3629 = vrot.slane %v3569, %v3628
    %v3630 = vcombine.high %v3629, %v3629
    %v3632 = vunpack.c.l.s4 1966171168
    %v3633 = vunpack.c.0.s8 %v3632
    %v3634 = vlaneseq
    %v3635 = vshrl.u32 %v3634, 7
    %v3636 = vsub.s32 %v3633, %v3635
    %v3637 = vrot.slane %v3629, %v3636
    %v3639 = vunpack.c.l.s4 1966171168
    %v3640 = vunpack.c.0.s8 %v3639
    %v3641 = vlaneseq
    %v3642 = vshrl.u32 %v3641, 7
    %v3643 = vsub.s32 %v3640, %v3642
    %v3644 = vrot.slane %v3630, %v3643
    %3655 = vrot.lane.b32.xlu0 %v3597, 112
    %v3656 = vpop.permute.xlu0 %3655
    %3657 = vrot.lane.b32.xlu0 %v3611, 112
    %v3658 = vpop.permute.xlu0 %3657
    %3659 = vrot.lane.b32.xlu0 %v3619, 112
    %v3660 = vpop.permute.xlu0 %3659
    %3661 = vrot.lane.b32.xlu0 %v3621, 112
    %v3662 = vpop.permute.xlu0 %3661
    %3663 = vrot.lane.b32.xlu0 %v3604, 112
    %v3664 = vpop.permute.xlu0 %3663
    %3665 = vrot.lane.b32.xlu0 %v3618, 112
    %v3666 = vpop.permute.xlu0 %3665
    %3667 = vrot.lane.b32.xlu0 %v3620, 112
    %v3668 = vpop.permute.xlu0 %3667
    %3669 = vrot.lane.b32.xlu0 %v3622, 112
    %v3670 = vpop.permute.xlu0 %3669
    %3671 = vrot.lane.b32.xlu0 %v3637, 112
    %v3672 = vpop.permute.xlu0 %3671
    %3673 = vrot.lane.b32.xlu0 %v3644, 112
    %v3674 = vpop.permute.xlu0 %3673
    %v3685 = vmul.f32 %v3597, 0.25
    %v3686 = vmul.f32 %v3611, 0.25
    %v3687 = vmul.f32 %v3619, 0.25
    %v3688 = vmul.f32 %v3621, 0.25
    %v3689 = vmul.f32 %v3604, 0.25
    %v3690 = vmul.f32 %v3618, 0.25
    %v3691 = vmul.f32 %v3620, 0.25
    %v3692 = vmul.f32 %v3622, 0.25
    %v3693 = vmul.f32 %v3637, 0.25
    %v3694 = vmul.f32 %v3644, 0.25
    %v3695 = vmul.f32 %v3656, 0.25
    %v3696 = vmul.f32 %v3658, 0.25
    %v3697 = vmul.f32 %v3660, 0.25
    %v3698 = vmul.f32 %v3662, 0.25
    %v3699 = vmul.f32 %v3664, 0.25
    %v3700 = vmul.f32 %v3666, 0.25
    %v3701 = vmul.f32 %v3668, 0.25
    %v3702 = vmul.f32 %v3670, 0.25
    %v3703 = vmul.f32 %v3672, 0.25
    %v3704 = vmul.f32 %v3674, 0.25
    %v3710 = vcombine.low %v3685, %v3686
    %v3711 = vcombine.low %v3687, %v3688
    %v3713 = vunpack.c.l.s4 1966171168
    %v3714 = vunpack.c.0.s8 %v3713
    %v3715 = vlaneseq
    %v3716 = vshrl.u32 %v3715, 7
    %v3717 = vsub.s32 %v3714, %v3716
    %v3718 = vrot.slane %v3710, %v3717
    %v3720 = vunpack.c.l.s4 1966171168
    %v3721 = vunpack.c.0.s8 %v3720
    %v3722 = vlaneseq
    %v3723 = vshrl.u32 %v3722, 7
    %v3724 = vsub.s32 %v3721, %v3723
    %v3725 = vrot.slane %v3711, %v3724
    %v3727 = vunpack.c.l.s4 1966171168
    %v3728 = vunpack.c.0.s8 %v3727
    %v3729 = vlaneseq
    %v3730 = vshrl.u32 %v3729, 7
    %v3731 = vsub.s32 %v3728, %v3730
    %v3732 = vrot.slane %v3689, %v3731
    %v3733 = vcombine.low %v3718, %v3725
    %v3735 = vunpack.c.l.s4 1966171168
    %v3736 = vunpack.c.0.s8 %v3735
    %v3737 = vlaneseq
    %v3738 = vshrl.u32 %v3737, 7
    %v3739 = vsub.s32 %v3736, %v3738
    %v3740 = vrot.slane %v3733, %v3739
    %v3742 = vunpack.c.l.s4 1966171168
    %v3743 = vunpack.c.0.s8 %v3742
    %v3744 = vlaneseq
    %v3745 = vshrl.u32 %v3744, 7
    %v3746 = vsub.s32 %v3743, %v3745
    %v3747 = vrot.slane %v3732, %v3746
    %v3748 = vcombine.low %v3740, %v3747
    %v3749 = vcombine.low %v3597, %v3611
    %v3750 = vcombine.low %v3619, %v3621
    %v3752 = vunpack.c.l.s4 1966171168
    %v3753 = vunpack.c.0.s8 %v3752
    %v3754 = vlaneseq
    %v3755 = vshrl.u32 %v3754, 7
    %v3756 = vsub.s32 %v3753, %v3755
    %v3757 = vrot.slane %v3749, %v3756
    %v3759 = vunpack.c.l.s4 1966171168
    %v3760 = vunpack.c.0.s8 %v3759
    %v3761 = vlaneseq
    %v3762 = vshrl.u32 %v3761, 7
    %v3763 = vsub.s32 %v3760, %v3762
    %v3764 = vrot.slane %v3750, %v3763
    %v3766 = vunpack.c.l.s4 1966171168
    %v3767 = vunpack.c.0.s8 %v3766
    %v3768 = vlaneseq
    %v3769 = vshrl.u32 %v3768, 7
    %v3770 = vsub.s32 %v3767, %v3769
    %v3771 = vrot.slane %v3604, %v3770
    %v3772 = vcombine.low %v3757, %v3764
    %v3774 = vunpack.c.l.s4 1966171168
    %v3775 = vunpack.c.0.s8 %v3774
    %v3776 = vlaneseq
    %v3777 = vshrl.u32 %v3776, 7
    %v3778 = vsub.s32 %v3775, %v3777
    %v3779 = vrot.slane %v3772, %v3778
    %v3781 = vunpack.c.l.s4 1966171168
    %v3782 = vunpack.c.0.s8 %v3781
    %v3783 = vlaneseq
    %v3784 = vshrl.u32 %v3783, 7
    %v3785 = vsub.s32 %v3782, %v3784
    %v3786 = vrot.slane %v3771, %v3785
    %v3787 = vcombine.low %v3779, %v3786
    %3788 = vrot.lane.b32.xlu0 %v3787, 96
    %v3789 = vpop.permute.xlu0 %3788
    %v3790 = vsel %vm785, %v3748, 0
    %v3792 = vsel %vm785, %v3789, 0
    %3794 = vmatprep.subr.mxu0 0.0
    %3795 = vmatpush1.xpose.msra.mxu0 %v3792
    %3796 = vmatprep.subr.mxu0 0.0
    %3797 = vmatpush1.xpose.msra.mxu0 0.0
    %3798 = vmatprep.subr.mxu0 0.0
    %3799 = vmatpush1.xpose.msra.mxu0 0.0
    %3800 = vmatprep.subr.mxu0 0.0
    %3801 = vmatpush1.xpose.msra.mxu0 0.0
    %3802 = vmatprep.subr.mxu0 0.0
    %3803 = vmatpush1.xpose.msra.mxu0 0.0
    %3804 = vmatprep.subr.mxu0 0.0
    %3805 = vmatpush1.xpose.msra.mxu0 0.0
    %3806 = vmatprep.subr.mxu0 0.0
    %3807 = vmatpush1.xpose.msra.mxu0 0.0
    %3808 = vmatprep.subr.mxu0 0.0
    %3809 = vmatpush1.xpose.msra.mxu0 0.0
    %3810 = vmatprep.subr.mxu0 0.0
    %3811 = vmatpush1.xpose.msra.mxu0 0.0
    %3812 = vmatprep.subr.mxu0 0.0
    %3813 = vmatpush1.xpose.msra.mxu0 0.0
    %3814 = vmatprep.subr.mxu0 0.0
    %3815 = vmatpush1.xpose.msra.mxu0 0.0
    %3816 = vmatprep.subr.mxu0 0.0
    %3817 = vmatpush1.xpose.msra.mxu0 0.0
    %3818 = vmatprep.subr.mxu0 0.0
    %3819 = vmatpush1.xpose.msra.mxu0 0.0
    %3820 = vmatprep.subr.mxu0 0.0
    %3821 = vmatpush1.xpose.msra.mxu0 0.0
    %3822 = vmatprep.subr.mxu0 0.0
    %3823 = vmatpush1.xpose.msra.mxu0 0.0
    %3824 = vmatprep.subr.mxu0 0.0
    %3825 = vmatpush1.xpose.msra.mxu0 0.0
    %3826 = vmatprep.subr.mxu0 0.0
    %3827 = vmatpush1.xpose.msra.mxu0 0.0
    %3828 = vmatprep.subr.mxu0 0.0
    %3829 = vmatpush1.xpose.msra.mxu0 0.0
    %3830 = vmatprep.subr.mxu0 0.0
    %3831 = vmatpush1.xpose.msra.mxu0 0.0
    %3832 = vmatprep.subr.mxu0 0.0
    %3833 = vmatpush1.xpose.msra.mxu0 0.0
    %3834 = vmatprep.subr.mxu0 0.0
    %3835 = vmatpush1.xpose.msra.mxu0 0.0
    %3836 = vmatprep.subr.mxu0 0.0
    %3837 = vmatpush1.xpose.msra.mxu0 0.0
    %3838 = vmatprep.subr.mxu0 0.0
    %3839 = vmatpush1.xpose.msra.mxu0 0.0
    %3840 = vmatprep.subr.mxu0 0.0
    %3841 = vmatpush1.xpose.msra.mxu0 0.0
    %3842 = vmatprep.subr.mxu0 0.0
    %3843 = vmatpush1.xpose.msra.mxu0 0.0
    %3844 = vmatprep.subr.mxu0 0.0
    %3845 = vmatpush1.xpose.msra.mxu0 0.0
    %3846 = vmatprep.subr.mxu0 0.0
    %3847 = vmatpush1.xpose.msra.mxu0 0.0
    %3848 = vmatprep.subr.mxu0 0.0
    %3849 = vmatpush1.xpose.msra.mxu0 0.0
    %3850 = vmatprep.subr.mxu0 0.0
    %3851 = vmatpush1.xpose.msra.mxu0 0.0
    %3852 = vmatprep.subr.mxu0 0.0
    %3853 = vmatpush1.xpose.msra.mxu0 0.0
    %3854 = vmatprep.subr.mxu0 0.0
    %3855 = vmatpush1.xpose.msra.mxu0 0.0
    %3856 = vmatprep.subr.mxu0 0.0
    %3857 = vmatpush1.xpose.msra.mxu0 0.0
    %3858 = vmatprep.mubr.f32.mxu0 0.0
    %3859 = vmatmul.mubr.f32.gmra.mrb[0].mxu0 %v3790
    %v3860 = vpop.f32.mrb[0].mxu0
    %v3861 = vadd.f32 0.0, %v3860
    %v3862 = vpop.f32.mrb[0].mxu0
    %3863 = vdwg.mxu0
    %v3869 = vcombine.low %v3690, %v3691
    %v3870 = vcombine.low %v3692, %v3693
    %v3872 = vunpack.c.l.s4 1966171168
    %v3873 = vunpack.c.0.s8 %v3872
    %v3874 = vlaneseq
    %v3875 = vshrl.u32 %v3874, 7
    %v3876 = vsub.s32 %v3873, %v3875
    %v3877 = vrot.slane %v3869, %v3876
    %v3879 = vunpack.c.l.s4 1966171168
    %v3880 = vunpack.c.0.s8 %v3879
    %v3881 = vlaneseq
    %v3882 = vshrl.u32 %v3881, 7
    %v3883 = vsub.s32 %v3880, %v3882
    %v3884 = vrot.slane %v3870, %v3883
    %v3886 = vunpack.c.l.s4 1966171168
    %v3887 = vunpack.c.0.s8 %v3886
    %v3888 = vlaneseq
    %v3889 = vshrl.u32 %v3888, 7
    %v3890 = vsub.s32 %v3887, %v3889
    %v3891 = vrot.slane %v3694, %v3890
    %v3892 = vcombine.low %v3877, %v3884
    %v3894 = vunpack.c.l.s4 1966171168
    %v3895 = vunpack.c.0.s8 %v3894
    %v3896 = vlaneseq
    %v3897 = vshrl.u32 %v3896, 7
    %v3898 = vsub.s32 %v3895, %v3897
    %v3899 = vrot.slane %v3892, %v3898
    %v3901 = vunpack.c.l.s4 1966171168
    %v3902 = vunpack.c.0.s8 %v3901
    %v3903 = vlaneseq
    %v3904 = vshrl.u32 %v3903, 7
    %v3905 = vsub.s32 %v3902, %v3904
    %v3906 = vrot.slane %v3891, %v3905
    %v3907 = vcombine.low %v3899, %v3906
    %v3908 = vcombine.low %v3618, %v3620
    %v3909 = vcombine.low %v3622, %v3637
    %v3911 = vunpack.c.l.s4 1966171168
    %v3912 = vunpack.c.0.s8 %v3911
    %v3913 = vlaneseq
    %v3914 = vshrl.u32 %v3913, 7
    %v3915 = vsub.s32 %v3912, %v3914
    %v3916 = vrot.slane %v3908, %v3915
    %v3918 = vunpack.c.l.s4 1966171168
    %v3919 = vunpack.c.0.s8 %v3918
    %v3920 = vlaneseq
    %v3921 = vshrl.u32 %v3920, 7
    %v3922 = vsub.s32 %v3919, %v3921
    %v3923 = vrot.slane %v3909, %v3922
    %v3925 = vunpack.c.l.s4 1966171168
    %v3926 = vunpack.c.0.s8 %v3925
    %v3927 = vlaneseq
    %v3928 = vshrl.u32 %v3927, 7
    %v3929 = vsub.s32 %v3926, %v3928
    %v3930 = vrot.slane %v3644, %v3929
    %v3931 = vcombine.low %v3916, %v3923
    %v3933 = vunpack.c.l.s4 1966171168
    %v3934 = vunpack.c.0.s8 %v3933
    %v3935 = vlaneseq
    %v3936 = vshrl.u32 %v3935, 7
    %v3937 = vsub.s32 %v3934, %v3936
    %v3938 = vrot.slane %v3931, %v3937
    %v3940 = vunpack.c.l.s4 1966171168
    %v3941 = vunpack.c.0.s8 %v3940
    %v3942 = vlaneseq
    %v3943 = vshrl.u32 %v3942, 7
    %v3944 = vsub.s32 %v3941, %v3943
    %v3945 = vrot.slane %v3930, %v3944
    %v3946 = vcombine.low %v3938, %v3945
    %3947 = vrot.lane.b32.xlu0 %v3946, 96
    %v3948 = vpop.permute.xlu0 %3947
    %v3949 = vsel %vm785, %v3907, 0
    %v3951 = vsel %vm785, %v3948, 0
    %3953 = vmatprep.subr.mxu0 0.0
    %3954 = vmatpush1.xpose.msra.mxu0 %v3951
    %3955 = vmatprep.subr.mxu0 0.0
    %3956 = vmatpush1.xpose.msra.mxu0 0.0
    %3957 = vmatprep.subr.mxu0 0.0
    %3958 = vmatpush1.xpose.msra.mxu0 0.0
    %3959 = vmatprep.subr.mxu0 0.0
    %3960 = vmatpush1.xpose.msra.mxu0 0.0
    %3961 = vmatprep.subr.mxu0 0.0
    %3962 = vmatpush1.xpose.msra.mxu0 0.0
    %3963 = vmatprep.subr.mxu0 0.0
    %3964 = vmatpush1.xpose.msra.mxu0 0.0
    %3965 = vmatprep.subr.mxu0 0.0
    %3966 = vmatpush1.xpose.msra.mxu0 0.0
    %3967 = vmatprep.subr.mxu0 0.0
    %3968 = vmatpush1.xpose.msra.mxu0 0.0
    %3969 = vmatprep.subr.mxu0 0.0
    %3970 = vmatpush1.xpose.msra.mxu0 0.0
    %3971 = vmatprep.subr.mxu0 0.0
    %3972 = vmatpush1.xpose.msra.mxu0 0.0
    %3973 = vmatprep.subr.mxu0 0.0
    %3974 = vmatpush1.xpose.msra.mxu0 0.0
    %3975 = vmatprep.subr.mxu0 0.0
    %3976 = vmatpush1.xpose.msra.mxu0 0.0
    %3977 = vmatprep.subr.mxu0 0.0
    %3978 = vmatpush1.xpose.msra.mxu0 0.0
    %3979 = vmatprep.subr.mxu0 0.0
    %3980 = vmatpush1.xpose.msra.mxu0 0.0
    %3981 = vmatprep.subr.mxu0 0.0
    %3982 = vmatpush1.xpose.msra.mxu0 0.0
    %3983 = vmatprep.subr.mxu0 0.0
    %3984 = vmatpush1.xpose.msra.mxu0 0.0
    %3985 = vmatprep.subr.mxu0 0.0
    %3986 = vmatpush1.xpose.msra.mxu0 0.0
    %3987 = vmatprep.subr.mxu0 0.0
    %3988 = vmatpush1.xpose.msra.mxu0 0.0
    %3989 = vmatprep.subr.mxu0 0.0
    %3990 = vmatpush1.xpose.msra.mxu0 0.0
    %3991 = vmatprep.subr.mxu0 0.0
    %3992 = vmatpush1.xpose.msra.mxu0 0.0
    %3993 = vmatprep.subr.mxu0 0.0
    %3994 = vmatpush1.xpose.msra.mxu0 0.0
    %3995 = vmatprep.subr.mxu0 0.0
    %3996 = vmatpush1.xpose.msra.mxu0 0.0
    %3997 = vmatprep.subr.mxu0 0.0
    %3998 = vmatpush1.xpose.msra.mxu0 0.0
    %3999 = vmatprep.subr.mxu0 0.0
    %4000 = vmatpush1.xpose.msra.mxu0 0.0
    %4001 = vmatprep.subr.mxu0 0.0
    %4002 = vmatpush1.xpose.msra.mxu0 0.0
    %4003 = vmatprep.subr.mxu0 0.0
    %4004 = vmatpush1.xpose.msra.mxu0 0.0
    %4005 = vmatprep.subr.mxu0 0.0
    %4006 = vmatpush1.xpose.msra.mxu0 0.0
    %4007 = vmatprep.subr.mxu0 0.0
    %4008 = vmatpush1.xpose.msra.mxu0 0.0
    %4009 = vmatprep.subr.mxu0 0.0
    %4010 = vmatpush1.xpose.msra.mxu0 0.0
    %4011 = vmatprep.subr.mxu0 0.0
    %4012 = vmatpush1.xpose.msra.mxu0 0.0
    %4013 = vmatprep.subr.mxu0 0.0
    %4014 = vmatpush1.xpose.msra.mxu0 0.0
    %4015 = vmatprep.subr.mxu0 0.0
    %4016 = vmatpush1.xpose.msra.mxu0 0.0
    %4017 = vmatprep.mubr.f32.mxu0 0.0
    %4018 = vmatmul.mubr.f32.gmra.mrb[0].mxu0 %v3949
    %v4019 = vpop.f32.mrb[0].mxu0
    %v4020 = vadd.f32 0.0, %v4019
    %v4021 = vpop.f32.mrb[0].mxu0
    %4022 = vdwg.mxu0
    %v4028 = vcombine.low %v3695, %v3696
    %v4029 = vcombine.low %v3697, %v3698
    %v4031 = vunpack.c.l.s4 1966171168
    %v4032 = vunpack.c.0.s8 %v4031
    %v4033 = vlaneseq
    %v4034 = vshrl.u32 %v4033, 7
    %v4035 = vsub.s32 %v4032, %v4034
    %v4036 = vrot.slane %v4028, %v4035
    %v4038 = vunpack.c.l.s4 1966171168
    %v4039 = vunpack.c.0.s8 %v4038
    %v4040 = vlaneseq
    %v4041 = vshrl.u32 %v4040, 7
    %v4042 = vsub.s32 %v4039, %v4041
    %v4043 = vrot.slane %v4029, %v4042
    %v4045 = vunpack.c.l.s4 1966171168
    %v4046 = vunpack.c.0.s8 %v4045
    %v4047 = vlaneseq
    %v4048 = vshrl.u32 %v4047, 7
    %v4049 = vsub.s32 %v4046, %v4048
    %v4050 = vrot.slane %v3699, %v4049
    %v4051 = vcombine.low %v4036, %v4043
    %v4053 = vunpack.c.l.s4 1966171168
    %v4054 = vunpack.c.0.s8 %v4053
    %v4055 = vlaneseq
    %v4056 = vshrl.u32 %v4055, 7
    %v4057 = vsub.s32 %v4054, %v4056
    %v4058 = vrot.slane %v4051, %v4057
    %v4060 = vunpack.c.l.s4 1966171168
    %v4061 = vunpack.c.0.s8 %v4060
    %v4062 = vlaneseq
    %v4063 = vshrl.u32 %v4062, 7
    %v4064 = vsub.s32 %v4061, %v4063
    %v4065 = vrot.slane %v4050, %v4064
    %v4066 = vcombine.low %v4058, %v4065
    %v4067 = vcombine.low %v3656, %v3658
    %v4068 = vcombine.low %v3660, %v3662
    %v4070 = vunpack.c.l.s4 1966171168
    %v4071 = vunpack.c.0.s8 %v4070
    %v4072 = vlaneseq
    %v4073 = vshrl.u32 %v4072, 7
    %v4074 = vsub.s32 %v4071, %v4073
    %v4075 = vrot.slane %v4067, %v4074
    %v4077 = vunpack.c.l.s4 1966171168
    %v4078 = vunpack.c.0.s8 %v4077
    %v4079 = vlaneseq
    %v4080 = vshrl.u32 %v4079, 7
    %v4081 = vsub.s32 %v4078, %v4080
    %v4082 = vrot.slane %v4068, %v4081
    %v4084 = vunpack.c.l.s4 1966171168
    %v4085 = vunpack.c.0.s8 %v4084
    %v4086 = vlaneseq
    %v4087 = vshrl.u32 %v4086, 7
    %v4088 = vsub.s32 %v4085, %v4087
    %v4089 = vrot.slane %v3664, %v4088
    %v4090 = vcombine.low %v4075, %v4082
    %v4092 = vunpack.c.l.s4 1966171168
    %v4093 = vunpack.c.0.s8 %v4092
    %v4094 = vlaneseq
    %v4095 = vshrl.u32 %v4094, 7
    %v4096 = vsub.s32 %v4093, %v4095
    %v4097 = vrot.slane %v4090, %v4096
    %v4099 = vunpack.c.l.s4 1966171168
    %v4100 = vunpack.c.0.s8 %v4099
    %v4101 = vlaneseq
    %v4102 = vshrl.u32 %v4101, 7
    %v4103 = vsub.s32 %v4100, %v4102
    %v4104 = vrot.slane %v4089, %v4103
    %v4105 = vcombine.low %v4097, %v4104
    %4106 = vrot.lane.b32.xlu0 %v4105, 96
    %v4107 = vpop.permute.xlu0 %4106
    %v4108 = vsel %vm785, %v4066, 0
    %v4110 = vsel %vm785, %v4107, 0
    %4112 = vmatprep.subr.mxu0 0.0
    %4113 = vmatpush1.xpose.msra.mxu0 %v4110
    %4114 = vmatprep.subr.mxu0 0.0
    %4115 = vmatpush1.xpose.msra.mxu0 0.0
    %4116 = vmatprep.subr.mxu0 0.0
    %4117 = vmatpush1.xpose.msra.mxu0 0.0
    %4118 = vmatprep.subr.mxu0 0.0
    %4119 = vmatpush1.xpose.msra.mxu0 0.0
    %4120 = vmatprep.subr.mxu0 0.0
    %4121 = vmatpush1.xpose.msra.mxu0 0.0
    %4122 = vmatprep.subr.mxu0 0.0
    %4123 = vmatpush1.xpose.msra.mxu0 0.0
    %4124 = vmatprep.subr.mxu0 0.0
    %4125 = vmatpush1.xpose.msra.mxu0 0.0
    %4126 = vmatprep.subr.mxu0 0.0
    %4127 = vmatpush1.xpose.msra.mxu0 0.0
    %4128 = vmatprep.subr.mxu0 0.0
    %4129 = vmatpush1.xpose.msra.mxu0 0.0
    %4130 = vmatprep.subr.mxu0 0.0
    %4131 = vmatpush1.xpose.msra.mxu0 0.0
    %4132 = vmatprep.subr.mxu0 0.0
    %4133 = vmatpush1.xpose.msra.mxu0 0.0
    %4134 = vmatprep.subr.mxu0 0.0
    %4135 = vmatpush1.xpose.msra.mxu0 0.0
    %4136 = vmatprep.subr.mxu0 0.0
    %4137 = vmatpush1.xpose.msra.mxu0 0.0
    %4138 = vmatprep.subr.mxu0 0.0
    %4139 = vmatpush1.xpose.msra.mxu0 0.0
    %4140 = vmatprep.subr.mxu0 0.0
    %4141 = vmatpush1.xpose.msra.mxu0 0.0
    %4142 = vmatprep.subr.mxu0 0.0
    %4143 = vmatpush1.xpose.msra.mxu0 0.0
    %4144 = vmatprep.subr.mxu0 0.0
    %4145 = vmatpush1.xpose.msra.mxu0 0.0
    %4146 = vmatprep.subr.mxu0 0.0
    %4147 = vmatpush1.xpose.msra.mxu0 0.0
    %4148 = vmatprep.subr.mxu0 0.0
    %4149 = vmatpush1.xpose.msra.mxu0 0.0
    %4150 = vmatprep.subr.mxu0 0.0
    %4151 = vmatpush1.xpose.msra.mxu0 0.0
    %4152 = vmatprep.subr.mxu0 0.0
    %4153 = vmatpush1.xpose.msra.mxu0 0.0
    %4154 = vmatprep.subr.mxu0 0.0
    %4155 = vmatpush1.xpose.msra.mxu0 0.0
    %4156 = vmatprep.subr.mxu0 0.0
    %4157 = vmatpush1.xpose.msra.mxu0 0.0
    %4158 = vmatprep.subr.mxu0 0.0
    %4159 = vmatpush1.xpose.msra.mxu0 0.0
    %4160 = vmatprep.subr.mxu0 0.0
    %4161 = vmatpush1.xpose.msra.mxu0 0.0
    %4162 = vmatprep.subr.mxu0 0.0
    %4163 = vmatpush1.xpose.msra.mxu0 0.0
    %4164 = vmatprep.subr.mxu0 0.0
    %4165 = vmatpush1.xpose.msra.mxu0 0.0
    %4166 = vmatprep.subr.mxu0 0.0
    %4167 = vmatpush1.xpose.msra.mxu0 0.0
    %4168 = vmatprep.subr.mxu0 0.0
    %4169 = vmatpush1.xpose.msra.mxu0 0.0
    %4170 = vmatprep.subr.mxu0 0.0
    %4171 = vmatpush1.xpose.msra.mxu0 0.0
    %4172 = vmatprep.subr.mxu0 0.0
    %4173 = vmatpush1.xpose.msra.mxu0 0.0
    %4174 = vmatprep.subr.mxu0 0.0
    %4175 = vmatpush1.xpose.msra.mxu0 0.0
    %4176 = vmatprep.mubr.f32.mxu0 0.0
    %4177 = vmatmul.mubr.f32.gmra.mrb[0].mxu0 %v4108
    %v4178 = vpop.f32.mrb[0].mxu0
    %v4179 = vadd.f32 0.0, %v4178
    %v4180 = vpop.f32.mrb[0].mxu0
    %4181 = vdwg.mxu0
    %v4187 = vcombine.low %v3700, %v3701
    %v4188 = vcombine.low %v3702, %v3703
    %v4190 = vunpack.c.l.s4 1966171168
    %v4191 = vunpack.c.0.s8 %v4190
    %v4192 = vlaneseq
    %v4193 = vshrl.u32 %v4192, 7
    %v4194 = vsub.s32 %v4191, %v4193
    %v4195 = vrot.slane %v4187, %v4194
    %v4197 = vunpack.c.l.s4 1966171168
    %v4198 = vunpack.c.0.s8 %v4197
    %v4199 = vlaneseq
    %v4200 = vshrl.u32 %v4199, 7
    %v4201 = vsub.s32 %v4198, %v4200
    %v4202 = vrot.slane %v4188, %v4201
    %v4204 = vunpack.c.l.s4 1966171168
    %v4205 = vunpack.c.0.s8 %v4204
    %v4206 = vlaneseq
    %v4207 = vshrl.u32 %v4206, 7
    %v4208 = vsub.s32 %v4205, %v4207
    %v4209 = vrot.slane %v3704, %v4208
    %v4210 = vcombine.low %v4195, %v4202
    %v4212 = vunpack.c.l.s4 1966171168
    %v4213 = vunpack.c.0.s8 %v4212
    %v4214 = vlaneseq
    %v4215 = vshrl.u32 %v4214, 7
    %v4216 = vsub.s32 %v4213, %v4215
    %v4217 = vrot.slane %v4210, %v4216
    %v4219 = vunpack.c.l.s4 1966171168
    %v4220 = vunpack.c.0.s8 %v4219
    %v4221 = vlaneseq
    %v4222 = vshrl.u32 %v4221, 7
    %v4223 = vsub.s32 %v4220, %v4222
    %v4224 = vrot.slane %v4209, %v4223
    %v4225 = vcombine.low %v4217, %v4224
    %v4226 = vcombine.low %v3666, %v3668
    %v4227 = vcombine.low %v3670, %v3672
    %v4229 = vunpack.c.l.s4 1966171168
    %v4230 = vunpack.c.0.s8 %v4229
    %v4231 = vlaneseq
    %v4232 = vshrl.u32 %v4231, 7
    %v4233 = vsub.s32 %v4230, %v4232
    %v4234 = vrot.slane %v4226, %v4233
    %v4236 = vunpack.c.l.s4 1966171168
    %v4237 = vunpack.c.0.s8 %v4236
    %v4238 = vlaneseq
    %v4239 = vshrl.u32 %v4238, 7
    %v4240 = vsub.s32 %v4237, %v4239
    %v4241 = vrot.slane %v4227, %v4240
    %v4243 = vunpack.c.l.s4 1966171168
    %v4244 = vunpack.c.0.s8 %v4243
    %v4245 = vlaneseq
    %v4246 = vshrl.u32 %v4245, 7
    %v4247 = vsub.s32 %v4244, %v4246
    %v4248 = vrot.slane %v3674, %v4247
    %v4249 = vcombine.low %v4234, %v4241
    %v4251 = vunpack.c.l.s4 1966171168
    %v4252 = vunpack.c.0.s8 %v4251
    %v4253 = vlaneseq
    %v4254 = vshrl.u32 %v4253, 7
    %v4255 = vsub.s32 %v4252, %v4254
    %v4256 = vrot.slane %v4249, %v4255
    %v4258 = vunpack.c.l.s4 1966171168
    %v4259 = vunpack.c.0.s8 %v4258
    %v4260 = vlaneseq
    %v4261 = vshrl.u32 %v4260, 7
    %v4262 = vsub.s32 %v4259, %v4261
    %v4263 = vrot.slane %v4248, %v4262
    %v4264 = vcombine.low %v4256, %v4263
    %4265 = vrot.lane.b32.xlu0 %v4264, 96
    %v4266 = vpop.permute.xlu0 %4265
    %v4267 = vsel %vm785, %v4225, 0
    %v4269 = vsel %vm785, %v4266, 0
    %4271 = vmatprep.subr.mxu0 0.0
    %4272 = vmatpush1.xpose.msra.mxu0 %v4269
    %4273 = vmatprep.subr.mxu0 0.0
    %4274 = vmatpush1.xpose.msra.mxu0 0.0
    %4275 = vmatprep.subr.mxu0 0.0
    %4276 = vmatpush1.xpose.msra.mxu0 0.0
    %4277 = vmatprep.subr.mxu0 0.0
    %4278 = vmatpush1.xpose.msra.mxu0 0.0
    %4279 = vmatprep.subr.mxu0 0.0
    %4280 = vmatpush1.xpose.msra.mxu0 0.0
    %4281 = vmatprep.subr.mxu0 0.0
    %4282 = vmatpush1.xpose.msra.mxu0 0.0
    %4283 = vmatprep.subr.mxu0 0.0
    %4284 = vmatpush1.xpose.msra.mxu0 0.0
    %4285 = vmatprep.subr.mxu0 0.0
    %4286 = vmatpush1.xpose.msra.mxu0 0.0
    %4287 = vmatprep.subr.mxu0 0.0
    %4288 = vmatpush1.xpose.msra.mxu0 0.0
    %4289 = vmatprep.subr.mxu0 0.0
    %4290 = vmatpush1.xpose.msra.mxu0 0.0
    %4291 = vmatprep.subr.mxu0 0.0
    %4292 = vmatpush1.xpose.msra.mxu0 0.0
    %4293 = vmatprep.subr.mxu0 0.0
    %4294 = vmatpush1.xpose.msra.mxu0 0.0
    %4295 = vmatprep.subr.mxu0 0.0
    %4296 = vmatpush1.xpose.msra.mxu0 0.0
    %4297 = vmatprep.subr.mxu0 0.0
    %4298 = vmatpush1.xpose.msra.mxu0 0.0
    %4299 = vmatprep.subr.mxu0 0.0
    %4300 = vmatpush1.xpose.msra.mxu0 0.0
    %4301 = vmatprep.subr.mxu0 0.0
    %4302 = vmatpush1.xpose.msra.mxu0 0.0
    %4303 = vmatprep.subr.mxu0 0.0
    %4304 = vmatpush1.xpose.msra.mxu0 0.0
    %4305 = vmatprep.subr.mxu0 0.0
    %4306 = vmatpush1.xpose.msra.mxu0 0.0
    %4307 = vmatprep.subr.mxu0 0.0
    %4308 = vmatpush1.xpose.msra.mxu0 0.0
    %4309 = vmatprep.subr.mxu0 0.0
    %4310 = vmatpush1.xpose.msra.mxu0 0.0
    %4311 = vmatprep.subr.mxu0 0.0
    %4312 = vmatpush1.xpose.msra.mxu0 0.0
    %4313 = vmatprep.subr.mxu0 0.0
    %4314 = vmatpush1.xpose.msra.mxu0 0.0
    %4315 = vmatprep.subr.mxu0 0.0
    %4316 = vmatpush1.xpose.msra.mxu0 0.0
    %4317 = vmatprep.subr.mxu0 0.0
    %4318 = vmatpush1.xpose.msra.mxu0 0.0
    %4319 = vmatprep.subr.mxu0 0.0
    %4320 = vmatpush1.xpose.msra.mxu0 0.0
    %4321 = vmatprep.subr.mxu0 0.0
    %4322 = vmatpush1.xpose.msra.mxu0 0.0
    %4323 = vmatprep.subr.mxu0 0.0
    %4324 = vmatpush1.xpose.msra.mxu0 0.0
    %4325 = vmatprep.subr.mxu0 0.0
    %4326 = vmatpush1.xpose.msra.mxu0 0.0
    %4327 = vmatprep.subr.mxu0 0.0
    %4328 = vmatpush1.xpose.msra.mxu0 0.0
    %4329 = vmatprep.subr.mxu0 0.0
    %4330 = vmatpush1.xpose.msra.mxu0 0.0
    %4331 = vmatprep.subr.mxu0 0.0
    %4332 = vmatpush1.xpose.msra.mxu0 0.0
    %4333 = vmatprep.subr.mxu0 0.0
    %4334 = vmatpush1.xpose.msra.mxu0 0.0
    %4335 = vmatprep.mubr.f32.mxu0 0.0
    %4336 = vmatmul.mubr.f32.gmra.mrb[0].mxu0 %v4267
    %v4337 = vpop.f32.mrb[0].mxu0
    %v4338 = vadd.f32 0.0, %v4337
    %v4339 = vpop.f32.mrb[0].mxu0
    %4340 = vdwg.mxu0
    %v4341 = vsel %vm1337, %v3861, -inf
    %4342 = vmax.xlane.f32.xlu0 %v4341
    %v4343 = vpop.xlane.xlu0 %4342
    %v4344 = vsel %vm1337, %v4020, -inf
    %4345 = vmax.xlane.f32.xlu0 %v4344
    %v4346 = vpop.xlane.xlu0 %4345
    %v4347 = vsel %vm1337, %v4179, -inf
    %4348 = vmax.xlane.f32.xlu0 %v4347
    %v4349 = vpop.xlane.xlu0 %4348
    %v4350 = vsel %vm1337, %v4338, -inf
    %4351 = vmax.xlane.f32.xlu0 %v4350
    %v4352 = vpop.xlane.xlu0 %4351
    %v4353 = vsub.f32 %v3861, %v4343
    %v4354 = vsub.f32 %v4020, %v4346
    %v4355 = vsub.f32 %v4179, %v4349
    %v4356 = vsub.f32 %v4338, %v4352
    %v4357 = vmul.f32 %v4353, 1.442695
    %v4358 = vpow.pop %v4357
    %v4359 = vmul.f32 %v4354, 1.442695
    %v4360 = vpow.pop %v4359
    %v4361 = vmul.f32 %v4355, 1.442695
    %v4362 = vpow.pop %v4361
    %v4363 = vmul.f32 %v4356, 1.442695
    %v4364 = vpow.pop %v4363
    %v4365 = vsel %vm1337, %v4358, 0.0
    %4366 = vadd.xlane.f32.xlu0 %v4365
    %v4367 = vpop.xlane.xlu0 %4366
    %v4368 = vsel %vm1337, %v4360, 0.0
    %4369 = vadd.xlane.f32.xlu0 %v4368
    %v4370 = vpop.xlane.xlu0 %4369
    %v4371 = vsel %vm1337, %v4362, 0.0
    %4372 = vadd.xlane.f32.xlu0 %v4371
    %v4373 = vpop.xlane.xlu0 %4372
    %v4374 = vsel %vm1337, %v4364, 0.0
    %4375 = vadd.xlane.f32.xlu0 %v4374
    %v4376 = vpop.xlane.xlu0 %4375
    %v4377 = vrcp.pop %v4367
    %v4378 = vmul.f32 %v4358, %v4377
    %v4379 = vrcp.pop %v4370
    %v4380 = vmul.f32 %v4360, %v4379
    %v4381 = vrcp.pop %v4373
    %v4382 = vmul.f32 %v4362, %v4381
    %v4383 = vrcp.pop %v4376
    %v4384 = vmul.f32 %v4364, %v4383
    %4385 = vrot.lane.b32.xlu0 %v3787, 64
    %v4386 = vpop.permute.xlu0 %4385
    %v4388 = vsel %vm1384, %v4378, 0
    %v4390 = vsel %vm1388, %v4386, 0
    %4392 = vmatprep.subr.mxu0 0.0
    %4393 = vmatpush1.msra.mxu0 %v4390
    %4394 = vmatprep.subr.mxu0 0.0
    %4395 = vmatpush1.msra.mxu0 0.0
    %4396 = vmatprep.subr.mxu0 0.0
    %4397 = vmatpush1.msra.mxu0 0.0
    %4398 = vmatprep.subr.mxu0 0.0
    %4399 = vmatpush1.msra.mxu0 0.0
    %4400 = vmatprep.subr.mxu0 0.0
    %4401 = vmatpush1.msra.mxu0 0.0
    %4402 = vmatprep.subr.mxu0 0.0
    %4403 = vmatpush1.msra.mxu0 0.0
    %4404 = vmatprep.subr.mxu0 0.0
    %4405 = vmatpush1.msra.mxu0 0.0
    %4406 = vmatprep.subr.mxu0 0.0
    %4407 = vmatpush1.msra.mxu0 0.0
    %4408 = vmatprep.subr.mxu0 0.0
    %4409 = vmatpush1.msra.mxu0 0.0
    %4410 = vmatprep.subr.mxu0 0.0
    %4411 = vmatpush1.msra.mxu0 0.0
    %4412 = vmatprep.subr.mxu0 0.0
    %4413 = vmatpush1.msra.mxu0 0.0
    %4414 = vmatprep.subr.mxu0 0.0
    %4415 = vmatpush1.msra.mxu0 0.0
    %4416 = vmatprep.subr.mxu0 0.0
    %4417 = vmatpush1.msra.mxu0 0.0
    %4418 = vmatprep.subr.mxu0 0.0
    %4419 = vmatpush1.msra.mxu0 0.0
    %4420 = vmatprep.subr.mxu0 0.0
    %4421 = vmatpush1.msra.mxu0 0.0
    %4422 = vmatprep.subr.mxu0 0.0
    %4423 = vmatpush1.msra.mxu0 0.0
    %4424 = vmatprep.subr.mxu0 0.0
    %4425 = vmatpush1.msra.mxu0 0.0
    %4426 = vmatprep.subr.mxu0 0.0
    %4427 = vmatpush1.msra.mxu0 0.0
    %4428 = vmatprep.subr.mxu0 0.0
    %4429 = vmatpush1.msra.mxu0 0.0
    %4430 = vmatprep.subr.mxu0 0.0
    %4431 = vmatpush1.msra.mxu0 0.0
    %4432 = vmatprep.subr.mxu0 0.0
    %4433 = vmatpush1.msra.mxu0 0.0
    %4434 = vmatprep.subr.mxu0 0.0
    %4435 = vmatpush1.msra.mxu0 0.0
    %4436 = vmatprep.subr.mxu0 0.0
    %4437 = vmatpush1.msra.mxu0 0.0
    %4438 = vmatprep.subr.mxu0 0.0
    %4439 = vmatpush1.msra.mxu0 0.0
    %4440 = vmatprep.subr.mxu0 0.0
    %4441 = vmatpush1.msra.mxu0 0.0
    %4442 = vmatprep.subr.mxu0 0.0
    %4443 = vmatpush1.msra.mxu0 0.0
    %4444 = vmatprep.subr.mxu0 0.0
    %4445 = vmatpush1.msra.mxu0 0.0
    %4446 = vmatprep.subr.mxu0 0.0
    %4447 = vmatpush1.msra.mxu0 0.0
    %4448 = vmatprep.subr.mxu0 0.0
    %4449 = vmatpush1.msra.mxu0 0.0
    %4450 = vmatprep.subr.mxu0 0.0
    %4451 = vmatpush1.msra.mxu0 0.0
    %4452 = vmatprep.subr.mxu0 0.0
    %4453 = vmatpush1.msra.mxu0 0.0
    %4454 = vmatprep.subr.mxu0 0.0
    %4455 = vmatpush1.msra.mxu0 0.0
    %4456 = vmatprep.mubr.f32.mxu0 0.0
    %4457 = vmatmul.mubr.f32.gmra.mrb[0].mxu0 %v4388
    %v4458 = vpop.f32.mrb[0].mxu0
    %v4459 = vadd.f32 0.0, %v4458
    %v4460 = vpop.f32.mrb[0].mxu0
    %4461 = vdwg.mxu0
    %4462 = vrot.lane.b32.xlu0 %v3946, 64
    %v4463 = vpop.permute.xlu0 %4462
    %v4465 = vsel %vm1384, %v4380, 0
    %v4467 = vsel %vm1388, %v4463, 0
    %4469 = vmatprep.subr.mxu0 0.0
    %4470 = vmatpush1.msra.mxu0 %v4467
    %4471 = vmatprep.subr.mxu0 0.0
    %4472 = vmatpush1.msra.mxu0 0.0
    %4473 = vmatprep.subr.mxu0 0.0
    %4474 = vmatpush1.msra.mxu0 0.0
    %4475 = vmatprep.subr.mxu0 0.0
    %4476 = vmatpush1.msra.mxu0 0.0
    %4477 = vmatprep.subr.mxu0 0.0
    %4478 = vmatpush1.msra.mxu0 0.0
    %4479 = vmatprep.subr.mxu0 0.0
    %4480 = vmatpush1.msra.mxu0 0.0
    %4481 = vmatprep.subr.mxu0 0.0
    %4482 = vmatpush1.msra.mxu0 0.0
    %4483 = vmatprep.subr.mxu0 0.0
    %4484 = vmatpush1.msra.mxu0 0.0
    %4485 = vmatprep.subr.mxu0 0.0
    %4486 = vmatpush1.msra.mxu0 0.0
    %4487 = vmatprep.subr.mxu0 0.0
    %4488 = vmatpush1.msra.mxu0 0.0
    %4489 = vmatprep.subr.mxu0 0.0
    %4490 = vmatpush1.msra.mxu0 0.0
    %4491 = vmatprep.subr.mxu0 0.0
    %4492 = vmatpush1.msra.mxu0 0.0
    %4493 = vmatprep.subr.mxu0 0.0
    %4494 = vmatpush1.msra.mxu0 0.0
    %4495 = vmatprep.subr.mxu0 0.0
    %4496 = vmatpush1.msra.mxu0 0.0
    %4497 = vmatprep.subr.mxu0 0.0
    %4498 = vmatpush1.msra.mxu0 0.0
    %4499 = vmatprep.subr.mxu0 0.0
    %4500 = vmatpush1.msra.mxu0 0.0
    %4501 = vmatprep.subr.mxu0 0.0
    %4502 = vmatpush1.msra.mxu0 0.0
    %4503 = vmatprep.subr.mxu0 0.0
    %4504 = vmatpush1.msra.mxu0 0.0
    %4505 = vmatprep.subr.mxu0 0.0
    %4506 = vmatpush1.msra.mxu0 0.0
    %4507 = vmatprep.subr.mxu0 0.0
    %4508 = vmatpush1.msra.mxu0 0.0
    %4509 = vmatprep.subr.mxu0 0.0
    %4510 = vmatpush1.msra.mxu0 0.0
    %4511 = vmatprep.subr.mxu0 0.0
    %4512 = vmatpush1.msra.mxu0 0.0
    %4513 = vmatprep.subr.mxu0 0.0
    %4514 = vmatpush1.msra.mxu0 0.0
    %4515 = vmatprep.subr.mxu0 0.0
    %4516 = vmatpush1.msra.mxu0 0.0
    %4517 = vmatprep.subr.mxu0 0.0
    %4518 = vmatpush1.msra.mxu0 0.0
    %4519 = vmatprep.subr.mxu0 0.0
    %4520 = vmatpush1.msra.mxu0 0.0
    %4521 = vmatprep.subr.mxu0 0.0
    %4522 = vmatpush1.msra.mxu0 0.0
    %4523 = vmatprep.subr.mxu0 0.0
    %4524 = vmatpush1.msra.mxu0 0.0
    %4525 = vmatprep.subr.mxu0 0.0
    %4526 = vmatpush1.msra.mxu0 0.0
    %4527 = vmatprep.subr.mxu0 0.0
    %4528 = vmatpush1.msra.mxu0 0.0
    %4529 = vmatprep.subr.mxu0 0.0
    %4530 = vmatpush1.msra.mxu0 0.0
    %4531 = vmatprep.subr.mxu0 0.0
    %4532 = vmatpush1.msra.mxu0 0.0
    %4533 = vmatprep.mubr.f32.mxu0 0.0
    %4534 = vmatmul.mubr.f32.gmra.mrb[0].mxu0 %v4465
    %v4535 = vpop.f32.mrb[0].mxu0
    %v4536 = vadd.f32 0.0, %v4535
    %v4537 = vpop.f32.mrb[0].mxu0
    %4538 = vdwg.mxu0
    %4539 = vrot.lane.b32.xlu0 %v4105, 64
    %v4540 = vpop.permute.xlu0 %4539
    %v4542 = vsel %vm1384, %v4382, 0
    %v4544 = vsel %vm1388, %v4540, 0
    %4546 = vmatprep.subr.mxu0 0.0
    %4547 = vmatpush1.msra.mxu0 %v4544
    %4548 = vmatprep.subr.mxu0 0.0
    %4549 = vmatpush1.msra.mxu0 0.0
    %4550 = vmatprep.subr.mxu0 0.0
    %4551 = vmatpush1.msra.mxu0 0.0
    %4552 = vmatprep.subr.mxu0 0.0
    %4553 = vmatpush1.msra.mxu0 0.0
    %4554 = vmatprep.subr.mxu0 0.0
    %4555 = vmatpush1.msra.mxu0 0.0
    %4556 = vmatprep.subr.mxu0 0.0
    %4557 = vmatpush1.msra.mxu0 0.0
    %4558 = vmatprep.subr.mxu0 0.0
    %4559 = vmatpush1.msra.mxu0 0.0
    %4560 = vmatprep.subr.mxu0 0.0
    %4561 = vmatpush1.msra.mxu0 0.0
    %4562 = vmatprep.subr.mxu0 0.0
    %4563 = vmatpush1.msra.mxu0 0.0
    %4564 = vmatprep.subr.mxu0 0.0
    %4565 = vmatpush1.msra.mxu0 0.0
    %4566 = vmatprep.subr.mxu0 0.0
    %4567 = vmatpush1.msra.mxu0 0.0
    %4568 = vmatprep.subr.mxu0 0.0
    %4569 = vmatpush1.msra.mxu0 0.0
    %4570 = vmatprep.subr.mxu0 0.0
    %4571 = vmatpush1.msra.mxu0 0.0
    %4572 = vmatprep.subr.mxu0 0.0
    %4573 = vmatpush1.msra.mxu0 0.0
    %4574 = vmatprep.subr.mxu0 0.0
    %4575 = vmatpush1.msra.mxu0 0.0
    %4576 = vmatprep.subr.mxu0 0.0
    %4577 = vmatpush1.msra.mxu0 0.0
    %4578 = vmatprep.subr.mxu0 0.0
    %4579 = vmatpush1.msra.mxu0 0.0
    %4580 = vmatprep.subr.mxu0 0.0
    %4581 = vmatpush1.msra.mxu0 0.0
    %4582 = vmatprep.subr.mxu0 0.0
    %4583 = vmatpush1.msra.mxu0 0.0
    %4584 = vmatprep.subr.mxu0 0.0
    %4585 = vmatpush1.msra.mxu0 0.0
    %4586 = vmatprep.subr.mxu0 0.0
    %4587 = vmatpush1.msra.mxu0 0.0
    %4588 = vmatprep.subr.mxu0 0.0
    %4589 = vmatpush1.msra.mxu0 0.0
    %4590 = vmatprep.subr.mxu0 0.0
    %4591 = vmatpush1.msra.mxu0 0.0
    %4592 = vmatprep.subr.mxu0 0.0
    %4593 = vmatpush1.msra.mxu0 0.0
    %4594 = vmatprep.subr.mxu0 0.0
    %4595 = vmatpush1.msra.mxu0 0.0
    %4596 = vmatprep.subr.mxu0 0.0
    %4597 = vmatpush1.msra.mxu0 0.0
    %4598 = vmatprep.subr.mxu0 0.0
    %4599 = vmatpush1.msra.mxu0 0.0
    %4600 = vmatprep.subr.mxu0 0.0
    %4601 = vmatpush1.msra.mxu0 0.0
    %4602 = vmatprep.subr.mxu0 0.0
    %4603 = vmatpush1.msra.mxu0 0.0
    %4604 = vmatprep.subr.mxu0 0.0
    %4605 = vmatpush1.msra.mxu0 0.0
    %4606 = vmatprep.subr.mxu0 0.0
    %4607 = vmatpush1.msra.mxu0 0.0
    %4608 = vmatprep.subr.mxu0 0.0
    %4609 = vmatpush1.msra.mxu0 0.0
    %4610 = vmatprep.mubr.f32.mxu0 0.0
    %4611 = vmatmul.mubr.f32.gmra.mrb[0].mxu0 %v4542
    %v4612 = vpop.f32.mrb[0].mxu0
    %v4613 = vadd.f32 0.0, %v4612
    %v4614 = vpop.f32.mrb[0].mxu0
    %4615 = vdwg.mxu0
    %4616 = vrot.lane.b32.xlu0 %v4264, 64
    %v4617 = vpop.permute.xlu0 %4616
    %v4619 = vsel %vm1384, %v4384, 0
    %v4621 = vsel %vm1388, %v4617, 0
    %4623 = vmatprep.subr.mxu0 0.0
    %4624 = vmatpush1.msra.mxu0 %v4621
    %4625 = vmatprep.subr.mxu0 0.0
    %4626 = vmatpush1.msra.mxu0 0.0
    %4627 = vmatprep.subr.mxu0 0.0
    %4628 = vmatpush1.msra.mxu0 0.0
    %4629 = vmatprep.subr.mxu0 0.0
    %4630 = vmatpush1.msra.mxu0 0.0
    %4631 = vmatprep.subr.mxu0 0.0
    %4632 = vmatpush1.msra.mxu0 0.0
    %4633 = vmatprep.subr.mxu0 0.0
    %4634 = vmatpush1.msra.mxu0 0.0
    %4635 = vmatprep.subr.mxu0 0.0
    %4636 = vmatpush1.msra.mxu0 0.0
    %4637 = vmatprep.subr.mxu0 0.0
    %4638 = vmatpush1.msra.mxu0 0.0
    %4639 = vmatprep.subr.mxu0 0.0
    %4640 = vmatpush1.msra.mxu0 0.0
    %4641 = vmatprep.subr.mxu0 0.0
    %4642 = vmatpush1.msra.mxu0 0.0
    %4643 = vmatprep.subr.mxu0 0.0
    %4644 = vmatpush1.msra.mxu0 0.0
    %4645 = vmatprep.subr.mxu0 0.0
    %4646 = vmatpush1.msra.mxu0 0.0
    %4647 = vmatprep.subr.mxu0 0.0
    %4648 = vmatpush1.msra.mxu0 0.0
    %4649 = vmatprep.subr.mxu0 0.0
    %4650 = vmatpush1.msra.mxu0 0.0
    %4651 = vmatprep.subr.mxu0 0.0
    %4652 = vmatpush1.msra.mxu0 0.0
    %4653 = vmatprep.subr.mxu0 0.0
    %4654 = vmatpush1.msra.mxu0 0.0
    %4655 = vmatprep.subr.mxu0 0.0
    %4656 = vmatpush1.msra.mxu0 0.0
    %4657 = vmatprep.subr.mxu0 0.0
    %4658 = vmatpush1.msra.mxu0 0.0
    %4659 = vmatprep.subr.mxu0 0.0
    %4660 = vmatpush1.msra.mxu0 0.0
    %4661 = vmatprep.subr.mxu0 0.0
    %4662 = vmatpush1.msra.mxu0 0.0
    %4663 = vmatprep.subr.mxu0 0.0
    %4664 = vmatpush1.msra.mxu0 0.0
    %4665 = vmatprep.subr.mxu0 0.0
    %4666 = vmatpush1.msra.mxu0 0.0
    %4667 = vmatprep.subr.mxu0 0.0
    %4668 = vmatpush1.msra.mxu0 0.0
    %4669 = vmatprep.subr.mxu0 0.0
    %4670 = vmatpush1.msra.mxu0 0.0
    %4671 = vmatprep.subr.mxu0 0.0
    %4672 = vmatpush1.msra.mxu0 0.0
    %4673 = vmatprep.subr.mxu0 0.0
    %4674 = vmatpush1.msra.mxu0 0.0
    %4675 = vmatprep.subr.mxu0 0.0
    %4676 = vmatpush1.msra.mxu0 0.0
    %4677 = vmatprep.subr.mxu0 0.0
    %4678 = vmatpush1.msra.mxu0 0.0
    %4679 = vmatprep.subr.mxu0 0.0
    %4680 = vmatpush1.msra.mxu0 0.0
    %4681 = vmatprep.subr.mxu0 0.0
    %4682 = vmatpush1.msra.mxu0 0.0
    %4683 = vmatprep.subr.mxu0 0.0
    %4684 = vmatpush1.msra.mxu0 0.0
    %4685 = vmatprep.subr.mxu0 0.0
    %4686 = vmatpush1.msra.mxu0 0.0
    %4687 = vmatprep.mubr.f32.mxu0 0.0
    %4688 = vmatmul.mubr.f32.gmra.mrb[0].mxu0 %v4619
    %v4689 = vpop.f32.mrb[0].mxu0
    %v4690 = vadd.f32 0.0, %v4689
    %v4691 = vpop.f32.mrb[0].mxu0
    %4692 = vdwg.mxu0
    %4695 = vrot.lane.b32.xlu0 %v4613, 16
    %v4696 = vpop.permute.xlu0 %4695
    %4697 = vrot.lane.b32.xlu0 %v4690, 16
    %v4698 = vpop.permute.xlu0 %4697
    %v4701 = vsel %vm785, %v4459, %v4696
    %v4702 = vsel %vm785, %v4536, %v4698
    %s4703 = scalar_lea.vmem %s5, 32
    %v4704 = vld [vmem:[%s4703] sm:$0xff]
    %v4705 = vld [vmem:[%s4703 + $0x8] sm:$0xff]
    %v4706 = vld [vmem:[%s4703 + $0x10] sm:$0xff]
    %v4707 = vld [vmem:[%s4703 + $0x18] sm:$0xff]
    %v4708 = vlaneseq
    %v4709 = vshrl.u32 %v4708, 7
    %v4710 = vsub.s32 1, %v4709
    %v4711 = vrot.slane %v3207, %v4710
    %v4714 = vcombine.high %v4701, %v4701
    %v4716 = vunpack.c.l.s4 1966171168
    %v4717 = vunpack.c.0.s8 %v4716
    %v4718 = vlaneseq
    %v4719 = vshrl.u32 %v4718, 7
    %v4720 = vsub.s32 %v4717, %v4719
    %v4721 = vrot.slane %v4701, %v4720
    %v4723 = vunpack.c.l.s4 1966171168
    %v4724 = vunpack.c.0.s8 %v4723
    %v4725 = vlaneseq
    %v4726 = vshrl.u32 %v4725, 7
    %v4727 = vsub.s32 %v4724, %v4726
    %v4728 = vrot.slane %v4714, %v4727
    %v4729 = vcombine.high %v4721, %v4721
    %v4731 = vunpack.c.l.s4 1966171168
    %v4732 = vunpack.c.0.s8 %v4731
    %v4733 = vlaneseq
    %v4734 = vshrl.u32 %v4733, 7
    %v4735 = vsub.s32 %v4732, %v4734
    %v4736 = vrot.slane %v4721, %v4735
    %v4738 = vunpack.c.l.s4 1966171168
    %v4739 = vunpack.c.0.s8 %v4738
    %v4740 = vlaneseq
    %v4741 = vshrl.u32 %v4740, 7
    %v4742 = vsub.s32 %v4739, %v4741
    %v4743 = vrot.slane %v4728, %v4742
    %v4745 = vunpack.c.l.s4 1966171168
    %v4746 = vunpack.c.0.s8 %v4745
    %v4747 = vlaneseq
    %v4748 = vshrl.u32 %v4747, 7
    %v4749 = vsub.s32 %v4746, %v4748
    %v4750 = vrot.slane %v4729, %v4749
    %v4751 = vcombine.high %v4736, %v4736
    %v4752 = vcombine.high %v4750, %v4750
    %v4753 = vcombine.high %v4702, %v4702
    %v4755 = vunpack.c.l.s4 1966171168
    %v4756 = vunpack.c.0.s8 %v4755
    %v4757 = vlaneseq
    %v4758 = vshrl.u32 %v4757, 7
    %v4759 = vsub.s32 %v4756, %v4758
    %v4760 = vrot.slane %v4702, %v4759
    %v4762 = vunpack.c.l.s4 1966171168
    %v4763 = vunpack.c.0.s8 %v4762
    %v4764 = vlaneseq
    %v4765 = vshrl.u32 %v4764, 7
    %v4766 = vsub.s32 %v4763, %v4765
    %v4767 = vrot.slane %v4753, %v4766
    %v4768 = vcombine.high %v4760, %v4760
    %v4770 = vunpack.c.l.s4 1966171168
    %v4771 = vunpack.c.0.s8 %v4770
    %v4772 = vlaneseq
    %v4773 = vshrl.u32 %v4772, 7
    %v4774 = vsub.s32 %v4771, %v4773
    %v4775 = vrot.slane %v4760, %v4774
    %v4777 = vunpack.c.l.s4 1966171168
    %v4778 = vunpack.c.0.s8 %v4777
    %v4779 = vlaneseq
    %v4780 = vshrl.u32 %v4779, 7
    %v4781 = vsub.s32 %v4778, %v4780
    %v4782 = vrot.slane %v4767, %v4781
    %v4784 = vunpack.c.l.s4 1966171168
    %v4785 = vunpack.c.0.s8 %v4784
    %v4786 = vlaneseq
    %v4787 = vshrl.u32 %v4786, 7
    %v4788 = vsub.s32 %v4785, %v4787
    %v4789 = vrot.slane %v4768, %v4788
    %v4790 = vcombine.high %v4775, %v4775
    %v4791 = vcombine.high %v4789, %v4789
    %v4793 = vcombine.high %v4711, %v4711
    %v4795 = vunpack.c.l.s4 1966171168
    %v4796 = vunpack.c.0.s8 %v4795
    %v4797 = vlaneseq
    %v4798 = vshrl.u32 %v4797, 7
    %v4799 = vsub.s32 %v4796, %v4798
    %v4800 = vrot.slane %v4711, %v4799
    %v4802 = vunpack.c.l.s4 1966171168
    %v4803 = vunpack.c.0.s8 %v4802
    %v4804 = vlaneseq
    %v4805 = vshrl.u32 %v4804, 7
    %v4806 = vsub.s32 %v4803, %v4805
    %v4807 = vrot.slane %v4793, %v4806
    %v4808 = vcombine.high %v4800, %v4800
    %v4810 = vunpack.c.l.s4 1966171168
    %v4811 = vunpack.c.0.s8 %v4810
    %v4812 = vlaneseq
    %v4813 = vshrl.u32 %v4812, 7
    %v4814 = vsub.s32 %v4811, %v4813
    %v4815 = vrot.slane %v4800, %v4814
    %v4817 = vunpack.c.l.s4 1966171168
    %v4818 = vunpack.c.0.s8 %v4817
    %v4819 = vlaneseq
    %v4820 = vshrl.u32 %v4819, 7
    %v4821 = vsub.s32 %v4818, %v4820
    %v4822 = vrot.slane %v4807, %v4821
    %v4824 = vunpack.c.l.s4 1966171168
    %v4825 = vunpack.c.0.s8 %v4824
    %v4826 = vlaneseq
    %v4827 = vshrl.u32 %v4826, 7
    %v4828 = vsub.s32 %v4825, %v4827
    %v4829 = vrot.slane %v4808, %v4828
    %v4830 = vcombine.high %v4815, %v4815
    %v4831 = vcombine.high %v4829, %v4829
    %v4832 = vcombine.low %v4736, %v4750
    %v4833 = vcombine.low %v4751, %v4752
    %v4834 = vcombine.low %v4743, %v4775
    %v4835 = vcombine.low %v4789, %v4790
    %v4837 = vunpack.c.l.s4 1966171168
    %v4838 = vunpack.c.0.s8 %v4837
    %v4839 = vlaneseq
    %v4840 = vshrl.u32 %v4839, 7
    %v4841 = vsub.s32 %v4838, %v4840
    %v4842 = vrot.slane %v4832, %v4841
    %v4844 = vunpack.c.l.s4 1966171168
    %v4845 = vunpack.c.0.s8 %v4844
    %v4846 = vlaneseq
    %v4847 = vshrl.u32 %v4846, 7
    %v4848 = vsub.s32 %v4845, %v4847
    %v4849 = vrot.slane %v4833, %v4848
    %v4851 = vunpack.c.l.s4 1966171168
    %v4852 = vunpack.c.0.s8 %v4851
    %v4853 = vlaneseq
    %v4854 = vshrl.u32 %v4853, 7
    %v4855 = vsub.s32 %v4852, %v4854
    %v4856 = vrot.slane %v4834, %v4855
    %v4858 = vunpack.c.l.s4 1966171168
    %v4859 = vunpack.c.0.s8 %v4858
    %v4860 = vlaneseq
    %v4861 = vshrl.u32 %v4860, 7
    %v4862 = vsub.s32 %v4859, %v4861
    %v4863 = vrot.slane %v4835, %v4862
    %v4864 = vcombine.low %v4842, %v4849
    %v4865 = vcombine.low %v4856, %v4863
    %v4867 = vunpack.c.l.s4 1966171168
    %v4868 = vunpack.c.0.s8 %v4867
    %v4869 = vlaneseq
    %v4870 = vshrl.u32 %v4869, 7
    %v4871 = vsub.s32 %v4868, %v4870
    %v4872 = vrot.slane %v4864, %v4871
    %v4874 = vunpack.c.l.s4 1966171168
    %v4875 = vunpack.c.0.s8 %v4874
    %v4876 = vlaneseq
    %v4877 = vshrl.u32 %v4876, 7
    %v4878 = vsub.s32 %v4875, %v4877
    %v4879 = vrot.slane %v4865, %v4878
    %v4880 = vcombine.low %v4872, %v4879
    %v4881 = vcombine.low %v4791, %v4782
    %v4883 = vunpack.c.l.s4 1966171168
    %v4884 = vunpack.c.0.s8 %v4883
    %v4885 = vlaneseq
    %v4886 = vshrl.u32 %v4885, 7
    %v4887 = vsub.s32 %v4884, %v4886
    %v4888 = vrot.slane %v4881, %v4887
    %v4890 = vunpack.c.l.s4 1966171168
    %v4891 = vunpack.c.0.s8 %v4890
    %v4892 = vlaneseq
    %v4893 = vshrl.u32 %v4892, 7
    %v4894 = vsub.s32 %v4891, %v4893
    %v4895 = vrot.slane %v4888, %v4894
    %v4896 = vcombine.low %v4815, %v4829
    %v4897 = vcombine.low %v4830, %v4831
    %v4898 = vcombine.low %v4822, %v4815
    %v4899 = vcombine.low %v4829, %v4830
    %v4901 = vunpack.c.l.s4 1966171168
    %v4902 = vunpack.c.0.s8 %v4901
    %v4903 = vlaneseq
    %v4904 = vshrl.u32 %v4903, 7
    %v4905 = vsub.s32 %v4902, %v4904
    %v4906 = vrot.slane %v4896, %v4905
    %v4908 = vunpack.c.l.s4 1966171168
    %v4909 = vunpack.c.0.s8 %v4908
    %v4910 = vlaneseq
    %v4911 = vshrl.u32 %v4910, 7
    %v4912 = vsub.s32 %v4909, %v4911
    %v4913 = vrot.slane %v4897, %v4912
    %v4915 = vunpack.c.l.s4 1966171168
    %v4916 = vunpack.c.0.s8 %v4915
    %v4917 = vlaneseq
    %v4918 = vshrl.u32 %v4917, 7
    %v4919 = vsub.s32 %v4916, %v4918
    %v4920 = vrot.slane %v4898, %v4919
    %v4922 = vunpack.c.l.s4 1966171168
    %v4923 = vunpack.c.0.s8 %v4922
    %v4924 = vlaneseq
    %v4925 = vshrl.u32 %v4924, 7
    %v4926 = vsub.s32 %v4923, %v4925
    %v4927 = vrot.slane %v4899, %v4926
    %v4928 = vcombine.low %v4906, %v4913
    %v4929 = vcombine.low %v4920, %v4927
    %v4931 = vunpack.c.l.s4 1966171168
    %v4932 = vunpack.c.0.s8 %v4931
    %v4933 = vlaneseq
    %v4934 = vshrl.u32 %v4933, 7
    %v4935 = vsub.s32 %v4932, %v4934
    %v4936 = vrot.slane %v4928, %v4935
    %v4938 = vunpack.c.l.s4 1966171168
    %v4939 = vunpack.c.0.s8 %v4938
    %v4940 = vlaneseq
    %v4941 = vshrl.u32 %v4940, 7
    %v4942 = vsub.s32 %v4939, %v4941
    %v4943 = vrot.slane %v4929, %v4942
    %v4944 = vcombine.low %v4936, %v4943
    %v4945 = vcombine.low %v4831, %v4822
    %v4947 = vunpack.c.l.s4 1966171168
    %v4948 = vunpack.c.0.s8 %v4947
    %v4949 = vlaneseq
    %v4950 = vshrl.u32 %v4949, 7
    %v4951 = vsub.s32 %v4948, %v4950
    %v4952 = vrot.slane %v4945, %v4951
    %v4954 = vunpack.c.l.s4 1966171168
    %v4955 = vunpack.c.0.s8 %v4954
    %v4956 = vlaneseq
    %v4957 = vshrl.u32 %v4956, 7
    %v4958 = vsub.s32 %v4955, %v4957
    %v4959 = vrot.slane %v4952, %v4958
    %v4962 = vsel %vm487, %v4880, 0
    %v4964 = vsel %vm487, %v4895, 0
    %4966 = vmatprep.subr.mxu0 0.0
    %4967 = vmatpush1.msra.mxu0 %v4704
    %4968 = vmatprep.subr.mxu0 0.0
    %4969 = vmatpush1.msra.mxu0 %v4705
    %4970 = vmatprep.subr.mxu0 0.0
    %4971 = vmatpush1.msra.mxu0 %v4706
    %4972 = vmatprep.subr.mxu0 0.0
    %4973 = vmatpush1.msra.mxu0 %v4707
    %4974 = vmatprep.subr.mxu0 0.0
    %4975 = vmatpush1.msra.mxu0 0.0
    %4976 = vmatprep.subr.mxu0 0.0
    %4977 = vmatpush1.msra.mxu0 0.0
    %4978 = vmatprep.subr.mxu0 0.0
    %4979 = vmatpush1.msra.mxu0 0.0
    %4980 = vmatprep.subr.mxu0 0.0
    %4981 = vmatpush1.msra.mxu0 0.0
    %4982 = vmatprep.subr.mxu0 0.0
    %4983 = vmatpush1.msra.mxu0 0.0
    %4984 = vmatprep.subr.mxu0 0.0
    %4985 = vmatpush1.msra.mxu0 0.0
    %4986 = vmatprep.subr.mxu0 0.0
    %4987 = vmatpush1.msra.mxu0 0.0
    %4988 = vmatprep.subr.mxu0 0.0
    %4989 = vmatpush1.msra.mxu0 0.0
    %4990 = vmatprep.subr.mxu0 0.0
    %4991 = vmatpush1.msra.mxu0 0.0
    %4992 = vmatprep.subr.mxu0 0.0
    %4993 = vmatpush1.msra.mxu0 0.0
    %4994 = vmatprep.subr.mxu0 0.0
    %4995 = vmatpush1.msra.mxu0 0.0
    %4996 = vmatprep.subr.mxu0 0.0
    %4997 = vmatpush1.msra.mxu0 0.0
    %4998 = vmatprep.subr.mxu0 0.0
    %4999 = vmatpush1.msra.mxu0 0.0
    %5000 = vmatprep.subr.mxu0 0.0
    %5001 = vmatpush1.msra.mxu0 0.0
    %5002 = vmatprep.subr.mxu0 0.0
    %5003 = vmatpush1.msra.mxu0 0.0
    %5004 = vmatprep.subr.mxu0 0.0
    %5005 = vmatpush1.msra.mxu0 0.0
    %5006 = vmatprep.subr.mxu0 0.0
    %5007 = vmatpush1.msra.mxu0 0.0
    %5008 = vmatprep.subr.mxu0 0.0
    %5009 = vmatpush1.msra.mxu0 0.0
    %5010 = vmatprep.subr.mxu0 0.0
    %5011 = vmatpush1.msra.mxu0 0.0
    %5012 = vmatprep.subr.mxu0 0.0
    %5013 = vmatpush1.msra.mxu0 0.0
    %5014 = vmatprep.subr.mxu0 0.0
    %5015 = vmatpush1.msra.mxu0 0.0
    %5016 = vmatprep.subr.mxu0 0.0
    %5017 = vmatpush1.msra.mxu0 0.0
    %5018 = vmatprep.subr.mxu0 0.0
    %5019 = vmatpush1.msra.mxu0 0.0
    %5020 = vmatprep.subr.mxu0 0.0
    %5021 = vmatpush1.msra.mxu0 0.0
    %5022 = vmatprep.subr.mxu0 0.0
    %5023 = vmatpush1.msra.mxu0 0.0
    %5024 = vmatprep.subr.mxu0 0.0
    %5025 = vmatpush1.msra.mxu0 0.0
    %5026 = vmatprep.subr.mxu0 0.0
    %5027 = vmatpush1.msra.mxu0 0.0
    %5028 = vmatprep.subr.mxu0 0.0
    %5029 = vmatpush1.msra.mxu0 0.0
    %5030 = vmatprep.mubr.f32.mxu0 0.0
    %5031 = vmatmul.mubr.f32.gmra.mrb[0].mxu0 %v4962
    %v5032 = vpop.f32.mrb[0].mxu0
    %v5033 = vadd.f32 %v4944, %v5032
    %v5034 = vpop.f32.mrb[0].mxu0
    %5035 = vmatprep.mubr.f32.mxu0 0.0
    %5036 = vmatmul.mubr.f32.gmra.mrb[0].mxu0 %v4964
    %v5037 = vpop.f32.mrb[0].mxu0
    %v5038 = vadd.f32 %v4959, %v5037
    %v5039 = vpop.f32.mrb[0].mxu0
    %5040 = vdwg.mxu0
    %v5043 = vcombine.high %v5033, %v5033
    %v5045 = vunpack.c.l.s4 1966171168
    %v5046 = vunpack.c.0.s8 %v5045
    %v5047 = vlaneseq
    %v5048 = vshrl.u32 %v5047, 7
    %v5049 = vsub.s32 %v5046, %v5048
    %v5050 = vrot.slane %v5033, %v5049
    %v5052 = vunpack.c.l.s4 1966171168
    %v5053 = vunpack.c.0.s8 %v5052
    %v5054 = vlaneseq
    %v5055 = vshrl.u32 %v5054, 7
    %v5056 = vsub.s32 %v5053, %v5055
    %v5057 = vrot.slane %v5043, %v5056
    %v5058 = vcombine.high %v5050, %v5050
    %v5059 = vcombine.high %v5057, %v5057
    %v5061 = vunpack.c.l.s4 1966171168
    %v5062 = vunpack.c.0.s8 %v5061
    %v5063 = vlaneseq
    %v5064 = vshrl.u32 %v5063, 7
    %v5065 = vsub.s32 %v5062, %v5064
    %v5066 = vrot.slane %v5050, %v5065
    %v5068 = vunpack.c.l.s4 1966171168
    %v5069 = vunpack.c.0.s8 %v5068
    %v5070 = vlaneseq
    %v5071 = vshrl.u32 %v5070, 7
    %v5072 = vsub.s32 %v5069, %v5071
    %v5073 = vrot.slane %v5057, %v5072
    %v5075 = vunpack.c.l.s4 1966171168
    %v5076 = vunpack.c.0.s8 %v5075
    %v5077 = vlaneseq
    %v5078 = vshrl.u32 %v5077, 7
    %v5079 = vsub.s32 %v5076, %v5078
    %v5080 = vrot.slane %v5058, %v5079
    %v5082 = vunpack.c.l.s4 1966171168
    %v5083 = vunpack.c.0.s8 %v5082
    %v5084 = vlaneseq
    %v5085 = vshrl.u32 %v5084, 7
    %v5086 = vsub.s32 %v5083, %v5085
    %v5087 = vrot.slane %v5059, %v5086
    %v5088 = vcombine.high %v5066, %v5066
    %v5089 = vcombine.high %v5073, %v5073
    %v5090 = vcombine.high %v5080, %v5080
    %v5091 = vcombine.high %v5087, %v5087
    %v5093 = vunpack.c.l.s4 1966171168
    %v5094 = vunpack.c.0.s8 %v5093
    %v5095 = vlaneseq
    %v5096 = vshrl.u32 %v5095, 7
    %v5097 = vsub.s32 %v5094, %v5096
    %v5098 = vrot.slane %v5038, %v5097
    %v5099 = vcombine.high %v5098, %v5098
    %v5101 = vunpack.c.l.s4 1966171168
    %v5102 = vunpack.c.0.s8 %v5101
    %v5103 = vlaneseq
    %v5104 = vshrl.u32 %v5103, 7
    %v5105 = vsub.s32 %v5102, %v5104
    %v5106 = vrot.slane %v5098, %v5105
    %v5108 = vunpack.c.l.s4 1966171168
    %v5109 = vunpack.c.0.s8 %v5108
    %v5110 = vlaneseq
    %v5111 = vshrl.u32 %v5110, 7
    %v5112 = vsub.s32 %v5109, %v5111
    %v5113 = vrot.slane %v5099, %v5112
    %v5114 = vcombine.low %v5066, %v5080
    %v5115 = vcombine.low %v5088, %v5090
    %v5117 = vunpack.c.l.s4 1966171168
    %v5118 = vunpack.c.0.s8 %v5117
    %v5119 = vlaneseq
    %v5120 = vshrl.u32 %v5119, 7
    %v5121 = vsub.s32 %v5118, %v5120
    %v5122 = vrot.slane %v5114, %v5121
    %v5124 = vunpack.c.l.s4 1966171168
    %v5125 = vunpack.c.0.s8 %v5124
    %v5126 = vlaneseq
    %v5127 = vshrl.u32 %v5126, 7
    %v5128 = vsub.s32 %v5125, %v5127
    %v5129 = vrot.slane %v5115, %v5128
    %v5131 = vunpack.c.l.s4 1966171168
    %v5132 = vunpack.c.0.s8 %v5131
    %v5133 = vlaneseq
    %v5134 = vshrl.u32 %v5133, 7
    %v5135 = vsub.s32 %v5132, %v5134
    %v5136 = vrot.slane %v5073, %v5135
    %v5137 = vcombine.low %v5122, %v5129
    %v5139 = vunpack.c.l.s4 1966171168
    %v5140 = vunpack.c.0.s8 %v5139
    %v5141 = vlaneseq
    %v5142 = vshrl.u32 %v5141, 7
    %v5143 = vsub.s32 %v5140, %v5142
    %v5144 = vrot.slane %v5137, %v5143
    %v5146 = vunpack.c.l.s4 1966171168
    %v5147 = vunpack.c.0.s8 %v5146
    %v5148 = vlaneseq
    %v5149 = vshrl.u32 %v5148, 7
    %v5150 = vsub.s32 %v5147, %v5149
    %v5151 = vrot.slane %v5136, %v5150
    %v5152 = vcombine.low %v5144, %v5151
    %v5153 = vcombine.low %v5087, %v5089
    %v5154 = vcombine.low %v5091, %v5106
    %v5156 = vunpack.c.l.s4 1966171168
    %v5157 = vunpack.c.0.s8 %v5156
    %v5158 = vlaneseq
    %v5159 = vshrl.u32 %v5158, 7
    %v5160 = vsub.s32 %v5157, %v5159
    %v5161 = vrot.slane %v5153, %v5160
    %v5163 = vunpack.c.l.s4 1966171168
    %v5164 = vunpack.c.0.s8 %v5163
    %v5165 = vlaneseq
    %v5166 = vshrl.u32 %v5165, 7
    %v5167 = vsub.s32 %v5164, %v5166
    %v5168 = vrot.slane %v5154, %v5167
    %v5170 = vunpack.c.l.s4 1966171168
    %v5171 = vunpack.c.0.s8 %v5170
    %v5172 = vlaneseq
    %v5173 = vshrl.u32 %v5172, 7
    %v5174 = vsub.s32 %v5171, %v5173
    %v5175 = vrot.slane %v5113, %v5174
    %v5176 = vcombine.low %v5161, %v5168
    %v5178 = vunpack.c.l.s4 1966171168
    %v5179 = vunpack.c.0.s8 %v5178
    %v5180 = vlaneseq
    %v5181 = vshrl.u32 %v5180, 7
    %v5182 = vsub.s32 %v5179, %v5181
    %v5183 = vrot.slane %v5176, %v5182
    %v5185 = vunpack.c.l.s4 1966171168
    %v5186 = vunpack.c.0.s8 %v5185
    %v5187 = vlaneseq
    %v5188 = vshrl.u32 %v5187, 7
    %v5189 = vsub.s32 %v5186, %v5188
    %v5190 = vrot.slane %v5175, %v5189
    %v5191 = vcombine.low %v5183, %v5190
    %v5194 = vadd.f32 %v3150, %v5152
    %v5195 = vadd.f32 %v3151, %v5191
    %v5196 = vsel %vm162, %v5194, 0.0
    %5197 = vadd.xlane.f32.xlu0 %v5196
    %v5198 = vpop.xlane.xlu0 %5197
    %v5199 = vsel %vm162, %v5195, 0.0
    %5200 = vadd.xlane.f32.xlu0 %v5199
    %v5201 = vpop.xlane.xlu0 %5200
    %v5202 = vmul.f32 %v5198, %v169
    %v5203 = vmul.f32 %v5201, %v169
    %v5204 = vsub.f32 %v5194, %v5202
    %v5205 = vsub.f32 %v5195, %v5203
    %v5206 = vmul.f32 %v5204, %v5204
    %v5207 = vmul.f32 %v5205, %v5205
    %v5208 = vsel %vm162, %v5206, 0.0
    %5209 = vadd.xlane.f32.xlu0 %v5208
    %v5210 = vpop.xlane.xlu0 %5209
    %v5211 = vsel %vm162, %v5207, 0.0
    %5212 = vadd.xlane.f32.xlu0 %v5211
    %v5213 = vpop.xlane.xlu0 %5212
    %v5214 = vmul.f32 %v5210, %v169
    %v5215 = vmul.f32 %v5213, %v169
    %v5216 = vadd.f32 %v5214, 1e-05
    %v5217 = vadd.f32 %v5215, 1e-05
    %v5218 = vrsqrt.pop %v5216
    %v5219 = vrsqrt.pop %v5217
    %v5220 = vmul.f32 %v5204, %v5218
    %v5221 = vmul.f32 %v5205, %v5219
    %s5222 = scalar_lea.vmem %s6, 32
    %v5223 = vld [vmem:[%s5222] sm:$0xff]
    %v5224 = vld [vmem:[%s5222 + $0x8] sm:$0xff]
    %v5225 = vld [vmem:[%s5222 + $0x10] sm:$0xff]
    %v5226 = vld [vmem:[%s5222 + $0x18] sm:$0xff]
    %v5227 = vlaneseq
    %v5228 = vshrl.u32 %v5227, 7
    %v5229 = vsub.s32 2, %v5228
    %v5230 = vrot.slane %v3207, %v5229
    %v5233 = vcombine.high %v5220, %v5220
    %v5235 = vunpack.c.l.s4 1966171168
    %v5236 = vunpack.c.0.s8 %v5235
    %v5237 = vlaneseq
    %v5238 = vshrl.u32 %v5237, 7
    %v5239 = vsub.s32 %v5236, %v5238
    %v5240 = vrot.slane %v5220, %v5239
    %v5242 = vunpack.c.l.s4 1966171168
    %v5243 = vunpack.c.0.s8 %v5242
    %v5244 = vlaneseq
    %v5245 = vshrl.u32 %v5244, 7
    %v5246 = vsub.s32 %v5243, %v5245
    %v5247 = vrot.slane %v5233, %v5246
    %v5248 = vcombine.high %v5240, %v5240
    %v5250 = vunpack.c.l.s4 1966171168
    %v5251 = vunpack.c.0.s8 %v5250
    %v5252 = vlaneseq
    %v5253 = vshrl.u32 %v5252, 7
    %v5254 = vsub.s32 %v5251, %v5253
    %v5255 = vrot.slane %v5240, %v5254
    %v5257 = vunpack.c.l.s4 1966171168
    %v5258 = vunpack.c.0.s8 %v5257
    %v5259 = vlaneseq
    %v5260 = vshrl.u32 %v5259, 7
    %v5261 = vsub.s32 %v5258, %v5260
    %v5262 = vrot.slane %v5247, %v5261
    %v5264 = vunpack.c.l.s4 1966171168
    %v5265 = vunpack.c.0.s8 %v5264
    %v5266 = vlaneseq
    %v5267 = vshrl.u32 %v5266, 7
    %v5268 = vsub.s32 %v5265, %v5267
    %v5269 = vrot.slane %v5248, %v5268
    %v5270 = vcombine.high %v5255, %v5255
    %v5271 = vcombine.high %v5269, %v5269
    %v5272 = vcombine.high %v5221, %v5221
    %v5274 = vunpack.c.l.s4 1966171168
    %v5275 = vunpack.c.0.s8 %v5274
    %v5276 = vlaneseq
    %v5277 = vshrl.u32 %v5276, 7
    %v5278 = vsub.s32 %v5275, %v5277
    %v5279 = vrot.slane %v5221, %v5278
    %v5281 = vunpack.c.l.s4 1966171168
    %v5282 = vunpack.c.0.s8 %v5281
    %v5283 = vlaneseq
    %v5284 = vshrl.u32 %v5283, 7
    %v5285 = vsub.s32 %v5282, %v5284
    %v5286 = vrot.slane %v5272, %v5285
    %v5287 = vcombine.high %v5279, %v5279
    %v5289 = vunpack.c.l.s4 1966171168
    %v5290 = vunpack.c.0.s8 %v5289
    %v5291 = vlaneseq
    %v5292 = vshrl.u32 %v5291, 7
    %v5293 = vsub.s32 %v5290, %v5292
    %v5294 = vrot.slane %v5279, %v5293
    %v5296 = vunpack.c.l.s4 1966171168
    %v5297 = vunpack.c.0.s8 %v5296
    %v5298 = vlaneseq
    %v5299 = vshrl.u32 %v5298, 7
    %v5300 = vsub.s32 %v5297, %v5299
    %v5301 = vrot.slane %v5286, %v5300
    %v5303 = vunpack.c.l.s4 1966171168
    %v5304 = vunpack.c.0.s8 %v5303
    %v5305 = vlaneseq
    %v5306 = vshrl.u32 %v5305, 7
    %v5307 = vsub.s32 %v5304, %v5306
    %v5308 = vrot.slane %v5287, %v5307
    %v5309 = vcombine.high %v5294, %v5294
    %v5310 = vcombine.high %v5308, %v5308
    %v5312 = vcombine.high %v5230, %v5230
    %v5314 = vunpack.c.l.s4 1966171168
    %v5315 = vunpack.c.0.s8 %v5314
    %v5316 = vlaneseq
    %v5317 = vshrl.u32 %v5316, 7
    %v5318 = vsub.s32 %v5315, %v5317
    %v5319 = vrot.slane %v5230, %v5318
    %v5321 = vunpack.c.l.s4 1966171168
    %v5322 = vunpack.c.0.s8 %v5321
    %v5323 = vlaneseq
    %v5324 = vshrl.u32 %v5323, 7
    %v5325 = vsub.s32 %v5322, %v5324
    %v5326 = vrot.slane %v5312, %v5325
    %v5327 = vcombine.high %v5319, %v5319
    %v5329 = vunpack.c.l.s4 1966171168
    %v5330 = vunpack.c.0.s8 %v5329
    %v5331 = vlaneseq
    %v5332 = vshrl.u32 %v5331, 7
    %v5333 = vsub.s32 %v5330, %v5332
    %v5334 = vrot.slane %v5319, %v5333
    %v5336 = vunpack.c.l.s4 1966171168
    %v5337 = vunpack.c.0.s8 %v5336
    %v5338 = vlaneseq
    %v5339 = vshrl.u32 %v5338, 7
    %v5340 = vsub.s32 %v5337, %v5339
    %v5341 = vrot.slane %v5326, %v5340
    %v5343 = vunpack.c.l.s4 1966171168
    %v5344 = vunpack.c.0.s8 %v5343
    %v5345 = vlaneseq
    %v5346 = vshrl.u32 %v5345, 7
    %v5347 = vsub.s32 %v5344, %v5346
    %v5348 = vrot.slane %v5327, %v5347
    %v5349 = vcombine.high %v5334, %v5334
    %v5350 = vcombine.high %v5348, %v5348
    %v5351 = vcombine.low %v5255, %v5269
    %v5352 = vcombine.low %v5270, %v5271
    %v5353 = vcombine.low %v5262, %v5294
    %v5354 = vcombine.low %v5308, %v5309
    %v5356 = vunpack.c.l.s4 1966171168
    %v5357 = vunpack.c.0.s8 %v5356
    %v5358 = vlaneseq
    %v5359 = vshrl.u32 %v5358, 7
    %v5360 = vsub.s32 %v5357, %v5359
    %v5361 = vrot.slane %v5351, %v5360
    %v5363 = vunpack.c.l.s4 1966171168
    %v5364 = vunpack.c.0.s8 %v5363
    %v5365 = vlaneseq
    %v5366 = vshrl.u32 %v5365, 7
    %v5367 = vsub.s32 %v5364, %v5366
    %v5368 = vrot.slane %v5352, %v5367
    %v5370 = vunpack.c.l.s4 1966171168
    %v5371 = vunpack.c.0.s8 %v5370
    %v5372 = vlaneseq
    %v5373 = vshrl.u32 %v5372, 7
    %v5374 = vsub.s32 %v5371, %v5373
    %v5375 = vrot.slane %v5353, %v5374
    %v5377 = vunpack.c.l.s4 1966171168
    %v5378 = vunpack.c.0.s8 %v5377
    %v5379 = vlaneseq
    %v5380 = vshrl.u32 %v5379, 7
    %v5381 = vsub.s32 %v5378, %v5380
    %v5382 = vrot.slane %v5354, %v5381
    %v5383 = vcombine.low %v5361, %v5368
    %v5384 = vcombine.low %v5375, %v5382
    %v5386 = vunpack.c.l.s4 1966171168
    %v5387 = vunpack.c.0.s8 %v5386
    %v5388 = vlaneseq
    %v5389 = vshrl.u32 %v5388, 7
    %v5390 = vsub.s32 %v5387, %v5389
    %v5391 = vrot.slane %v5383, %v5390
    %v5393 = vunpack.c.l.s4 1966171168
    %v5394 = vunpack.c.0.s8 %v5393
    %v5395 = vlaneseq
    %v5396 = vshrl.u32 %v5395, 7
    %v5397 = vsub.s32 %v5394, %v5396
    %v5398 = vrot.slane %v5384, %v5397
    %v5399 = vcombine.low %v5391, %v5398
    %v5400 = vcombine.low %v5310, %v5301
    %v5402 = vunpack.c.l.s4 1966171168
    %v5403 = vunpack.c.0.s8 %v5402
    %v5404 = vlaneseq
    %v5405 = vshrl.u32 %v5404, 7
    %v5406 = vsub.s32 %v5403, %v5405
    %v5407 = vrot.slane %v5400, %v5406
    %v5409 = vunpack.c.l.s4 1966171168
    %v5410 = vunpack.c.0.s8 %v5409
    %v5411 = vlaneseq
    %v5412 = vshrl.u32 %v5411, 7
    %v5413 = vsub.s32 %v5410, %v5412
    %v5414 = vrot.slane %v5407, %v5413
    %v5415 = vcombine.low %v5334, %v5348
    %v5416 = vcombine.low %v5349, %v5350
    %v5417 = vcombine.low %v5341, %v5334
    %v5418 = vcombine.low %v5348, %v5349
    %v5420 = vunpack.c.l.s4 1966171168
    %v5421 = vunpack.c.0.s8 %v5420
    %v5422 = vlaneseq
    %v5423 = vshrl.u32 %v5422, 7
    %v5424 = vsub.s32 %v5421, %v5423
    %v5425 = vrot.slane %v5415, %v5424
    %v5427 = vunpack.c.l.s4 1966171168
    %v5428 = vunpack.c.0.s8 %v5427
    %v5429 = vlaneseq
    %v5430 = vshrl.u32 %v5429, 7
    %v5431 = vsub.s32 %v5428, %v5430
    %v5432 = vrot.slane %v5416, %v5431
    %v5434 = vunpack.c.l.s4 1966171168
    %v5435 = vunpack.c.0.s8 %v5434
    %v5436 = vlaneseq
    %v5437 = vshrl.u32 %v5436, 7
    %v5438 = vsub.s32 %v5435, %v5437
    %v5439 = vrot.slane %v5417, %v5438
    %v5441 = vunpack.c.l.s4 1966171168
    %v5442 = vunpack.c.0.s8 %v5441
    %v5443 = vlaneseq
    %v5444 = vshrl.u32 %v5443, 7
    %v5445 = vsub.s32 %v5442, %v5444
    %v5446 = vrot.slane %v5418, %v5445
    %v5447 = vcombine.low %v5425, %v5432
    %v5448 = vcombine.low %v5439, %v5446
    %v5450 = vunpack.c.l.s4 1966171168
    %v5451 = vunpack.c.0.s8 %v5450
    %v5452 = vlaneseq
    %v5453 = vshrl.u32 %v5452, 7
    %v5454 = vsub.s32 %v5451, %v5453
    %v5455 = vrot.slane %v5447, %v5454
    %v5457 = vunpack.c.l.s4 1966171168
    %v5458 = vunpack.c.0.s8 %v5457
    %v5459 = vlaneseq
    %v5460 = vshrl.u32 %v5459, 7
    %v5461 = vsub.s32 %v5458, %v5460
    %v5462 = vrot.slane %v5448, %v5461
    %v5463 = vcombine.low %v5455, %v5462
    %v5464 = vcombine.low %v5350, %v5341
    %v5466 = vunpack.c.l.s4 1966171168
    %v5467 = vunpack.c.0.s8 %v5466
    %v5468 = vlaneseq
    %v5469 = vshrl.u32 %v5468, 7
    %v5470 = vsub.s32 %v5467, %v5469
    %v5471 = vrot.slane %v5464, %v5470
    %v5473 = vunpack.c.l.s4 1966171168
    %v5474 = vunpack.c.0.s8 %v5473
    %v5475 = vlaneseq
    %v5476 = vshrl.u32 %v5475, 7
    %v5477 = vsub.s32 %v5474, %v5476
    %v5478 = vrot.slane %v5471, %v5477
    %v5481 = vsel %vm487, %v5399, 0
    %v5483 = vsel %vm487, %v5414, 0
    %5485 = vmatprep.subr.mxu0 0.0
    %5486 = vmatpush1.msra.mxu0 %v5223
    %5487 = vmatprep.subr.mxu0 0.0
    %5488 = vmatpush1.msra.mxu0 %v5224
    %5489 = vmatprep.subr.mxu0 0.0
    %5490 = vmatpush1.msra.mxu0 %v5225
    %5491 = vmatprep.subr.mxu0 0.0
    %5492 = vmatpush1.msra.mxu0 %v5226
    %5493 = vmatprep.subr.mxu0 0.0
    %5494 = vmatpush1.msra.mxu0 0.0
    %5495 = vmatprep.subr.mxu0 0.0
    %5496 = vmatpush1.msra.mxu0 0.0
    %5497 = vmatprep.subr.mxu0 0.0
    %5498 = vmatpush1.msra.mxu0 0.0
    %5499 = vmatprep.subr.mxu0 0.0
    %5500 = vmatpush1.msra.mxu0 0.0
    %5501 = vmatprep.subr.mxu0 0.0
    %5502 = vmatpush1.msra.mxu0 0.0
    %5503 = vmatprep.subr.mxu0 0.0
    %5504 = vmatpush1.msra.mxu0 0.0
    %5505 = vmatprep.subr.mxu0 0.0
    %5506 = vmatpush1.msra.mxu0 0.0
    %5507 = vmatprep.subr.mxu0 0.0
    %5508 = vmatpush1.msra.mxu0 0.0
    %5509 = vmatprep.subr.mxu0 0.0
    %5510 = vmatpush1.msra.mxu0 0.0
    %5511 = vmatprep.subr.mxu0 0.0
    %5512 = vmatpush1.msra.mxu0 0.0
    %5513 = vmatprep.subr.mxu0 0.0
    %5514 = vmatpush1.msra.mxu0 0.0
    %5515 = vmatprep.subr.mxu0 0.0
    %5516 = vmatpush1.msra.mxu0 0.0
    %5517 = vmatprep.subr.mxu0 0.0
    %5518 = vmatpush1.msra.mxu0 0.0
    %5519 = vmatprep.subr.mxu0 0.0
    %5520 = vmatpush1.msra.mxu0 0.0
    %5521 = vmatprep.subr.mxu0 0.0
    %5522 = vmatpush1.msra.mxu0 0.0
    %5523 = vmatprep.subr.mxu0 0.0
    %5524 = vmatpush1.msra.mxu0 0.0
    %5525 = vmatprep.subr.mxu0 0.0
    %5526 = vmatpush1.msra.mxu0 0.0
    %5527 = vmatprep.subr.mxu0 0.0
    %5528 = vmatpush1.msra.mxu0 0.0
    %5529 = vmatprep.subr.mxu0 0.0
    %5530 = vmatpush1.msra.mxu0 0.0
    %5531 = vmatprep.subr.mxu0 0.0
    %5532 = vmatpush1.msra.mxu0 0.0
    %5533 = vmatprep.subr.mxu0 0.0
    %5534 = vmatpush1.msra.mxu0 0.0
    %5535 = vmatprep.subr.mxu0 0.0
    %5536 = vmatpush1.msra.mxu0 0.0
    %5537 = vmatprep.subr.mxu0 0.0
    %5538 = vmatpush1.msra.mxu0 0.0
    %5539 = vmatprep.subr.mxu0 0.0
    %5540 = vmatpush1.msra.mxu0 0.0
    %5541 = vmatprep.subr.mxu0 0.0
    %5542 = vmatpush1.msra.mxu0 0.0
    %5543 = vmatprep.subr.mxu0 0.0
    %5544 = vmatpush1.msra.mxu0 0.0
    %5545 = vmatprep.subr.mxu0 0.0
    %5546 = vmatpush1.msra.mxu0 0.0
    %5547 = vmatprep.subr.mxu0 0.0
    %5548 = vmatpush1.msra.mxu0 0.0
    %5549 = vmatprep.mubr.f32.mxu0 0.0
    %5550 = vmatmul.mubr.f32.gmra.mrb[0].mxu0 %v5481
    %v5551 = vpop.f32.mrb[0].mxu0
    %v5552 = vadd.f32 %v5463, %v5551
    %v5553 = vpop.f32.mrb[0].mxu0
    %5554 = vmatprep.mubr.f32.mxu0 0.0
    %5555 = vmatmul.mubr.f32.gmra.mrb[0].mxu0 %v5483
    %v5556 = vpop.f32.mrb[0].mxu0
    %v5557 = vadd.f32 %v5478, %v5556
    %v5558 = vpop.f32.mrb[0].mxu0
    %5559 = vdwg.mxu0
    %v5562 = vcombine.high %v5552, %v5552
    %v5564 = vunpack.c.l.s4 1966171168
    %v5565 = vunpack.c.0.s8 %v5564
    %v5566 = vlaneseq
    %v5567 = vshrl.u32 %v5566, 7
    %v5568 = vsub.s32 %v5565, %v5567
    %v5569 = vrot.slane %v5552, %v5568
    %v5571 = vunpack.c.l.s4 1966171168
    %v5572 = vunpack.c.0.s8 %v5571
    %v5573 = vlaneseq
    %v5574 = vshrl.u32 %v5573, 7
    %v5575 = vsub.s32 %v5572, %v5574
    %v5576 = vrot.slane %v5562, %v5575
    %v5577 = vcombine.high %v5569, %v5569
    %v5578 = vcombine.high %v5576, %v5576
    %v5580 = vunpack.c.l.s4 1966171168
    %v5581 = vunpack.c.0.s8 %v5580
    %v5582 = vlaneseq
    %v5583 = vshrl.u32 %v5582, 7
    %v5584 = vsub.s32 %v5581, %v5583
    %v5585 = vrot.slane %v5569, %v5584
    %v5587 = vunpack.c.l.s4 1966171168
    %v5588 = vunpack.c.0.s8 %v5587
    %v5589 = vlaneseq
    %v5590 = vshrl.u32 %v5589, 7
    %v5591 = vsub.s32 %v5588, %v5590
    %v5592 = vrot.slane %v5576, %v5591
    %v5594 = vunpack.c.l.s4 1966171168
    %v5595 = vunpack.c.0.s8 %v5594
    %v5596 = vlaneseq
    %v5597 = vshrl.u32 %v5596, 7
    %v5598 = vsub.s32 %v5595, %v5597
    %v5599 = vrot.slane %v5577, %v5598
    %v5601 = vunpack.c.l.s4 1966171168
    %v5602 = vunpack.c.0.s8 %v5601
    %v5603 = vlaneseq
    %v5604 = vshrl.u32 %v5603, 7
    %v5605 = vsub.s32 %v5602, %v5604
    %v5606 = vrot.slane %v5578, %v5605
    %v5607 = vcombine.high %v5585, %v5585
    %v5608 = vcombine.high %v5592, %v5592
    %v5609 = vcombine.high %v5599, %v5599
    %v5610 = vcombine.high %v5606, %v5606
    %v5612 = vunpack.c.l.s4 1966171168
    %v5613 = vunpack.c.0.s8 %v5612
    %v5614 = vlaneseq
    %v5615 = vshrl.u32 %v5614, 7
    %v5616 = vsub.s32 %v5613, %v5615
    %v5617 = vrot.slane %v5557, %v5616
    %v5618 = vcombine.high %v5617, %v5617
    %v5620 = vunpack.c.l.s4 1966171168
    %v5621 = vunpack.c.0.s8 %v5620
    %v5622 = vlaneseq
    %v5623 = vshrl.u32 %v5622, 7
    %v5624 = vsub.s32 %v5621, %v5623
    %v5625 = vrot.slane %v5617, %v5624
    %v5627 = vunpack.c.l.s4 1966171168
    %v5628 = vunpack.c.0.s8 %v5627
    %v5629 = vlaneseq
    %v5630 = vshrl.u32 %v5629, 7
    %v5631 = vsub.s32 %v5628, %v5630
    %v5632 = vrot.slane %v5618, %v5631
    %v5643 = vmul.f32 %v5585, 1.702
    %v5644 = vmul.f32 %v5599, 1.702
    %v5645 = vmul.f32 %v5607, 1.702
    %v5646 = vmul.f32 %v5609, 1.702
    %v5647 = vmul.f32 %v5592, 1.702
    %v5648 = vmul.f32 %v5606, 1.702
    %v5649 = vmul.f32 %v5608, 1.702
    %v5650 = vmul.f32 %v5610, 1.702
    %v5651 = vmul.f32 %v5625, 1.702
    %v5652 = vmul.f32 %v5632, 1.702
    %v5653 = vxor.u32 %v5643, 2147483648
    %v5654 = vxor.u32 %v5644, 2147483648
    %v5655 = vxor.u32 %v5645, 2147483648
    %v5656 = vxor.u32 %v5646, 2147483648
    %v5657 = vxor.u32 %v5647, 2147483648
    %v5658 = vxor.u32 %v5648, 2147483648
    %v5659 = vxor.u32 %v5649, 2147483648
    %v5660 = vxor.u32 %v5650, 2147483648
    %v5661 = vxor.u32 %v5651, 2147483648
    %v5662 = vxor.u32 %v5652, 2147483648
    %v5663 = vmul.f32 %v5653, 1.442695
    %v5664 = vpow.pop %v5663
    %v5665 = vmul.f32 %v5654, 1.442695
    %v5666 = vpow.pop %v5665
    %v5667 = vmul.f32 %v5655, 1.442695
    %v5668 = vpow.pop %v5667
    %v5669 = vmul.f32 %v5656, 1.442695
    %v5670 = vpow.pop %v5669
    %v5671 = vmul.f32 %v5657, 1.442695
    %v5672 = vpow.pop %v5671
    %v5673 = vmul.f32 %v5658, 1.442695
    %v5674 = vpow.pop %v5673
    %v5675 = vmul.f32 %v5659, 1.442695
    %v5676 = vpow.pop %v5675
    %v5677 = vmul.f32 %v5660, 1.442695
    %v5678 = vpow.pop %v5677
    %v5679 = vmul.f32 %v5661, 1.442695
    %v5680 = vpow.pop %v5679
    %v5681 = vmul.f32 %v5662, 1.442695
    %v5682 = vpow.pop %v5681
    %v5683 = vadd.f32 %v5664, 1.0
    %v5684 = vadd.f32 %v5666, 1.0
    %v5685 = vadd.f32 %v5668, 1.0
    %v5686 = vadd.f32 %v5670, 1.0
    %v5687 = vadd.f32 %v5672, 1.0
    %v5688 = vadd.f32 %v5674, 1.0
    %v5689 = vadd.f32 %v5676, 1.0
    %v5690 = vadd.f32 %v5678, 1.0
    %v5691 = vadd.f32 %v5680, 1.0
    %v5692 = vadd.f32 %v5682, 1.0
    %v5693 = vrcp.pop %v5683
    %v5694 = vmul.f32 1.0, %v5693
    %v5695 = vrcp.pop %v5684
    %v5696 = vmul.f32 1.0, %v5695
    %v5697 = vrcp.pop %v5685
    %v5698 = vmul.f32 1.0, %v5697
    %v5699 = vrcp.pop %v5686
    %v5700 = vmul.f32 1.0, %v5699
    %v5701 = vrcp.pop %v5687
    %v5702 = vmul.f32 1.0, %v5701
    %v5703 = vrcp.pop %v5688
    %v5704 = vmul.f32 1.0, %v5703
    %v5705 = vrcp.pop %v5689
    %v5706 = vmul.f32 1.0, %v5705
    %v5707 = vrcp.pop %v5690
    %v5708 = vmul.f32 1.0, %v5707
    %v5709 = vrcp.pop %v5691
    %v5710 = vmul.f32 1.0, %v5709
    %v5711 = vrcp.pop %v5692
    %v5712 = vmul.f32 1.0, %v5711
    %v5713 = vmul.f32 %v5585, %v5694
    %v5714 = vmul.f32 %v5599, %v5696
    %v5715 = vmul.f32 %v5607, %v5698
    %v5716 = vmul.f32 %v5609, %v5700
    %v5717 = vmul.f32 %v5592, %v5702
    %v5718 = vmul.f32 %v5606, %v5704
    %v5719 = vmul.f32 %v5608, %v5706
    %v5720 = vmul.f32 %v5610, %v5708
    %v5721 = vmul.f32 %v5625, %v5710
    %v5722 = vmul.f32 %v5632, %v5712
    %s5723 = scalar_lea.vmem %s7, 128
    %v5724 = vld [vmem:[%s5723] sm:$0xff]
    %v5725 = vld [vmem:[%s5723 + $0x8] sm:$0xff]
    %v5726 = vld [vmem:[%s5723 + $0x10] sm:$0xff]
    %v5727 = vld [vmem:[%s5723 + $0x18] sm:$0xff]
    %v5728 = vld [vmem:[%s5723 + $0x20] sm:$0xff]
    %v5729 = vld [vmem:[%s5723 + $0x28] sm:$0xff]
    %v5730 = vld [vmem:[%s5723 + $0x30] sm:$0xff]
    %v5731 = vld [vmem:[%s5723 + $0x38] sm:$0xff]
    %v5732 = vld [vmem:[%s5723 + $0x40] sm:$0xff]
    %v5733 = vld [vmem:[%s5723 + $0x48] sm:$0xff]
    %v5734 = vld [vmem:[%s5723 + $0x50] sm:$0xff]
    %v5735 = vld [vmem:[%s5723 + $0x58] sm:$0xff]
    %v5736 = vld [vmem:[%s5723 + $0x60] sm:$0xff]
    %v5737 = vld [vmem:[%s5723 + $0x68] sm:$0xff]
    %v5738 = vld [vmem:[%s5723 + $0x70] sm:$0xff]
    %v5739 = vld [vmem:[%s5723 + $0x78] sm:$0xff]
    %v5740 = vlaneseq
    %v5741 = vshrl.u32 %v5740, 7
    %v5742 = vsub.s32 3, %v5741
    %v5743 = vrot.slane %v3207, %v5742
    %v5745 = vcombine.high %v5743, %v5743
    %v5747 = vunpack.c.l.s4 1966171168
    %v5748 = vunpack.c.0.s8 %v5747
    %v5749 = vlaneseq
    %v5750 = vshrl.u32 %v5749, 7
    %v5751 = vsub.s32 %v5748, %v5750
    %v5752 = vrot.slane %v5743, %v5751
    %v5754 = vunpack.c.l.s4 1966171168
    %v5755 = vunpack.c.0.s8 %v5754
    %v5756 = vlaneseq
    %v5757 = vshrl.u32 %v5756, 7
    %v5758 = vsub.s32 %v5755, %v5757
    %v5759 = vrot.slane %v5745, %v5758
    %v5760 = vcombine.high %v5752, %v5752
    %v5762 = vunpack.c.l.s4 1966171168
    %v5763 = vunpack.c.0.s8 %v5762
    %v5764 = vlaneseq
    %v5765 = vshrl.u32 %v5764, 7
    %v5766 = vsub.s32 %v5763, %v5765
    %v5767 = vrot.slane %v5752, %v5766
    %v5769 = vunpack.c.l.s4 1966171168
    %v5770 = vunpack.c.0.s8 %v5769
    %v5771 = vlaneseq
    %v5772 = vshrl.u32 %v5771, 7
    %v5773 = vsub.s32 %v5770, %v5772
    %v5774 = vrot.slane %v5759, %v5773
    %v5776 = vunpack.c.l.s4 1966171168
    %v5777 = vunpack.c.0.s8 %v5776
    %v5778 = vlaneseq
    %v5779 = vshrl.u32 %v5778, 7
    %v5780 = vsub.s32 %v5777, %v5779
    %v5781 = vrot.slane %v5760, %v5780
    %v5782 = vcombine.high %v5767, %v5767
    %v5783 = vcombine.high %v5781, %v5781
    %v5794 = vcombine.low %v5713, %v5714
    %v5795 = vcombine.low %v5715, %v5716
    %v5796 = vcombine.low %v5717, %v5718
    %v5797 = vcombine.low %v5719, %v5720
    %v5799 = vunpack.c.l.s4 1966171168
    %v5800 = vunpack.c.0.s8 %v5799
    %v5801 = vlaneseq
    %v5802 = vshrl.u32 %v5801, 7
    %v5803 = vsub.s32 %v5800, %v5802
    %v5804 = vrot.slane %v5794, %v5803
    %v5806 = vunpack.c.l.s4 1966171168
    %v5807 = vunpack.c.0.s8 %v5806
    %v5808 = vlaneseq
    %v5809 = vshrl.u32 %v5808, 7
    %v5810 = vsub.s32 %v5807, %v5809
    %v5811 = vrot.slane %v5795, %v5810
    %v5813 = vunpack.c.l.s4 1966171168
    %v5814 = vunpack.c.0.s8 %v5813
    %v5815 = vlaneseq
    %v5816 = vshrl.u32 %v5815, 7
    %v5817 = vsub.s32 %v5814, %v5816
    %v5818 = vrot.slane %v5796, %v5817
    %v5820 = vunpack.c.l.s4 1966171168
    %v5821 = vunpack.c.0.s8 %v5820
    %v5822 = vlaneseq
    %v5823 = vshrl.u32 %v5822, 7
    %v5824 = vsub.s32 %v5821, %v5823
    %v5825 = vrot.slane %v5797, %v5824
    %v5826 = vcombine.low %v5804, %v5811
    %v5827 = vcombine.low %v5818, %v5825
    %v5829 = vunpack.c.l.s4 1966171168
    %v5830 = vunpack.c.0.s8 %v5829
    %v5831 = vlaneseq
    %v5832 = vshrl.u32 %v5831, 7
    %v5833 = vsub.s32 %v5830, %v5832
    %v5834 = vrot.slane %v5826, %v5833
    %v5836 = vunpack.c.l.s4 1966171168
    %v5837 = vunpack.c.0.s8 %v5836
    %v5838 = vlaneseq
    %v5839 = vshrl.u32 %v5838, 7
    %v5840 = vsub.s32 %v5837, %v5839
    %v5841 = vrot.slane %v5827, %v5840
    %v5842 = vcombine.low %v5834, %v5841
    %v5843 = vcombine.low %v5721, %v5722
    %v5845 = vunpack.c.l.s4 1966171168
    %v5846 = vunpack.c.0.s8 %v5845
    %v5847 = vlaneseq
    %v5848 = vshrl.u32 %v5847, 7
    %v5849 = vsub.s32 %v5846, %v5848
    %v5850 = vrot.slane %v5843, %v5849
    %v5852 = vunpack.c.l.s4 1966171168
    %v5853 = vunpack.c.0.s8 %v5852
    %v5854 = vlaneseq
    %v5855 = vshrl.u32 %v5854, 7
    %v5856 = vsub.s32 %v5853, %v5855
    %v5857 = vrot.slane %v5850, %v5856
    %v5860 = vcombine.low %v5767, %v5781
    %v5861 = vcombine.low %v5782, %v5783
    %v5862 = vcombine.low %v5774, %v5767
    %v5863 = vcombine.low %v5781, %v5782
    %v5865 = vunpack.c.l.s4 1966171168
    %v5866 = vunpack.c.0.s8 %v5865
    %v5867 = vlaneseq
    %v5868 = vshrl.u32 %v5867, 7
    %v5869 = vsub.s32 %v5866, %v5868
    %v5870 = vrot.slane %v5860, %v5869
    %v5872 = vunpack.c.l.s4 1966171168
    %v5873 = vunpack.c.0.s8 %v5872
    %v5874 = vlaneseq
    %v5875 = vshrl.u32 %v5874, 7
    %v5876 = vsub.s32 %v5873, %v5875
    %v5877 = vrot.slane %v5861, %v5876
    %v5879 = vunpack.c.l.s4 1966171168
    %v5880 = vunpack.c.0.s8 %v5879
    %v5881 = vlaneseq
    %v5882 = vshrl.u32 %v5881, 7
    %v5883 = vsub.s32 %v5880, %v5882
    %v5884 = vrot.slane %v5862, %v5883
    %v5886 = vunpack.c.l.s4 1966171168
    %v5887 = vunpack.c.0.s8 %v5886
    %v5888 = vlaneseq
    %v5889 = vshrl.u32 %v5888, 7
    %v5890 = vsub.s32 %v5887, %v5889
    %v5891 = vrot.slane %v5863, %v5890
    %v5892 = vcombine.low %v5870, %v5877
    %v5893 = vcombine.low %v5884, %v5891
    %v5895 = vunpack.c.l.s4 1966171168
    %v5896 = vunpack.c.0.s8 %v5895
    %v5897 = vlaneseq
    %v5898 = vshrl.u32 %v5897, 7
    %v5899 = vsub.s32 %v5896, %v5898
    %v5900 = vrot.slane %v5892, %v5899
    %v5902 = vunpack.c.l.s4 1966171168
    %v5903 = vunpack.c.0.s8 %v5902
    %v5904 = vlaneseq
    %v5905 = vshrl.u32 %v5904, 7
    %v5906 = vsub.s32 %v5903, %v5905
    %v5907 = vrot.slane %v5893, %v5906
    %v5908 = vcombine.low %v5900, %v5907
    %v5909 = vcombine.low %v5783, %v5774
    %v5911 = vunpack.c.l.s4 1966171168
    %v5912 = vunpack.c.0.s8 %v5911
    %v5913 = vlaneseq
    %v5914 = vshrl.u32 %v5913, 7
    %v5915 = vsub.s32 %v5912, %v5914
    %v5916 = vrot.slane %v5909, %v5915
    %v5918 = vunpack.c.l.s4 1966171168
    %v5919 = vunpack.c.0.s8 %v5918
    %v5920 = vlaneseq
    %v5921 = vshrl.u32 %v5920, 7
    %v5922 = vsub.s32 %v5919, %v5921
    %v5923 = vrot.slane %v5916, %v5922
    %5926 = vmatprep.subr.mxu0 0.0
    %5927 = vmatpush1.msra.mxu0 %v5724
    %5928 = vmatprep.subr.mxu0 0.0
    %5929 = vmatpush1.msra.mxu0 %v5725
    %5930 = vmatprep.subr.mxu0 0.0
    %5931 = vmatpush1.msra.mxu0 %v5726
    %5932 = vmatprep.subr.mxu0 0.0
    %5933 = vmatpush1.msra.mxu0 %v5727
    %5934 = vmatprep.subr.mxu0 0.0
    %5935 = vmatpush1.msra.mxu0 %v5728
    %5936 = vmatprep.subr.mxu0 0.0
    %5937 = vmatpush1.msra.mxu0 %v5729
    %5938 = vmatprep.subr.mxu0 0.0
    %5939 = vmatpush1.msra.mxu0 %v5730
    %5940 = vmatprep.subr.mxu0 0.0
    %5941 = vmatpush1.msra.mxu0 %v5731
    %5942 = vmatprep.subr.mxu0 0.0
    %5943 = vmatpush1.msra.mxu0 %v5732
    %5944 = vmatprep.subr.mxu0 0.0
    %5945 = vmatpush1.msra.mxu0 %v5733
    %5946 = vmatprep.subr.mxu0 0.0
    %5947 = vmatpush1.msra.mxu0 %v5734
    %5948 = vmatprep.subr.mxu0 0.0
    %5949 = vmatpush1.msra.mxu0 %v5735
    %5950 = vmatprep.subr.mxu0 0.0
    %5951 = vmatpush1.msra.mxu0 %v5736
    %5952 = vmatprep.subr.mxu0 0.0
    %5953 = vmatpush1.msra.mxu0 %v5737
    %5954 = vmatprep.subr.mxu0 0.0
    %5955 = vmatpush1.msra.mxu0 %v5738
    %5956 = vmatprep.subr.mxu0 0.0
    %5957 = vmatpush1.msra.mxu0 %v5739
    %5958 = vmatprep.subr.mxu0 0.0
    %5959 = vmatpush1.msra.mxu0 0.0
    %5960 = vmatprep.subr.mxu0 0.0
    %5961 = vmatpush1.msra.mxu0 0.0
    %5962 = vmatprep.subr.mxu0 0.0
    %5963 = vmatpush1.msra.mxu0 0.0
    %5964 = vmatprep.subr.mxu0 0.0
    %5965 = vmatpush1.msra.mxu0 0.0
    %5966 = vmatprep.subr.mxu0 0.0
    %5967 = vmatpush1.msra.mxu0 0.0
    %5968 = vmatprep.subr.mxu0 0.0
    %5969 = vmatpush1.msra.mxu0 0.0
    %5970 = vmatprep.subr.mxu0 0.0
    %5971 = vmatpush1.msra.mxu0 0.0
    %5972 = vmatprep.subr.mxu0 0.0
    %5973 = vmatpush1.msra.mxu0 0.0
    %5974 = vmatprep.subr.mxu0 0.0
    %5975 = vmatpush1.msra.mxu0 0.0
    %5976 = vmatprep.subr.mxu0 0.0
    %5977 = vmatpush1.msra.mxu0 0.0
    %5978 = vmatprep.subr.mxu0 0.0
    %5979 = vmatpush1.msra.mxu0 0.0
    %5980 = vmatprep.subr.mxu0 0.0
    %5981 = vmatpush1.msra.mxu0 0.0
    %5982 = vmatprep.subr.mxu0 0.0
    %5983 = vmatpush1.msra.mxu0 0.0
    %5984 = vmatprep.subr.mxu0 0.0
    %5985 = vmatpush1.msra.mxu0 0.0
    %5986 = vmatprep.subr.mxu0 0.0
    %5987 = vmatpush1.msra.mxu0 0.0
    %5988 = vmatprep.subr.mxu0 0.0
    %5989 = vmatpush1.msra.mxu0 0.0
    %5990 = vmatprep.mubr.f32.mxu0 0.0
    %5991 = vmatmul.mubr.f32.gmra.mrb[0].mxu0 %v5842
    %v5992 = vpop.f32.mrb[0].mxu0
    %v5993 = vadd.f32 %v5908, %v5992
    %v5994 = vpop.f32.mrb[0].mxu0
    %5995 = vmatprep.mubr.f32.mxu0 0.0
    %5996 = vmatmul.mubr.f32.gmra.mrb[0].mxu0 %v5857
    %v5997 = vpop.f32.mrb[0].mxu0
    %v5998 = vadd.f32 %v5923, %v5997
    %v5999 = vpop.f32.mrb[0].mxu0
    %6000 = vdwg.mxu0
    %v6003 = vcombine.high %v5993, %v5993
    %v6005 = vunpack.c.l.s4 1966171168
    %v6006 = vunpack.c.0.s8 %v6005
    %v6007 = vlaneseq
    %v6008 = vshrl.u32 %v6007, 7
    %v6009 = vsub.s32 %v6006, %v6008
    %v6010 = vrot.slane %v5993, %v6009
    %v6012 = vunpack.c.l.s4 1966171168
    %v6013 = vunpack.c.0.s8 %v6012
    %v6014 = vlaneseq
    %v6015 = vshrl.u32 %v6014, 7
    %v6016 = vsub.s32 %v6013, %v6015
    %v6017 = vrot.slane %v6003, %v6016
    %v6018 = vcombine.high %v6010, %v6010
    %v6019 = vcombine.high %v6017, %v6017
    %v6021 = vunpack.c.l.s4 1966171168
    %v6022 = vunpack.c.0.s8 %v6021
    %v6023 = vlaneseq
    %v6024 = vshrl.u32 %v6023, 7
    %v6025 = vsub.s32 %v6022, %v6024
    %v6026 = vrot.slane %v6010, %v6025
    %v6028 = vunpack.c.l.s4 1966171168
    %v6029 = vunpack.c.0.s8 %v6028
    %v6030 = vlaneseq
    %v6031 = vshrl.u32 %v6030, 7
    %v6032 = vsub.s32 %v6029, %v6031
    %v6033 = vrot.slane %v6017, %v6032
    %v6035 = vunpack.c.l.s4 1966171168
    %v6036 = vunpack.c.0.s8 %v6035
    %v6037 = vlaneseq
    %v6038 = vshrl.u32 %v6037, 7
    %v6039 = vsub.s32 %v6036, %v6038
    %v6040 = vrot.slane %v6018, %v6039
    %v6042 = vunpack.c.l.s4 1966171168
    %v6043 = vunpack.c.0.s8 %v6042
    %v6044 = vlaneseq
    %v6045 = vshrl.u32 %v6044, 7
    %v6046 = vsub.s32 %v6043, %v6045
    %v6047 = vrot.slane %v6019, %v6046
    %v6048 = vcombine.high %v6026, %v6026
    %v6049 = vcombine.high %v6033, %v6033
    %v6050 = vcombine.high %v6040, %v6040
    %v6051 = vcombine.high %v6047, %v6047
    %v6053 = vunpack.c.l.s4 1966171168
    %v6054 = vunpack.c.0.s8 %v6053
    %v6055 = vlaneseq
    %v6056 = vshrl.u32 %v6055, 7
    %v6057 = vsub.s32 %v6054, %v6056
    %v6058 = vrot.slane %v5998, %v6057
    %v6059 = vcombine.high %v6058, %v6058
    %v6061 = vunpack.c.l.s4 1966171168
    %v6062 = vunpack.c.0.s8 %v6061
    %v6063 = vlaneseq
    %v6064 = vshrl.u32 %v6063, 7
    %v6065 = vsub.s32 %v6062, %v6064
    %v6066 = vrot.slane %v6058, %v6065
    %v6068 = vunpack.c.l.s4 1966171168
    %v6069 = vunpack.c.0.s8 %v6068
    %v6070 = vlaneseq
    %v6071 = vshrl.u32 %v6070, 7
    %v6072 = vsub.s32 %v6069, %v6071
    %v6073 = vrot.slane %v6059, %v6072
    %v6074 = vcombine.low %v6026, %v6040
    %v6075 = vcombine.low %v6048, %v6050
    %v6077 = vunpack.c.l.s4 1966171168
    %v6078 = vunpack.c.0.s8 %v6077
    %v6079 = vlaneseq
    %v6080 = vshrl.u32 %v6079, 7
    %v6081 = vsub.s32 %v6078, %v6080
    %v6082 = vrot.slane %v6074, %v6081
    %v6084 = vunpack.c.l.s4 1966171168
    %v6085 = vunpack.c.0.s8 %v6084
    %v6086 = vlaneseq
    %v6087 = vshrl.u32 %v6086, 7
    %v6088 = vsub.s32 %v6085, %v6087
    %v6089 = vrot.slane %v6075, %v6088
    %v6091 = vunpack.c.l.s4 1966171168
    %v6092 = vunpack.c.0.s8 %v6091
    %v6093 = vlaneseq
    %v6094 = vshrl.u32 %v6093, 7
    %v6095 = vsub.s32 %v6092, %v6094
    %v6096 = vrot.slane %v6033, %v6095
    %v6097 = vcombine.low %v6082, %v6089
    %v6099 = vunpack.c.l.s4 1966171168
    %v6100 = vunpack.c.0.s8 %v6099
    %v6101 = vlaneseq
    %v6102 = vshrl.u32 %v6101, 7
    %v6103 = vsub.s32 %v6100, %v6102
    %v6104 = vrot.slane %v6097, %v6103
    %v6106 = vunpack.c.l.s4 1966171168
    %v6107 = vunpack.c.0.s8 %v6106
    %v6108 = vlaneseq
    %v6109 = vshrl.u32 %v6108, 7
    %v6110 = vsub.s32 %v6107, %v6109
    %v6111 = vrot.slane %v6096, %v6110
    %v6112 = vcombine.low %v6104, %v6111
    %v6113 = vcombine.low %v6047, %v6049
    %v6114 = vcombine.low %v6051, %v6066
    %v6116 = vunpack.c.l.s4 1966171168
    %v6117 = vunpack.c.0.s8 %v6116
    %v6118 = vlaneseq
    %v6119 = vshrl.u32 %v6118, 7
    %v6120 = vsub.s32 %v6117, %v6119
    %v6121 = vrot.slane %v6113, %v6120
    %v6123 = vunpack.c.l.s4 1966171168
    %v6124 = vunpack.c.0.s8 %v6123
    %v6125 = vlaneseq
    %v6126 = vshrl.u32 %v6125, 7
    %v6127 = vsub.s32 %v6124, %v6126
    %v6128 = vrot.slane %v6114, %v6127
    %v6130 = vunpack.c.l.s4 1966171168
    %v6131 = vunpack.c.0.s8 %v6130
    %v6132 = vlaneseq
    %v6133 = vshrl.u32 %v6132, 7
    %v6134 = vsub.s32 %v6131, %v6133
    %v6135 = vrot.slane %v6073, %v6134
    %v6136 = vcombine.low %v6121, %v6128
    %v6138 = vunpack.c.l.s4 1966171168
    %v6139 = vunpack.c.0.s8 %v6138
    %v6140 = vlaneseq
    %v6141 = vshrl.u32 %v6140, 7
    %v6142 = vsub.s32 %v6139, %v6141
    %v6143 = vrot.slane %v6136, %v6142
    %v6145 = vunpack.c.l.s4 1966171168
    %v6146 = vunpack.c.0.s8 %v6145
    %v6147 = vlaneseq
    %v6148 = vshrl.u32 %v6147, 7
    %v6149 = vsub.s32 %v6146, %v6148
    %v6150 = vrot.slane %v6135, %v6149
    %v6151 = vcombine.low %v6143, %v6150
    %v6154 = vadd.f32 %v5194, %v6112
    %v6155 = vadd.f32 %v5195, %v6151
    %v6158 = vrot.slane %v6155, 7
    %v6159 = vsel %vm3155, %v6158, %v6154
    %v6161 = vsel %vm3158, %v6159, 0.0
    %6162 = vadd.xlane.f32.xlu0 %v6161
    %v6163 = vpop.xlane.xlu0 %6162
    %v6164 = vmul.f32 %v6163, %v169
    %v6166 = vrot.slane %v6164, 1
    %v6169 = vsub.f32 %v6154, %v6164
    %v6170 = vsub.f32 %v6155, %v6166
    %v6171 = vmul.f32 %v6169, %v6169
    %v6172 = vmul.f32 %v6170, %v6170
    %v6175 = vrot.slane %v6172, 7
    %v6176 = vsel %vm3155, %v6175, %v6171
    %v6178 = vsel %vm3158, %v6176, 0.0
    %6179 = vadd.xlane.f32.xlu0 %v6178
    %v6180 = vpop.xlane.xlu0 %6179
    %v6181 = vmul.f32 %v6180, %v169
    %v6182 = vadd.f32 %v6181, 1e-05
    %v6183 = vrsqrt.pop %v6182
    %v6185 = vrot.slane %v6183, 1
    %v6188 = vmul.f32 %v6169, %v6183
    %v6189 = vmul.f32 %v6170, %v6185
    %v6190 = vmul.f32 %v6188, %v3191
    %v6191 = vmul.f32 %v6189, %v3191
    %v6192 = vadd.f32 %v6190, %v3197
    %v6193 = vadd.f32 %v6191, %v3197
    %v6196 = vrot.slane %v6193, 7
    %v6197 = vsel %vm3155, %v6196, %v6192
    %s6199 = scalar_lea.vmem [#allocation2], 2
    %6200 = vst.msk [vmem:[%s6199] sm:$0x3] %vm3158, %v6197
    // Predicated region
    $region38: #{image_encoder_forward.1} parent=1 // pred_check
      _
    $region39: #{image_encoder_forward.1} parent=1 // pred_check_branch
      %6202 = sbr.rel (0) target = $region41
    $region40: #{image_encoder_forward.1} parent=1 // pred_region
      %s6204 = ssub.s32 64, 64
      %6205 = vsyncadd [#allocation3], %s6204
      %s6206 = sshll.u32 [#allocation2], 4
      %s6207 = int_to_ptr.vmem [resolvable:$true] %s6206
      %6212 = dma.vmem_to_hbm [thread:$0]  %s6207, 64, %s9, [#allocation3], 32, 32, 2
    $region41: #{image_encoder_forward.1} parent=1 // pred_fallthru
      _
    // Predicated region
    $region42: #{image_encoder_forward.1} parent=1 // pred_check
      _
    $region43: #{image_encoder_forward.1} parent=1 // pred_check_branch
      %6214 = sbr.rel (0) target = $region45
    $region44: #{image_encoder_forward.1} parent=1 // pred_region
      %6215 = dma.done [#allocation3], 64
    $region45: #{image_encoder_forward.1} parent=1 // pred_fallthru
      _
    %6216 = vsyncpa [#allocation3], 1

</llo_original>
